<compile_context>
chip_gen: v5e
topology: v5e:2x2
jax: 0.10.0
libtpu: 0.0.40
codegen_flags: <defaults>
</compile_context>

<pallas_src>
import functools

import jax
import jax.numpy as jnp
from jax import lax
from jax.experimental import pallas as pl
from jax.experimental.pallas import tpu as pltpu


def _round_up(x, m):
    return (x + m - 1) // m * m


def _sigmoid(x):
    # 1 / (1 + exp(-x)); approx reciprocal runs on the EUP and is cheap.
    return pl.reciprocal(1.0 + jnp.exp(-x), approx=True)


# ----------------------------------------------------------------------------
# Fused Pallas kernel: all LSTM layers + FC head in one invocation
# ----------------------------------------------------------------------------
def fused_lstm_kernel(*refs, num_layers, hp, bb, seq_len, t_chunk, unroll):
    """refs = (x, [w_ihT, w_hhT, b]*L, fc_w, fc_b, out, seq_scr, proj_scr).

    Padded shapes:
      x        : (T, BB, D0p)    bf16, time-major batch block
      w_ihT    : (Dinp, 4Hp)     bf16, pre-transposed, gate blocks lane-aligned
      w_hhT    : (Hp,   4Hp)     bf16
      b        : (1,    4Hp)     f32  (b_ih + b_hh fused)
      fc_w     : (1, Hp) f32, fc_b : (1, 1) f32
      out      : (BB, 1) f32
      seq_scr  : (T or 1, BB, Hp) f32   inter-layer hidden sequence (VMEM)
      proj_scr : (Tc, BB, 4Hp)    f32   chunked hoisted input projection (VMEM)
    """
    n_w = 3 * num_layers
    x_ref = refs[0]
    layer_refs = refs[1:1 + n_w]
    fcw_ref = refs[1 + n_w]
    fcb_ref = refs[2 + n_w]
    out_ref = refs[3 + n_w]
    seq_scr = refs[4 + n_w]
    proj_scr = refs[5 + n_w]

    n_chunks = (seq_len + t_chunk - 1) // t_chunk

    h_last = None
    for l in range(num_layers):
        # Load weights once per layer (loop-invariant MXU RHS / projection weights).
        wih = layer_refs[3 * l][...]          # (Dinp, 4Hp) bf16
        whh = layer_refs[3 * l + 1][...]      # (Hp,   4Hp) bf16
        b = layer_refs[3 * l + 2][...]        # (1,    4Hp) f32
        is_last = (l == num_layers - 1)

        h = jnp.zeros((bb, hp), jnp.float32)
        c = jnp.zeros((bb, hp), jnp.float32)

        for ck in range(n_chunks):            # static chunk loop
            t0 = ck * t_chunk
            cur_t = min(t_chunk, seq_len - t0)

            # Hoisted input projection for this chunk: one (cur_t*BB, Din) x (Din, 4Hp)
            # bf16 MXU matmul, bias folded in once.
            if l == 0:
                xin = x_ref[pl.ds(t0, cur_t)]          # (cur_t, BB, Dp) bf16
            else:
                xin = seq_scr[pl.ds(t0, cur_t)]        # (cur_t, BB, Hp) f32
            xin2 = xin.reshape(cur_t * bb, xin.shape[-1]).astype(jnp.bfloat16)
            proj = jnp.dot(xin2, wih, preferred_element_type=jnp.float32) + b
            proj_scr[pl.ds(0, cur_t)] = proj.reshape(cur_t, bb, 4 * hp)

            def step(t, carry, _whh=whh, _t0=t0, _is_last=is_last):
                h, c = carry
                # Recurrent matmul: only (BB, Hp) x (Hp, 4Hp); RHS is loop-invariant.
                gates = proj_scr[t] + jnp.dot(
                    h.astype(jnp.bfloat16), _whh,
                    preferred_element_type=jnp.float32)
                # PyTorch gate order: input, forget, cell(g), output.
                # hp is a multiple of 128, so every gate slice is lane-aligned.
                i_g = _sigmoid(gates[:, 0 * hp:1 * hp])
                f_g = _sigmoid(gates[:, 1 * hp:2 * hp])
                g_g = jnp.tanh(gates[:, 2 * hp:3 * hp])
                o_g = _sigmoid(gates[:, 3 * hp:4 * hp])
                c_new = f_g * c + i_g * g_g
                h_new = o_g * jnp.tanh(c_new)
                if not _is_last:
                    # Major-axis dynamic index -> inherently sublane-aligned store.
                    seq_scr[_t0 + t] = h_new
                return (h_new, c_new)

            h, c = lax.fori_loop(0, cur_t, step, (h, c),
                                 unroll=min(cur_t, unroll))
        h_last = h

    # FC head on the final hidden state (== fc(out[:, -1, :])) on VPU/XLU:
    # an (BB,Hp)x(Hp,1) MXU matmul would push a full weight column for one lane.
    out_ref[...] = (jnp.sum(h_last * fcw_ref[...], axis=-1, keepdims=True)
                    + fcb_ref[...])


# ----------------------------------------------------------------------------
# Wrapper: pad / pre-transpose / cast weights and call the fused kernel once
# ----------------------------------------------------------------------------
def lstm_model_forward(x_btd, params, *, unroll=8):
    """Equivalent of LSTMModel.forward (eval mode): out, _ = lstm(x); fc(out[:, -1])."""
    B, T, D = x_btd.shape
    layers = params["lstm"]
    num_layers = len(layers)
    H = layers[0]["w_hh"].shape[1]

    Hp = _round_up(H, 128)
    Bp = _round_up(B, 8)
    Dp = _round_up(D, 128)

    # Batch-block grid: at most 2 blocks (one per v7x TensorCore). More blocks would
    # only serialize the recurrence on single-TC chips (v5e/v6e).
    if Bp >= 16:
        Bp = _round_up(Bp, 16)
        n_blk = 2
    else:
        n_blk = 1
    BB = Bp // n_blk

    # Time chunk for the hoisted projection: keep M = Tc*BB around ~512 rows so the
    # projection matmul stays throughput-shaped, while bounding proj_scr residency.
    t_chunk = min(T, max(1, 512 // BB))

    # Time-major, zero-padded input, bf16 MXU operand: (B, T, D) -> (T, Bp, Dp).
    x = jnp.transpose(x_btd, (1, 0, 2))
    x = jnp.pad(x, ((0, 0), (0, Bp - B), (0, Dp - D))).astype(jnp.bfloat16)

    inputs = [x]
    for l, layer in enumerate(layers):
        d_in = D if l == 0 else H
        dp_in = Dp if l == 0 else Hp
        w_ihT = jnp.zeros((dp_in, 4 * Hp), jnp.float32)
        w_hhT = jnp.zeros((Hp, 4 * Hp), jnp.float32)
        bias = jnp.zeros((1, 4 * Hp), jnp.float32)
        wt_i = layer["w_ih"].T                   # (d_in, 4H)
        wt_h = layer["w_hh"].T                   # (H,    4H)
        bvec = layer["b"].reshape(4 * H)
        for k in range(4):                       # place each gate block lane-aligned
            w_ihT = w_ihT.at[:d_in, k * Hp:k * Hp + H].set(wt_i[:, k * H:(k + 1) * H])
            w_hhT = w_hhT.at[:H, k * Hp:k * Hp + H].set(wt_h[:, k * H:(k + 1) * H])
            bias = bias.at[0, k * Hp:k * Hp + H].set(bvec[k * H:(k + 1) * H])
        inputs += [w_ihT.astype(jnp.bfloat16), w_hhT.astype(jnp.bfloat16), bias]

    fc_w = jnp.zeros((1, Hp), jnp.float32).at[0, :H].set(params["fc_wT"][:, 0])
    inputs += [fc_w, params["fc_b"]]

    seq_T = T if num_layers > 1 else 1
    scratch_shapes = [
        pltpu.VMEM((seq_T, BB, Hp), jnp.float32),        # inter-layer hidden sequence
        pltpu.VMEM((t_chunk, BB, 4 * Hp), jnp.float32),  # chunked input projection
    ]

    # VMEM budget from actual buffer sizes (inputs assumed double-buffered) + headroom.
    bytes_in = sum(int(a.size) * a.dtype.itemsize for a in inputs)
    bytes_scr = seq_T * BB * Hp * 4 + t_chunk * BB * 4 * Hp * 4
    need = 2 * bytes_in + bytes_scr
    vmem_limit = int(min(max(need * 3 // 2, 32 << 20), 100 << 20))
    # TODO(synk): on v7x (64 MiB physical VMEM) large configs additionally need
    # per-layer weight streaming; limit is clamped conservatively here.

    def const_spec(shape):
        zeros = (0,) * len(shape)
        return pl.BlockSpec(shape, lambda b: zeros)

    in_specs = [pl.BlockSpec((T, BB, Dp), lambda b: (0, b, 0))]
    in_specs += [const_spec(a.shape) for a in inputs[1:]]
    out_spec = pl.BlockSpec((BB, 1), lambda b: (b, 0))

    kernel = functools.partial(
        fused_lstm_kernel, num_layers=num_layers, hp=Hp, bb=BB,
        seq_len=T, t_chunk=t_chunk, unroll=unroll)

    out = pl.pallas_call(
        kernel,
        out_shape=jax.ShapeDtypeStruct((Bp, 1), jnp.float32),
        grid=(n_blk,),
        in_specs=in_specs,
        out_specs=out_spec,
        scratch_shapes=scratch_shapes,
        compiler_params=pltpu.CompilerParams(
            dimension_semantics=("parallel",),
            vmem_limit_bytes=vmem_limit),
    )(*inputs)
    return out[:B]


# ----------------------------------------------------------------------------
# Pure-JAX f32 reference (for correctness check)
# ----------------------------------------------------------------------------
def lstm_model_ref(x_btd, params):
    B = x_btd.shape[0]
    x = x_btd
    for layer in params["lstm"]:
        w_ih, w_hh, b = layer["w_ih"], layer["w_hh"], layer["b"]
        H = w_hh.shape[1]

        def step(carry, x_t):
            h, c = carry
            gates = x_t @ w_ih.T + h @ w_hh.T + b[0]
            i, f, g, o = jnp.split(gates, 4, axis=-1)
            i = jax.nn.sigmoid(i)
            f = jax.nn.sigmoid(f)
            g = jnp.tanh(g)
            o = jax.nn.sigmoid(o)
            c = f * c + i * g
            h = o * jnp.tanh(c)
            return (h, c), h

        h0 = jnp.zeros((B, H), jnp.float32)
        c0 = jnp.zeros((B, H), jnp.float32)
        _, hs = lax.scan(step, (h0, c0), jnp.transpose(x, (1, 0, 2)))
        x = jnp.transpose(hs, (1, 0, 2))
    h_last = x[:, -1, :]
    return h_last @ params["fc_wT"] + params["fc_b"]


# ----------------------------------------------------------------------------
# Deterministic parameter init (PyTorch-style uniform(-1/sqrt(H), 1/sqrt(H)))
# ----------------------------------------------------------------------------
def init_params(key, input_size, hidden_size, num_layers):
    k = 1.0 / jnp.sqrt(hidden_size)
    layers = []
    for l in range(num_layers):
        d_in = input_size if l == 0 else hidden_size
        key, k1, k2, k3, k4 = jax.random.split(key, 5)
        w_ih = jax.random.uniform(k1, (4 * hidden_size, d_in), jnp.float32, -k, k)
        w_hh = jax.random.uniform(k2, (4 * hidden_size, hidden_size), jnp.float32, -k, k)
        b_ih = jax.random.uniform(k3, (4 * hidden_size,), jnp.float32, -k, k)
        b_hh = jax.random.uniform(k4, (4 * hidden_size,), jnp.float32, -k, k)
        layers.append({"w_ih": w_ih, "w_hh": w_hh,
                       "b": (b_ih + b_hh).reshape(1, 4 * hidden_size)})
    key, k5, k6 = jax.random.split(key, 3)
    fc_w = jax.random.uniform(k5, (1, hidden_size), jnp.float32, -k, k)
    fc_b = jax.random.uniform(k6, (1,), jnp.float32, -k, k)
    return {"lstm": layers, "fc_wT": fc_w.T, "fc_b": fc_b.reshape(1, 1)}


if __name__ == "__main__":
    B, T, D_IN, H, NUM_LAYERS = 2, 8, 4, 32, 2   # dropout=0.2 in ctor is a no-op in eval

    key = jax.random.PRNGKey(0)
    key, kx = jax.random.split(key)
    x = jax.random.normal(kx, (B, T, D_IN), jnp.float32)   # batch_first (B, T, input_size)
    params = init_params(key, D_IN, H, NUM_LAYERS)

    out = lstm_model_forward(x, params)
    out = jax.block_until_ready(out)

    ref = lstm_model_ref(x, params)
    assert out.shape == (B, 1)
    # bf16 MXU operands + approx-reciprocal sigmoid vs f32 reference -> loosened tolerance.
    assert jnp.allclose(out, ref, atol=5e-2, rtol=5e-2), (out, ref)

    print("KERNEL_OK")
</pallas_src>

<mosaic_0001>
module attributes {stable_mosaic.version = 11 : i64} {
  func.func @fused_lstm_kernel(%arg0: i32, %arg1: memref<8x8x128xbf16, #tpu.memory_space<vmem>>, %arg2: memref<128x512xbf16, #tpu.memory_space<vmem>>, %arg3: memref<128x512xbf16, #tpu.memory_space<vmem>>, %arg4: memref<1x512xf32, #tpu.memory_space<vmem>>, %arg5: memref<128x512xbf16, #tpu.memory_space<vmem>>, %arg6: memref<128x512xbf16, #tpu.memory_space<vmem>>, %arg7: memref<1x512xf32, #tpu.memory_space<vmem>>, %arg8: memref<1x128xf32, #tpu.memory_space<vmem>>, %arg9: memref<1x1xf32, #tpu.memory_space<vmem>>, %arg10: memref<8x1xf32, #tpu.memory_space<vmem>>, %arg11: memref<8x8x128xf32, #tpu.memory_space<vmem>>, %arg12: memref<8x8x512xf32, #tpu.memory_space<vmem>>) attributes {dimension_semantics = [#tpu.dimension_semantics<parallel>], iteration_bounds = array<i64: 1>, scalar_prefetch = 0 : i64, scratch_operands = 2 : i64, tpu.core_type = #tpu.core_type<tc>, window_params = [{transform_indices = @transform_0, window_bounds = array<i64: 8, 8, 128>}, {pipeline_mode = #tpu.pipeline_mode<synchronous>, transform_indices = @transform_1, window_bounds = array<i64: 128, 512>}, {pipeline_mode = #tpu.pipeline_mode<synchronous>, transform_indices = @transform_2, window_bounds = array<i64: 128, 512>}, {pipeline_mode = #tpu.pipeline_mode<synchronous>, transform_indices = @transform_3, window_bounds = array<i64: 1, 512>}, {pipeline_mode = #tpu.pipeline_mode<synchronous>, transform_indices = @transform_4, window_bounds = array<i64: 128, 512>}, {pipeline_mode = #tpu.pipeline_mode<synchronous>, transform_indices = @transform_5, window_bounds = array<i64: 128, 512>}, {pipeline_mode = #tpu.pipeline_mode<synchronous>, transform_indices = @transform_6, window_bounds = array<i64: 1, 512>}, {pipeline_mode = #tpu.pipeline_mode<synchronous>, transform_indices = @transform_7, window_bounds = array<i64: 1, 128>}, {pipeline_mode = #tpu.pipeline_mode<synchronous>, transform_indices = @transform_8, window_bounds = array<i64: 1, 1>}, {transform_indices = @transform_9, window_bounds = array<i64: 8, 1>}]} {
    %c0 = arith.constant 0 : index
    %c0_0 = arith.constant 0 : index
    %0 = vector.load %arg2[%c0, %c0_0] : memref<128x512xbf16, #tpu.memory_space<vmem>>, vector<128x512xbf16>
    %c0_1 = arith.constant 0 : index
    %c0_2 = arith.constant 0 : index
    %1 = vector.load %arg3[%c0_1, %c0_2] : memref<128x512xbf16, #tpu.memory_space<vmem>>, vector<128x512xbf16>
    %c0_3 = arith.constant 0 : index
    %c0_4 = arith.constant 0 : index
    %2 = vector.load %arg4[%c0_3, %c0_4] : memref<1x512xf32, #tpu.memory_space<vmem>>, vector<1x512xf32>
    %cst = arith.constant 0.000000e+00 : f32
    %3 = vector.broadcast %cst : f32 to vector<8x128xf32>
    %cst_5 = arith.constant 0.000000e+00 : f32
    %4 = vector.broadcast %cst_5 : f32 to vector<8x128xf32>
    %c0_6 = arith.constant 0 : index
    %c0_7 = arith.constant 0 : index
    %c0_8 = arith.constant 0 : index
    %5 = vector.load %arg1[%c0_6, %c0_7, %c0_8] : memref<8x8x128xbf16, #tpu.memory_space<vmem>>, vector<8x8x128xbf16>
    %6 = vector.shape_cast %5 : vector<8x8x128xbf16> to vector<64x128xbf16>
    %cst_9 = arith.constant dense<0.000000e+00> : vector<64x512xf32>
    %7 = tpu.matmul %6, %0, %cst_9 {dimension_numbers = #tpu.dot_dimension_numbers<[1], [0], [0], [1], [0, 0, 1, 1], [], []>} : vector<64x128xbf16>, vector<128x512xbf16>, vector<64x512xf32> -> vector<64x512xf32>
    %8 = vector.broadcast %2 : vector<1x512xf32> to vector<64x512xf32>
    %9 = arith.addf %7, %8 : vector<64x512xf32>
    %10 = vector.shape_cast %9 : vector<64x512xf32> to vector<8x8x512xf32>
    %c0_10 = arith.constant 0 : index
    %c0_11 = arith.constant 0 : index
    %c0_12 = arith.constant 0 : index
    %11 = vector.load %arg12[%c0_10, %c0_11, %c0_12] : memref<8x8x512xf32, #tpu.memory_space<vmem>>, vector<8x8x512xf32>
    tpu.vector_store %arg12[%c0_10, %c0_11, %c0_12], %10 {strides = array<i32>} : memref<8x8x512xf32, #tpu.memory_space<vmem>>, vector<8x8x512xf32>,
    %c0_i32 = arith.constant 0 : i32
    %12 = arith.index_cast %c0_i32 : i32 to index
    %c0_13 = arith.constant 0 : index
    %c0_14 = arith.constant 0 : index
    %13 = vector.load %arg12[%12, %c0_13, %c0_14] : memref<8x8x512xf32, #tpu.memory_space<vmem>>, vector<1x8x512xf32>
    %14 = vector.shape_cast %13 : vector<1x8x512xf32> to vector<8x512xf32>
    %15 = arith.truncf %3 : vector<8x128xf32> to vector<8x128xbf16>
    %cst_15 = arith.constant dense<0.000000e+00> : vector<8x512xf32>
    %16 = tpu.matmul %15, %1, %cst_15 {dimension_numbers = #tpu.dot_dimension_numbers<[1], [0], [0], [1], [0, 0, 1, 1], [], []>} : vector<8x128xbf16>, vector<128x512xbf16>, vector<8x512xf32> -> vector<8x512xf32>
    %17 = arith.addf %14, %16 : vector<8x512xf32>
    %18 = vector.extract_strided_slice %17 {offsets = [0, 0], sizes = [8, 128], strides = [1, 1]} : vector<8x512xf32> to vector<8x128xf32>
    %cst_16 = arith.constant 0.000000e+00 : f32
    %19 = vector.broadcast %cst_16 : f32 to vector<8x128xf32>
    %20 = arith.subf %19, %18 : vector<8x128xf32>
    %21 = math.exp %20 : vector<8x128xf32>
    %cst_17 = arith.constant 1.000000e+00 : f32
    %22 = vector.broadcast %cst_17 : f32 to vector<8x128xf32>
    %23 = arith.addf %22, %21 : vector<8x128xf32>
    %24 = tpu.reciprocal %23 {approx = true} : vector<8x128xf32> -> vector<8x128xf32>
    %25 = vector.extract_strided_slice %17 {offsets = [0, 128], sizes = [8, 128], strides = [1, 1]} : vector<8x512xf32> to vector<8x128xf32>
    %cst_18 = arith.constant 0.000000e+00 : f32
    %26 = vector.broadcast %cst_18 : f32 to vector<8x128xf32>
    %27 = arith.subf %26, %25 : vector<8x128xf32>
    %28 = math.exp %27 : vector<8x128xf32>
    %cst_19 = arith.constant 1.000000e+00 : f32
    %29 = vector.broadcast %cst_19 : f32 to vector<8x128xf32>
    %30 = arith.addf %29, %28 : vector<8x128xf32>
    %31 = tpu.reciprocal %30 {approx = true} : vector<8x128xf32> -> vector<8x128xf32>
    %32 = vector.extract_strided_slice %17 {offsets = [0, 256], sizes = [8, 128], strides = [1, 1]} : vector<8x512xf32> to vector<8x128xf32>
    %33 = math.tanh %32 : vector<8x128xf32>
    %34 = vector.extract_strided_slice %17 {offsets = [0, 384], sizes = [8, 128], strides = [1, 1]} : vector<8x512xf32> to vector<8x128xf32>
    %cst_20 = arith.constant 0.000000e+00 : f32
    %35 = vector.broadcast %cst_20 : f32 to vector<8x128xf32>
    %36 = arith.subf %35, %34 : vector<8x128xf32>
    %37 = math.exp %36 : vector<8x128xf32>
    %cst_21 = arith.constant 1.000000e+00 : f32
    %38 = vector.broadcast %cst_21 : f32 to vector<8x128xf32>
    %39 = arith.addf %38, %37 : vector<8x128xf32>
    %40 = tpu.reciprocal %39 {approx = true} : vector<8x128xf32> -> vector<8x128xf32>
    %41 = arith.mulf %31, %4 : vector<8x128xf32>
    %42 = arith.mulf %24, %33 : vector<8x128xf32>
    %43 = arith.addf %41, %42 : vector<8x128xf32>
    %44 = math.tanh %43 : vector<8x128xf32>
    %45 = arith.mulf %40, %44 : vector<8x128xf32>
    %c0_i32_22 = arith.constant 0 : i32
    %46 = arith.addi %c0_i32_22, %c0_i32 : i32
    %47 = arith.index_cast %46 : i32 to index
    %c0_23 = arith.constant 0 : index
    %c0_24 = arith.constant 0 : index
    %48 = vector.load %arg11[%47, %c0_23, %c0_24] : memref<8x8x128xf32, #tpu.memory_space<vmem>>, vector<1x8x128xf32>
    %49 = vector.shape_cast %48 : vector<1x8x128xf32> to vector<8x128xf32>
    %50 = vector.shape_cast %45 : vector<8x128xf32> to vector<1x8x128xf32>
    tpu.vector_store %arg11[%47, %c0_23, %c0_24], %50 {strides = array<i32>} : memref<8x8x128xf32, #tpu.memory_space<vmem>>, vector<1x8x128xf32>,
    %c1_i32 = arith.constant 1 : i32
    %51 = arith.index_cast %c1_i32 : i32 to index
    %c0_25 = arith.constant 0 : index
    %c0_26 = arith.constant 0 : index
    %52 = vector.load %arg12[%51, %c0_25, %c0_26] : memref<8x8x512xf32, #tpu.memory_space<vmem>>, vector<1x8x512xf32>
    %53 = vector.shape_cast %52 : vector<1x8x512xf32> to vector<8x512xf32>
    %54 = arith.truncf %45 : vector<8x128xf32> to vector<8x128xbf16>
    %cst_27 = arith.constant dense<0.000000e+00> : vector<8x512xf32>
    %55 = tpu.matmul %54, %1, %cst_27 {dimension_numbers = #tpu.dot_dimension_numbers<[1], [0], [0], [1], [0, 0, 1, 1], [], []>} : vector<8x128xbf16>, vector<128x512xbf16>, vector<8x512xf32> -> vector<8x512xf32>
    %56 = arith.addf %53, %55 : vector<8x512xf32>
    %57 = vector.extract_strided_slice %56 {offsets = [0, 0], sizes = [8, 128], strides = [1, 1]} : vector<8x512xf32> to vector<8x128xf32>
    %cst_28 = arith.constant 0.000000e+00 : f32
    %58 = vector.broadcast %cst_28 : f32 to vector<8x128xf32>
    %59 = arith.subf %58, %57 : vector<8x128xf32>
    %60 = math.exp %59 : vector<8x128xf32>
    %cst_29 = arith.constant 1.000000e+00 : f32
    %61 = vector.broadcast %cst_29 : f32 to vector<8x128xf32>
    %62 = arith.addf %61, %60 : vector<8x128xf32>
    %63 = tpu.reciprocal %62 {approx = true} : vector<8x128xf32> -> vector<8x128xf32>
    %64 = vector.extract_strided_slice %56 {offsets = [0, 128], sizes = [8, 128], strides = [1, 1]} : vector<8x512xf32> to vector<8x128xf32>
    %cst_30 = arith.constant 0.000000e+00 : f32
    %65 = vector.broadcast %cst_30 : f32 to vector<8x128xf32>
    %66 = arith.subf %65, %64 : vector<8x128xf32>
    %67 = math.exp %66 : vector<8x128xf32>
    %cst_31 = arith.constant 1.000000e+00 : f32
    %68 = vector.broadcast %cst_31 : f32 to vector<8x128xf32>
    %69 = arith.addf %68, %67 : vector<8x128xf32>
    %70 = tpu.reciprocal %69 {approx = true} : vector<8x128xf32> -> vector<8x128xf32>
    %71 = vector.extract_strided_slice %56 {offsets = [0, 256], sizes = [8, 128], strides = [1, 1]} : vector<8x512xf32> to vector<8x128xf32>
    %72 = math.tanh %71 : vector<8x128xf32>
    %73 = vector.extract_strided_slice %56 {offsets = [0, 384], sizes = [8, 128], strides = [1, 1]} : vector<8x512xf32> to vector<8x128xf32>
    %cst_32 = arith.constant 0.000000e+00 : f32
    %74 = vector.broadcast %cst_32 : f32 to vector<8x128xf32>
    %75 = arith.subf %74, %73 : vector<8x128xf32>
    %76 = math.exp %75 : vector<8x128xf32>
    %cst_33 = arith.constant 1.000000e+00 : f32
    %77 = vector.broadcast %cst_33 : f32 to vector<8x128xf32>
    %78 = arith.addf %77, %76 : vector<8x128xf32>
    %79 = tpu.reciprocal %78 {approx = true} : vector<8x128xf32> -> vector<8x128xf32>
    %80 = arith.mulf %70, %43 : vector<8x128xf32>
    %81 = arith.mulf %63, %72 : vector<8x128xf32>
    %82 = arith.addf %80, %81 : vector<8x128xf32>
    %83 = math.tanh %82 : vector<8x128xf32>
    %84 = arith.mulf %79, %83 : vector<8x128xf32>
    %c0_i32_34 = arith.constant 0 : i32
    %85 = arith.addi %c0_i32_34, %c1_i32 : i32
    %86 = arith.index_cast %85 : i32 to index
    %c0_35 = arith.constant 0 : index
    %c0_36 = arith.constant 0 : index
    %87 = vector.load %arg11[%86, %c0_35, %c0_36] : memref<8x8x128xf32, #tpu.memory_space<vmem>>, vector<1x8x128xf32>
    %88 = vector.shape_cast %87 : vector<1x8x128xf32> to vector<8x128xf32>
    %89 = vector.shape_cast %84 : vector<8x128xf32> to vector<1x8x128xf32>
    tpu.vector_store %arg11[%86, %c0_35, %c0_36], %89 {strides = array<i32>} : memref<8x8x128xf32, #tpu.memory_space<vmem>>, vector<1x8x128xf32>,
    %c2_i32 = arith.constant 2 : i32
    %90 = arith.index_cast %c2_i32 : i32 to index
    %c0_37 = arith.constant 0 : index
    %c0_38 = arith.constant 0 : index
    %91 = vector.load %arg12[%90, %c0_37, %c0_38] : memref<8x8x512xf32, #tpu.memory_space<vmem>>, vector<1x8x512xf32>
    %92 = vector.shape_cast %91 : vector<1x8x512xf32> to vector<8x512xf32>
    %93 = arith.truncf %84 : vector<8x128xf32> to vector<8x128xbf16>
    %cst_39 = arith.constant dense<0.000000e+00> : vector<8x512xf32>
    %94 = tpu.matmul %93, %1, %cst_39 {dimension_numbers = #tpu.dot_dimension_numbers<[1], [0], [0], [1], [0, 0, 1, 1], [], []>} : vector<8x128xbf16>, vector<128x512xbf16>, vector<8x512xf32> -> vector<8x512xf32>
    %95 = arith.addf %92, %94 : vector<8x512xf32>
    %96 = vector.extract_strided_slice %95 {offsets = [0, 0], sizes = [8, 128], strides = [1, 1]} : vector<8x512xf32> to vector<8x128xf32>
    %cst_40 = arith.constant 0.000000e+00 : f32
    %97 = vector.broadcast %cst_40 : f32 to vector<8x128xf32>
    %98 = arith.subf %97, %96 : vector<8x128xf32>
    %99 = math.exp %98 : vector<8x128xf32>
    %cst_41 = arith.constant 1.000000e+00 : f32
    %100 = vector.broadcast %cst_41 : f32 to vector<8x128xf32>
    %101 = arith.addf %100, %99 : vector<8x128xf32>
    %102 = tpu.reciprocal %101 {approx = true} : vector<8x128xf32> -> vector<8x128xf32>
    %103 = vector.extract_strided_slice %95 {offsets = [0, 128], sizes = [8, 128], strides = [1, 1]} : vector<8x512xf32> to vector<8x128xf32>
    %cst_42 = arith.constant 0.000000e+00 : f32
    %104 = vector.broadcast %cst_42 : f32 to vector<8x128xf32>
    %105 = arith.subf %104, %103 : vector<8x128xf32>
    %106 = math.exp %105 : vector<8x128xf32>
    %cst_43 = arith.constant 1.000000e+00 : f32
    %107 = vector.broadcast %cst_43 : f32 to vector<8x128xf32>
    %108 = arith.addf %107, %106 : vector<8x128xf32>
    %109 = tpu.reciprocal %108 {approx = true} : vector<8x128xf32> -> vector<8x128xf32>
    %110 = vector.extract_strided_slice %95 {offsets = [0, 256], sizes = [8, 128], strides = [1, 1]} : vector<8x512xf32> to vector<8x128xf32>
    %111 = math.tanh %110 : vector<8x128xf32>
    %112 = vector.extract_strided_slice %95 {offsets = [0, 384], sizes = [8, 128], strides = [1, 1]} : vector<8x512xf32> to vector<8x128xf32>
    %cst_44 = arith.constant 0.000000e+00 : f32
    %113 = vector.broadcast %cst_44 : f32 to vector<8x128xf32>
    %114 = arith.subf %113, %112 : vector<8x128xf32>
    %115 = math.exp %114 : vector<8x128xf32>
    %cst_45 = arith.constant 1.000000e+00 : f32
    %116 = vector.broadcast %cst_45 : f32 to vector<8x128xf32>
    %117 = arith.addf %116, %115 : vector<8x128xf32>
    %118 = tpu.reciprocal %117 {approx = true} : vector<8x128xf32> -> vector<8x128xf32>
    %119 = arith.mulf %109, %82 : vector<8x128xf32>
    %120 = arith.mulf %102, %111 : vector<8x128xf32>
    %121 = arith.addf %119, %120 : vector<8x128xf32>
    %122 = math.tanh %121 : vector<8x128xf32>
    %123 = arith.mulf %118, %122 : vector<8x128xf32>
    %c0_i32_46 = arith.constant 0 : i32
    %124 = arith.addi %c0_i32_46, %c2_i32 : i32
    %125 = arith.index_cast %124 : i32 to index
    %c0_47 = arith.constant 0 : index
    %c0_48 = arith.constant 0 : index
    %126 = vector.load %arg11[%125, %c0_47, %c0_48] : memref<8x8x128xf32, #tpu.memory_space<vmem>>, vector<1x8x128xf32>
    %127 = vector.shape_cast %126 : vector<1x8x128xf32> to vector<8x128xf32>
    %128 = vector.shape_cast %123 : vector<8x128xf32> to vector<1x8x128xf32>
    tpu.vector_store %arg11[%125, %c0_47, %c0_48], %128 {strides = array<i32>} : memref<8x8x128xf32, #tpu.memory_space<vmem>>, vector<1x8x128xf32>,
    %c3_i32 = arith.constant 3 : i32
    %129 = arith.index_cast %c3_i32 : i32 to index
    %c0_49 = arith.constant 0 : index
    %c0_50 = arith.constant 0 : index
    %130 = vector.load %arg12[%129, %c0_49, %c0_50] : memref<8x8x512xf32, #tpu.memory_space<vmem>>, vector<1x8x512xf32>
    %131 = vector.shape_cast %130 : vector<1x8x512xf32> to vector<8x512xf32>
    %132 = arith.truncf %123 : vector<8x128xf32> to vector<8x128xbf16>
    %cst_51 = arith.constant dense<0.000000e+00> : vector<8x512xf32>
    %133 = tpu.matmul %132, %1, %cst_51 {dimension_numbers = #tpu.dot_dimension_numbers<[1], [0], [0], [1], [0, 0, 1, 1], [], []>} : vector<8x128xbf16>, vector<128x512xbf16>, vector<8x512xf32> -> vector<8x512xf32>
    %134 = arith.addf %131, %133 : vector<8x512xf32>
    %135 = vector.extract_strided_slice %134 {offsets = [0, 0], sizes = [8, 128], strides = [1, 1]} : vector<8x512xf32> to vector<8x128xf32>
    %cst_52 = arith.constant 0.000000e+00 : f32
    %136 = vector.broadcast %cst_52 : f32 to vector<8x128xf32>
    %137 = arith.subf %136, %135 : vector<8x128xf32>
    %138 = math.exp %137 : vector<8x128xf32>
    %cst_53 = arith.constant 1.000000e+00 : f32
    %139 = vector.broadcast %cst_53 : f32 to vector<8x128xf32>
    %140 = arith.addf %139, %138 : vector<8x128xf32>
    %141 = tpu.reciprocal %140 {approx = true} : vector<8x128xf32> -> vector<8x128xf32>
    %142 = vector.extract_strided_slice %134 {offsets = [0, 128], sizes = [8, 128], strides = [1, 1]} : vector<8x512xf32> to vector<8x128xf32>
    %cst_54 = arith.constant 0.000000e+00 : f32
    %143 = vector.broadcast %cst_54 : f32 to vector<8x128xf32>
    %144 = arith.subf %143, %142 : vector<8x128xf32>
    %145 = math.exp %144 : vector<8x128xf32>
    %cst_55 = arith.constant 1.000000e+00 : f32
    %146 = vector.broadcast %cst_55 : f32 to vector<8x128xf32>
    %147 = arith.addf %146, %145 : vector<8x128xf32>
    %148 = tpu.reciprocal %147 {approx = true} : vector<8x128xf32> -> vector<8x128xf32>
    %149 = vector.extract_strided_slice %134 {offsets = [0, 256], sizes = [8, 128], strides = [1, 1]} : vector<8x512xf32> to vector<8x128xf32>
    %150 = math.tanh %149 : vector<8x128xf32>
    %151 = vector.extract_strided_slice %134 {offsets = [0, 384], sizes = [8, 128], strides = [1, 1]} : vector<8x512xf32> to vector<8x128xf32>
    %cst_56 = arith.constant 0.000000e+00 : f32
    %152 = vector.broadcast %cst_56 : f32 to vector<8x128xf32>
    %153 = arith.subf %152, %151 : vector<8x128xf32>
    %154 = math.exp %153 : vector<8x128xf32>
    %cst_57 = arith.constant 1.000000e+00 : f32
    %155 = vector.broadcast %cst_57 : f32 to vector<8x128xf32>
    %156 = arith.addf %155, %154 : vector<8x128xf32>
    %157 = tpu.reciprocal %156 {approx = true} : vector<8x128xf32> -> vector<8x128xf32>
    %158 = arith.mulf %148, %121 : vector<8x128xf32>
    %159 = arith.mulf %141, %150 : vector<8x128xf32>
    %160 = arith.addf %158, %159 : vector<8x128xf32>
    %161 = math.tanh %160 : vector<8x128xf32>
    %162 = arith.mulf %157, %161 : vector<8x128xf32>
    %c0_i32_58 = arith.constant 0 : i32
    %163 = arith.addi %c0_i32_58, %c3_i32 : i32
    %164 = arith.index_cast %163 : i32 to index
    %c0_59 = arith.constant 0 : index
    %c0_60 = arith.constant 0 : index
    %165 = vector.load %arg11[%164, %c0_59, %c0_60] : memref<8x8x128xf32, #tpu.memory_space<vmem>>, vector<1x8x128xf32>
    %166 = vector.shape_cast %165 : vector<1x8x128xf32> to vector<8x128xf32>
    %167 = vector.shape_cast %162 : vector<8x128xf32> to vector<1x8x128xf32>
    tpu.vector_store %arg11[%164, %c0_59, %c0_60], %167 {strides = array<i32>} : memref<8x8x128xf32, #tpu.memory_space<vmem>>, vector<1x8x128xf32>,
    %c4_i32 = arith.constant 4 : i32
    %168 = arith.index_cast %c4_i32 : i32 to index
    %c0_61 = arith.constant 0 : index
    %c0_62 = arith.constant 0 : index
    %169 = vector.load %arg12[%168, %c0_61, %c0_62] : memref<8x8x512xf32, #tpu.memory_space<vmem>>, vector<1x8x512xf32>
    %170 = vector.shape_cast %169 : vector<1x8x512xf32> to vector<8x512xf32>
    %171 = arith.truncf %162 : vector<8x128xf32> to vector<8x128xbf16>
    %cst_63 = arith.constant dense<0.000000e+00> : vector<8x512xf32>
    %172 = tpu.matmul %171, %1, %cst_63 {dimension_numbers = #tpu.dot_dimension_numbers<[1], [0], [0], [1], [0, 0, 1, 1], [], []>} : vector<8x128xbf16>, vector<128x512xbf16>, vector<8x512xf32> -> vector<8x512xf32>
    %173 = arith.addf %170, %172 : vector<8x512xf32>
    %174 = vector.extract_strided_slice %173 {offsets = [0, 0], sizes = [8, 128], strides = [1, 1]} : vector<8x512xf32> to vector<8x128xf32>
    %cst_64 = arith.constant 0.000000e+00 : f32
    %175 = vector.broadcast %cst_64 : f32 to vector<8x128xf32>
    %176 = arith.subf %175, %174 : vector<8x128xf32>
    %177 = math.exp %176 : vector<8x128xf32>
    %cst_65 = arith.constant 1.000000e+00 : f32
    %178 = vector.broadcast %cst_65 : f32 to vector<8x128xf32>
    %179 = arith.addf %178, %177 : vector<8x128xf32>
    %180 = tpu.reciprocal %179 {approx = true} : vector<8x128xf32> -> vector<8x128xf32>
    %181 = vector.extract_strided_slice %173 {offsets = [0, 128], sizes = [8, 128], strides = [1, 1]} : vector<8x512xf32> to vector<8x128xf32>
    %cst_66 = arith.constant 0.000000e+00 : f32
    %182 = vector.broadcast %cst_66 : f32 to vector<8x128xf32>
    %183 = arith.subf %182, %181 : vector<8x128xf32>
    %184 = math.exp %183 : vector<8x128xf32>
    %cst_67 = arith.constant 1.000000e+00 : f32
    %185 = vector.broadcast %cst_67 : f32 to vector<8x128xf32>
    %186 = arith.addf %185, %184 : vector<8x128xf32>
    %187 = tpu.reciprocal %186 {approx = true} : vector<8x128xf32> -> vector<8x128xf32>
    %188 = vector.extract_strided_slice %173 {offsets = [0, 256], sizes = [8, 128], strides = [1, 1]} : vector<8x512xf32> to vector<8x128xf32>
    %189 = math.tanh %188 : vector<8x128xf32>
    %190 = vector.extract_strided_slice %173 {offsets = [0, 384], sizes = [8, 128], strides = [1, 1]} : vector<8x512xf32> to vector<8x128xf32>
    %cst_68 = arith.constant 0.000000e+00 : f32
    %191 = vector.broadcast %cst_68 : f32 to vector<8x128xf32>
    %192 = arith.subf %191, %190 : vector<8x128xf32>
    %193 = math.exp %192 : vector<8x128xf32>
    %cst_69 = arith.constant 1.000000e+00 : f32
    %194 = vector.broadcast %cst_69 : f32 to vector<8x128xf32>
    %195 = arith.addf %194, %193 : vector<8x128xf32>
    %196 = tpu.reciprocal %195 {approx = true} : vector<8x128xf32> -> vector<8x128xf32>
    %197 = arith.mulf %187, %160 : vector<8x128xf32>
    %198 = arith.mulf %180, %189 : vector<8x128xf32>
    %199 = arith.addf %197, %198 : vector<8x128xf32>
    %200 = math.tanh %199 : vector<8x128xf32>
    %201 = arith.mulf %196, %200 : vector<8x128xf32>
    %c0_i32_70 = arith.constant 0 : i32
    %202 = arith.addi %c0_i32_70, %c4_i32 : i32
    %203 = arith.index_cast %202 : i32 to index
    %c0_71 = arith.constant 0 : index
    %c0_72 = arith.constant 0 : index
    %204 = vector.load %arg11[%203, %c0_71, %c0_72] : memref<8x8x128xf32, #tpu.memory_space<vmem>>, vector<1x8x128xf32>
    %205 = vector.shape_cast %204 : vector<1x8x128xf32> to vector<8x128xf32>
    %206 = vector.shape_cast %201 : vector<8x128xf32> to vector<1x8x128xf32>
    tpu.vector_store %arg11[%203, %c0_71, %c0_72], %206 {strides = array<i32>} : memref<8x8x128xf32, #tpu.memory_space<vmem>>, vector<1x8x128xf32>,
    %c5_i32 = arith.constant 5 : i32
    %207 = arith.index_cast %c5_i32 : i32 to index
    %c0_73 = arith.constant 0 : index
    %c0_74 = arith.constant 0 : index
    %208 = vector.load %arg12[%207, %c0_73, %c0_74] : memref<8x8x512xf32, #tpu.memory_space<vmem>>, vector<1x8x512xf32>
    %209 = vector.shape_cast %208 : vector<1x8x512xf32> to vector<8x512xf32>
    %210 = arith.truncf %201 : vector<8x128xf32> to vector<8x128xbf16>
    %cst_75 = arith.constant dense<0.000000e+00> : vector<8x512xf32>
    %211 = tpu.matmul %210, %1, %cst_75 {dimension_numbers = #tpu.dot_dimension_numbers<[1], [0], [0], [1], [0, 0, 1, 1], [], []>} : vector<8x128xbf16>, vector<128x512xbf16>, vector<8x512xf32> -> vector<8x512xf32>
    %212 = arith.addf %209, %211 : vector<8x512xf32>
    %213 = vector.extract_strided_slice %212 {offsets = [0, 0], sizes = [8, 128], strides = [1, 1]} : vector<8x512xf32> to vector<8x128xf32>
    %cst_76 = arith.constant 0.000000e+00 : f32
    %214 = vector.broadcast %cst_76 : f32 to vector<8x128xf32>
    %215 = arith.subf %214, %213 : vector<8x128xf32>
    %216 = math.exp %215 : vector<8x128xf32>
    %cst_77 = arith.constant 1.000000e+00 : f32
    %217 = vector.broadcast %cst_77 : f32 to vector<8x128xf32>
    %218 = arith.addf %217, %216 : vector<8x128xf32>
    %219 = tpu.reciprocal %218 {approx = true} : vector<8x128xf32> -> vector<8x128xf32>
    %220 = vector.extract_strided_slice %212 {offsets = [0, 128], sizes = [8, 128], strides = [1, 1]} : vector<8x512xf32> to vector<8x128xf32>
    %cst_78 = arith.constant 0.000000e+00 : f32
    %221 = vector.broadcast %cst_78 : f32 to vector<8x128xf32>
    %222 = arith.subf %221, %220 : vector<8x128xf32>
    %223 = math.exp %222 : vector<8x128xf32>
    %cst_79 = arith.constant 1.000000e+00 : f32
    %224 = vector.broadcast %cst_79 : f32 to vector<8x128xf32>
    %225 = arith.addf %224, %223 : vector<8x128xf32>
    %226 = tpu.reciprocal %225 {approx = true} : vector<8x128xf32> -> vector<8x128xf32>
    %227 = vector.extract_strided_slice %212 {offsets = [0, 256], sizes = [8, 128], strides = [1, 1]} : vector<8x512xf32> to vector<8x128xf32>
    %228 = math.tanh %227 : vector<8x128xf32>
    %229 = vector.extract_strided_slice %212 {offsets = [0, 384], sizes = [8, 128], strides = [1, 1]} : vector<8x512xf32> to vector<8x128xf32>
    %cst_80 = arith.constant 0.000000e+00 : f32
    %230 = vector.broadcast %cst_80 : f32 to vector<8x128xf32>
    %231 = arith.subf %230, %229 : vector<8x128xf32>
    %232 = math.exp %231 : vector<8x128xf32>
    %cst_81 = arith.constant 1.000000e+00 : f32
    %233 = vector.broadcast %cst_81 : f32 to vector<8x128xf32>
    %234 = arith.addf %233, %232 : vector<8x128xf32>
    %235 = tpu.reciprocal %234 {approx = true} : vector<8x128xf32> -> vector<8x128xf32>
    %236 = arith.mulf %226, %199 : vector<8x128xf32>
    %237 = arith.mulf %219, %228 : vector<8x128xf32>
    %238 = arith.addf %236, %237 : vector<8x128xf32>
    %239 = math.tanh %238 : vector<8x128xf32>
    %240 = arith.mulf %235, %239 : vector<8x128xf32>
    %c0_i32_82 = arith.constant 0 : i32
    %241 = arith.addi %c0_i32_82, %c5_i32 : i32
    %242 = arith.index_cast %241 : i32 to index
    %c0_83 = arith.constant 0 : index
    %c0_84 = arith.constant 0 : index
    %243 = vector.load %arg11[%242, %c0_83, %c0_84] : memref<8x8x128xf32, #tpu.memory_space<vmem>>, vector<1x8x128xf32>
    %244 = vector.shape_cast %243 : vector<1x8x128xf32> to vector<8x128xf32>
    %245 = vector.shape_cast %240 : vector<8x128xf32> to vector<1x8x128xf32>
    tpu.vector_store %arg11[%242, %c0_83, %c0_84], %245 {strides = array<i32>} : memref<8x8x128xf32, #tpu.memory_space<vmem>>, vector<1x8x128xf32>,
    %c6_i32 = arith.constant 6 : i32
    %246 = arith.index_cast %c6_i32 : i32 to index
    %c0_85 = arith.constant 0 : index
    %c0_86 = arith.constant 0 : index
    %247 = vector.load %arg12[%246, %c0_85, %c0_86] : memref<8x8x512xf32, #tpu.memory_space<vmem>>, vector<1x8x512xf32>
    %248 = vector.shape_cast %247 : vector<1x8x512xf32> to vector<8x512xf32>
    %249 = arith.truncf %240 : vector<8x128xf32> to vector<8x128xbf16>
    %cst_87 = arith.constant dense<0.000000e+00> : vector<8x512xf32>
    %250 = tpu.matmul %249, %1, %cst_87 {dimension_numbers = #tpu.dot_dimension_numbers<[1], [0], [0], [1], [0, 0, 1, 1], [], []>} : vector<8x128xbf16>, vector<128x512xbf16>, vector<8x512xf32> -> vector<8x512xf32>
    %251 = arith.addf %248, %250 : vector<8x512xf32>
    %252 = vector.extract_strided_slice %251 {offsets = [0, 0], sizes = [8, 128], strides = [1, 1]} : vector<8x512xf32> to vector<8x128xf32>
    %cst_88 = arith.constant 0.000000e+00 : f32
    %253 = vector.broadcast %cst_88 : f32 to vector<8x128xf32>
    %254 = arith.subf %253, %252 : vector<8x128xf32>
    %255 = math.exp %254 : vector<8x128xf32>
    %cst_89 = arith.constant 1.000000e+00 : f32
    %256 = vector.broadcast %cst_89 : f32 to vector<8x128xf32>
    %257 = arith.addf %256, %255 : vector<8x128xf32>
    %258 = tpu.reciprocal %257 {approx = true} : vector<8x128xf32> -> vector<8x128xf32>
    %259 = vector.extract_strided_slice %251 {offsets = [0, 128], sizes = [8, 128], strides = [1, 1]} : vector<8x512xf32> to vector<8x128xf32>
    %cst_90 = arith.constant 0.000000e+00 : f32
    %260 = vector.broadcast %cst_90 : f32 to vector<8x128xf32>
    %261 = arith.subf %260, %259 : vector<8x128xf32>
    %262 = math.exp %261 : vector<8x128xf32>
    %cst_91 = arith.constant 1.000000e+00 : f32
    %263 = vector.broadcast %cst_91 : f32 to vector<8x128xf32>
    %264 = arith.addf %263, %262 : vector<8x128xf32>
    %265 = tpu.reciprocal %264 {approx = true} : vector<8x128xf32> -> vector<8x128xf32>
    %266 = vector.extract_strided_slice %251 {offsets = [0, 256], sizes = [8, 128], strides = [1, 1]} : vector<8x512xf32> to vector<8x128xf32>
    %267 = math.tanh %266 : vector<8x128xf32>
    %268 = vector.extract_strided_slice %251 {offsets = [0, 384], sizes = [8, 128], strides = [1, 1]} : vector<8x512xf32> to vector<8x128xf32>
    %cst_92 = arith.constant 0.000000e+00 : f32
    %269 = vector.broadcast %cst_92 : f32 to vector<8x128xf32>
    %270 = arith.subf %269, %268 : vector<8x128xf32>
    %271 = math.exp %270 : vector<8x128xf32>
    %cst_93 = arith.constant 1.000000e+00 : f32
    %272 = vector.broadcast %cst_93 : f32 to vector<8x128xf32>
    %273 = arith.addf %272, %271 : vector<8x128xf32>
    %274 = tpu.reciprocal %273 {approx = true} : vector<8x128xf32> -> vector<8x128xf32>
    %275 = arith.mulf %265, %238 : vector<8x128xf32>
    %276 = arith.mulf %258, %267 : vector<8x128xf32>
    %277 = arith.addf %275, %276 : vector<8x128xf32>
    %278 = math.tanh %277 : vector<8x128xf32>
    %279 = arith.mulf %274, %278 : vector<8x128xf32>
    %c0_i32_94 = arith.constant 0 : i32
    %280 = arith.addi %c0_i32_94, %c6_i32 : i32
    %281 = arith.index_cast %280 : i32 to index
    %c0_95 = arith.constant 0 : index
    %c0_96 = arith.constant 0 : index
    %282 = vector.load %arg11[%281, %c0_95, %c0_96] : memref<8x8x128xf32, #tpu.memory_space<vmem>>, vector<1x8x128xf32>
    %283 = vector.shape_cast %282 : vector<1x8x128xf32> to vector<8x128xf32>
    %284 = vector.shape_cast %279 : vector<8x128xf32> to vector<1x8x128xf32>
    tpu.vector_store %arg11[%281, %c0_95, %c0_96], %284 {strides = array<i32>} : memref<8x8x128xf32, #tpu.memory_space<vmem>>, vector<1x8x128xf32>,
    %c7_i32 = arith.constant 7 : i32
    %285 = arith.index_cast %c7_i32 : i32 to index
    %c0_97 = arith.constant 0 : index
    %c0_98 = arith.constant 0 : index
    %286 = vector.load %arg12[%285, %c0_97, %c0_98] : memref<8x8x512xf32, #tpu.memory_space<vmem>>, vector<1x8x512xf32>
    %287 = vector.shape_cast %286 : vector<1x8x512xf32> to vector<8x512xf32>
    %288 = arith.truncf %279 : vector<8x128xf32> to vector<8x128xbf16>
    %cst_99 = arith.constant dense<0.000000e+00> : vector<8x512xf32>
    %289 = tpu.matmul %288, %1, %cst_99 {dimension_numbers = #tpu.dot_dimension_numbers<[1], [0], [0], [1], [0, 0, 1, 1], [], []>} : vector<8x128xbf16>, vector<128x512xbf16>, vector<8x512xf32> -> vector<8x512xf32>
    %290 = arith.addf %287, %289 : vector<8x512xf32>
    %291 = vector.extract_strided_slice %290 {offsets = [0, 0], sizes = [8, 128], strides = [1, 1]} : vector<8x512xf32> to vector<8x128xf32>
    %cst_100 = arith.constant 0.000000e+00 : f32
    %292 = vector.broadcast %cst_100 : f32 to vector<8x128xf32>
    %293 = arith.subf %292, %291 : vector<8x128xf32>
    %294 = math.exp %293 : vector<8x128xf32>
    %cst_101 = arith.constant 1.000000e+00 : f32
    %295 = vector.broadcast %cst_101 : f32 to vector<8x128xf32>
    %296 = arith.addf %295, %294 : vector<8x128xf32>
    %297 = tpu.reciprocal %296 {approx = true} : vector<8x128xf32> -> vector<8x128xf32>
    %298 = vector.extract_strided_slice %290 {offsets = [0, 128], sizes = [8, 128], strides = [1, 1]} : vector<8x512xf32> to vector<8x128xf32>
    %cst_102 = arith.constant 0.000000e+00 : f32
    %299 = vector.broadcast %cst_102 : f32 to vector<8x128xf32>
    %300 = arith.subf %299, %298 : vector<8x128xf32>
    %301 = math.exp %300 : vector<8x128xf32>
    %cst_103 = arith.constant 1.000000e+00 : f32
    %302 = vector.broadcast %cst_103 : f32 to vector<8x128xf32>
    %303 = arith.addf %302, %301 : vector<8x128xf32>
    %304 = tpu.reciprocal %303 {approx = true} : vector<8x128xf32> -> vector<8x128xf32>
    %305 = vector.extract_strided_slice %290 {offsets = [0, 256], sizes = [8, 128], strides = [1, 1]} : vector<8x512xf32> to vector<8x128xf32>
    %306 = math.tanh %305 : vector<8x128xf32>
    %307 = vector.extract_strided_slice %290 {offsets = [0, 384], sizes = [8, 128], strides = [1, 1]} : vector<8x512xf32> to vector<8x128xf32>
    %cst_104 = arith.constant 0.000000e+00 : f32
    %308 = vector.broadcast %cst_104 : f32 to vector<8x128xf32>
    %309 = arith.subf %308, %307 : vector<8x128xf32>
    %310 = math.exp %309 : vector<8x128xf32>
    %cst_105 = arith.constant 1.000000e+00 : f32
    %311 = vector.broadcast %cst_105 : f32 to vector<8x128xf32>
    %312 = arith.addf %311, %310 : vector<8x128xf32>
    %313 = tpu.reciprocal %312 {approx = true} : vector<8x128xf32> -> vector<8x128xf32>
    %314 = arith.mulf %304, %277 : vector<8x128xf32>
    %315 = arith.mulf %297, %306 : vector<8x128xf32>
    %316 = arith.addf %314, %315 : vector<8x128xf32>
    %317 = math.tanh %316 : vector<8x128xf32>
    %318 = arith.mulf %313, %317 : vector<8x128xf32>
    %c0_i32_106 = arith.constant 0 : i32
    %319 = arith.addi %c0_i32_106, %c7_i32 : i32
    %320 = arith.index_cast %319 : i32 to index
    %c0_107 = arith.constant 0 : index
    %c0_108 = arith.constant 0 : index
    %321 = vector.load %arg11[%320, %c0_107, %c0_108] : memref<8x8x128xf32, #tpu.memory_space<vmem>>, vector<1x8x128xf32>
    %322 = vector.shape_cast %321 : vector<1x8x128xf32> to vector<8x128xf32>
    %323 = vector.shape_cast %318 : vector<8x128xf32> to vector<1x8x128xf32>
    tpu.vector_store %arg11[%320, %c0_107, %c0_108], %323 {strides = array<i32>} : memref<8x8x128xf32, #tpu.memory_space<vmem>>, vector<1x8x128xf32>,
    %c8_i32 = arith.constant 8 : i32
    %c0_109 = arith.constant 0 : index
    %c0_110 = arith.constant 0 : index
    %324 = vector.load %arg5[%c0_109, %c0_110] : memref<128x512xbf16, #tpu.memory_space<vmem>>, vector<128x512xbf16>
    %c0_111 = arith.constant 0 : index
    %c0_112 = arith.constant 0 : index
    %325 = vector.load %arg6[%c0_111, %c0_112] : memref<128x512xbf16, #tpu.memory_space<vmem>>, vector<128x512xbf16>
    %c0_113 = arith.constant 0 : index
    %c0_114 = arith.constant 0 : index
    %326 = vector.load %arg7[%c0_113, %c0_114] : memref<1x512xf32, #tpu.memory_space<vmem>>, vector<1x512xf32>
    %cst_115 = arith.constant 0.000000e+00 : f32
    %327 = vector.broadcast %cst_115 : f32 to vector<8x128xf32>
    %cst_116 = arith.constant 0.000000e+00 : f32
    %328 = vector.broadcast %cst_116 : f32 to vector<8x128xf32>
    %c0_117 = arith.constant 0 : index
    %c0_118 = arith.constant 0 : index
    %c0_119 = arith.constant 0 : index
    %329 = vector.load %arg11[%c0_117, %c0_118, %c0_119] : memref<8x8x128xf32, #tpu.memory_space<vmem>>, vector<8x8x128xf32>
    %330 = vector.shape_cast %329 : vector<8x8x128xf32> to vector<64x128xf32>
    %331 = arith.truncf %330 : vector<64x128xf32> to vector<64x128xbf16>
    %cst_120 = arith.constant dense<0.000000e+00> : vector<64x512xf32>
    %332 = tpu.matmul %331, %324, %cst_120 {dimension_numbers = #tpu.dot_dimension_numbers<[1], [0], [0], [1], [0, 0, 1, 1], [], []>} : vector<64x128xbf16>, vector<128x512xbf16>, vector<64x512xf32> -> vector<64x512xf32>
    %333 = vector.broadcast %326 : vector<1x512xf32> to vector<64x512xf32>
    %334 = arith.addf %332, %333 : vector<64x512xf32>
    %335 = vector.shape_cast %334 : vector<64x512xf32> to vector<8x8x512xf32>
    %c0_121 = arith.constant 0 : index
    %c0_122 = arith.constant 0 : index
    %c0_123 = arith.constant 0 : index
    %336 = vector.load %arg12[%c0_121, %c0_122, %c0_123] : memref<8x8x512xf32, #tpu.memory_space<vmem>>, vector<8x8x512xf32>
    tpu.vector_store %arg12[%c0_121, %c0_122, %c0_123], %335 {strides = array<i32>} : memref<8x8x512xf32, #tpu.memory_space<vmem>>, vector<8x8x512xf32>,
    %c0_i32_124 = arith.constant 0 : i32
    %337 = arith.index_cast %c0_i32_124 : i32 to index
    %c0_125 = arith.constant 0 : index
    %c0_126 = arith.constant 0 : index
    %338 = vector.load %arg12[%337, %c0_125, %c0_126] : memref<8x8x512xf32, #tpu.memory_space<vmem>>, vector<1x8x512xf32>
    %339 = vector.shape_cast %338 : vector<1x8x512xf32> to vector<8x512xf32>
    %340 = arith.truncf %327 : vector<8x128xf32> to vector<8x128xbf16>
    %cst_127 = arith.constant dense<0.000000e+00> : vector<8x512xf32>
    %341 = tpu.matmul %340, %325, %cst_127 {dimension_numbers = #tpu.dot_dimension_numbers<[1], [0], [0], [1], [0, 0, 1, 1], [], []>} : vector<8x128xbf16>, vector<128x512xbf16>, vector<8x512xf32> -> vector<8x512xf32>
    %342 = arith.addf %339, %341 : vector<8x512xf32>
    %343 = vector.extract_strided_slice %342 {offsets = [0, 0], sizes = [8, 128], strides = [1, 1]} : vector<8x512xf32> to vector<8x128xf32>
    %cst_128 = arith.constant 0.000000e+00 : f32
    %344 = vector.broadcast %cst_128 : f32 to vector<8x128xf32>
    %345 = arith.subf %344, %343 : vector<8x128xf32>
    %346 = math.exp %345 : vector<8x128xf32>
    %cst_129 = arith.constant 1.000000e+00 : f32
    %347 = vector.broadcast %cst_129 : f32 to vector<8x128xf32>
    %348 = arith.addf %347, %346 : vector<8x128xf32>
    %349 = tpu.reciprocal %348 {approx = true} : vector<8x128xf32> -> vector<8x128xf32>
    %350 = vector.extract_strided_slice %342 {offsets = [0, 128], sizes = [8, 128], strides = [1, 1]} : vector<8x512xf32> to vector<8x128xf32>
    %cst_130 = arith.constant 0.000000e+00 : f32
    %351 = vector.broadcast %cst_130 : f32 to vector<8x128xf32>
    %352 = arith.subf %351, %350 : vector<8x128xf32>
    %353 = math.exp %352 : vector<8x128xf32>
    %cst_131 = arith.constant 1.000000e+00 : f32
    %354 = vector.broadcast %cst_131 : f32 to vector<8x128xf32>
    %355 = arith.addf %354, %353 : vector<8x128xf32>
    %356 = tpu.reciprocal %355 {approx = true} : vector<8x128xf32> -> vector<8x128xf32>
    %357 = vector.extract_strided_slice %342 {offsets = [0, 256], sizes = [8, 128], strides = [1, 1]} : vector<8x512xf32> to vector<8x128xf32>
    %358 = math.tanh %357 : vector<8x128xf32>
    %359 = vector.extract_strided_slice %342 {offsets = [0, 384], sizes = [8, 128], strides = [1, 1]} : vector<8x512xf32> to vector<8x128xf32>
    %cst_132 = arith.constant 0.000000e+00 : f32
    %360 = vector.broadcast %cst_132 : f32 to vector<8x128xf32>
    %361 = arith.subf %360, %359 : vector<8x128xf32>
    %362 = math.exp %361 : vector<8x128xf32>
    %cst_133 = arith.constant 1.000000e+00 : f32
    %363 = vector.broadcast %cst_133 : f32 to vector<8x128xf32>
    %364 = arith.addf %363, %362 : vector<8x128xf32>
    %365 = tpu.reciprocal %364 {approx = true} : vector<8x128xf32> -> vector<8x128xf32>
    %366 = arith.mulf %356, %328 : vector<8x128xf32>
    %367 = arith.mulf %349, %358 : vector<8x128xf32>
    %368 = arith.addf %366, %367 : vector<8x128xf32>
    %369 = math.tanh %368 : vector<8x128xf32>
    %370 = arith.mulf %365, %369 : vector<8x128xf32>
    %c1_i32_134 = arith.constant 1 : i32
    %371 = arith.index_cast %c1_i32_134 : i32 to index
    %c0_135 = arith.constant 0 : index
    %c0_136 = arith.constant 0 : index
    %372 = vector.load %arg12[%371, %c0_135, %c0_136] : memref<8x8x512xf32, #tpu.memory_space<vmem>>, vector<1x8x512xf32>
    %373 = vector.shape_cast %372 : vector<1x8x512xf32> to vector<8x512xf32>
    %374 = arith.truncf %370 : vector<8x128xf32> to vector<8x128xbf16>
    %cst_137 = arith.constant dense<0.000000e+00> : vector<8x512xf32>
    %375 = tpu.matmul %374, %325, %cst_137 {dimension_numbers = #tpu.dot_dimension_numbers<[1], [0], [0], [1], [0, 0, 1, 1], [], []>} : vector<8x128xbf16>, vector<128x512xbf16>, vector<8x512xf32> -> vector<8x512xf32>
    %376 = arith.addf %373, %375 : vector<8x512xf32>
    %377 = vector.extract_strided_slice %376 {offsets = [0, 0], sizes = [8, 128], strides = [1, 1]} : vector<8x512xf32> to vector<8x128xf32>
    %cst_138 = arith.constant 0.000000e+00 : f32
    %378 = vector.broadcast %cst_138 : f32 to vector<8x128xf32>
    %379 = arith.subf %378, %377 : vector<8x128xf32>
    %380 = math.exp %379 : vector<8x128xf32>
    %cst_139 = arith.constant 1.000000e+00 : f32
    %381 = vector.broadcast %cst_139 : f32 to vector<8x128xf32>
    %382 = arith.addf %381, %380 : vector<8x128xf32>
    %383 = tpu.reciprocal %382 {approx = true} : vector<8x128xf32> -> vector<8x128xf32>
    %384 = vector.extract_strided_slice %376 {offsets = [0, 128], sizes = [8, 128], strides = [1, 1]} : vector<8x512xf32> to vector<8x128xf32>
    %cst_140 = arith.constant 0.000000e+00 : f32
    %385 = vector.broadcast %cst_140 : f32 to vector<8x128xf32>
    %386 = arith.subf %385, %384 : vector<8x128xf32>
    %387 = math.exp %386 : vector<8x128xf32>
    %cst_141 = arith.constant 1.000000e+00 : f32
    %388 = vector.broadcast %cst_141 : f32 to vector<8x128xf32>
    %389 = arith.addf %388, %387 : vector<8x128xf32>
    %390 = tpu.reciprocal %389 {approx = true} : vector<8x128xf32> -> vector<8x128xf32>
    %391 = vector.extract_strided_slice %376 {offsets = [0, 256], sizes = [8, 128], strides = [1, 1]} : vector<8x512xf32> to vector<8x128xf32>
    %392 = math.tanh %391 : vector<8x128xf32>
    %393 = vector.extract_strided_slice %376 {offsets = [0, 384], sizes = [8, 128], strides = [1, 1]} : vector<8x512xf32> to vector<8x128xf32>
    %cst_142 = arith.constant 0.000000e+00 : f32
    %394 = vector.broadcast %cst_142 : f32 to vector<8x128xf32>
    %395 = arith.subf %394, %393 : vector<8x128xf32>
    %396 = math.exp %395 : vector<8x128xf32>
    %cst_143 = arith.constant 1.000000e+00 : f32
    %397 = vector.broadcast %cst_143 : f32 to vector<8x128xf32>
    %398 = arith.addf %397, %396 : vector<8x128xf32>
    %399 = tpu.reciprocal %398 {approx = true} : vector<8x128xf32> -> vector<8x128xf32>
    %400 = arith.mulf %390, %368 : vector<8x128xf32>
    %401 = arith.mulf %383, %392 : vector<8x128xf32>
    %402 = arith.addf %400, %401 : vector<8x128xf32>
    %403 = math.tanh %402 : vector<8x128xf32>
    %404 = arith.mulf %399, %403 : vector<8x128xf32>
    %c2_i32_144 = arith.constant 2 : i32
    %405 = arith.index_cast %c2_i32_144 : i32 to index
    %c0_145 = arith.constant 0 : index
    %c0_146 = arith.constant 0 : index
    %406 = vector.load %arg12[%405, %c0_145, %c0_146] : memref<8x8x512xf32, #tpu.memory_space<vmem>>, vector<1x8x512xf32>
    %407 = vector.shape_cast %406 : vector<1x8x512xf32> to vector<8x512xf32>
    %408 = arith.truncf %404 : vector<8x128xf32> to vector<8x128xbf16>
    %cst_147 = arith.constant dense<0.000000e+00> : vector<8x512xf32>
    %409 = tpu.matmul %408, %325, %cst_147 {dimension_numbers = #tpu.dot_dimension_numbers<[1], [0], [0], [1], [0, 0, 1, 1], [], []>} : vector<8x128xbf16>, vector<128x512xbf16>, vector<8x512xf32> -> vector<8x512xf32>
    %410 = arith.addf %407, %409 : vector<8x512xf32>
    %411 = vector.extract_strided_slice %410 {offsets = [0, 0], sizes = [8, 128], strides = [1, 1]} : vector<8x512xf32> to vector<8x128xf32>
    %cst_148 = arith.constant 0.000000e+00 : f32
    %412 = vector.broadcast %cst_148 : f32 to vector<8x128xf32>
    %413 = arith.subf %412, %411 : vector<8x128xf32>
    %414 = math.exp %413 : vector<8x128xf32>
    %cst_149 = arith.constant 1.000000e+00 : f32
    %415 = vector.broadcast %cst_149 : f32 to vector<8x128xf32>
    %416 = arith.addf %415, %414 : vector<8x128xf32>
    %417 = tpu.reciprocal %416 {approx = true} : vector<8x128xf32> -> vector<8x128xf32>
    %418 = vector.extract_strided_slice %410 {offsets = [0, 128], sizes = [8, 128], strides = [1, 1]} : vector<8x512xf32> to vector<8x128xf32>
    %cst_150 = arith.constant 0.000000e+00 : f32
    %419 = vector.broadcast %cst_150 : f32 to vector<8x128xf32>
    %420 = arith.subf %419, %418 : vector<8x128xf32>
    %421 = math.exp %420 : vector<8x128xf32>
    %cst_151 = arith.constant 1.000000e+00 : f32
    %422 = vector.broadcast %cst_151 : f32 to vector<8x128xf32>
    %423 = arith.addf %422, %421 : vector<8x128xf32>
    %424 = tpu.reciprocal %423 {approx = true} : vector<8x128xf32> -> vector<8x128xf32>
    %425 = vector.extract_strided_slice %410 {offsets = [0, 256], sizes = [8, 128], strides = [1, 1]} : vector<8x512xf32> to vector<8x128xf32>
    %426 = math.tanh %425 : vector<8x128xf32>
    %427 = vector.extract_strided_slice %410 {offsets = [0, 384], sizes = [8, 128], strides = [1, 1]} : vector<8x512xf32> to vector<8x128xf32>
    %cst_152 = arith.constant 0.000000e+00 : f32
    %428 = vector.broadcast %cst_152 : f32 to vector<8x128xf32>
    %429 = arith.subf %428, %427 : vector<8x128xf32>
    %430 = math.exp %429 : vector<8x128xf32>
    %cst_153 = arith.constant 1.000000e+00 : f32
    %431 = vector.broadcast %cst_153 : f32 to vector<8x128xf32>
    %432 = arith.addf %431, %430 : vector<8x128xf32>
    %433 = tpu.reciprocal %432 {approx = true} : vector<8x128xf32> -> vector<8x128xf32>
    %434 = arith.mulf %424, %402 : vector<8x128xf32>
    %435 = arith.mulf %417, %426 : vector<8x128xf32>
    %436 = arith.addf %434, %435 : vector<8x128xf32>
    %437 = math.tanh %436 : vector<8x128xf32>
    %438 = arith.mulf %433, %437 : vector<8x128xf32>
    %c3_i32_154 = arith.constant 3 : i32
    %439 = arith.index_cast %c3_i32_154 : i32 to index
    %c0_155 = arith.constant 0 : index
    %c0_156 = arith.constant 0 : index
    %440 = vector.load %arg12[%439, %c0_155, %c0_156] : memref<8x8x512xf32, #tpu.memory_space<vmem>>, vector<1x8x512xf32>
    %441 = vector.shape_cast %440 : vector<1x8x512xf32> to vector<8x512xf32>
    %442 = arith.truncf %438 : vector<8x128xf32> to vector<8x128xbf16>
    %cst_157 = arith.constant dense<0.000000e+00> : vector<8x512xf32>
    %443 = tpu.matmul %442, %325, %cst_157 {dimension_numbers = #tpu.dot_dimension_numbers<[1], [0], [0], [1], [0, 0, 1, 1], [], []>} : vector<8x128xbf16>, vector<128x512xbf16>, vector<8x512xf32> -> vector<8x512xf32>
    %444 = arith.addf %441, %443 : vector<8x512xf32>
    %445 = vector.extract_strided_slice %444 {offsets = [0, 0], sizes = [8, 128], strides = [1, 1]} : vector<8x512xf32> to vector<8x128xf32>
    %cst_158 = arith.constant 0.000000e+00 : f32
    %446 = vector.broadcast %cst_158 : f32 to vector<8x128xf32>
    %447 = arith.subf %446, %445 : vector<8x128xf32>
    %448 = math.exp %447 : vector<8x128xf32>
    %cst_159 = arith.constant 1.000000e+00 : f32
    %449 = vector.broadcast %cst_159 : f32 to vector<8x128xf32>
    %450 = arith.addf %449, %448 : vector<8x128xf32>
    %451 = tpu.reciprocal %450 {approx = true} : vector<8x128xf32> -> vector<8x128xf32>
    %452 = vector.extract_strided_slice %444 {offsets = [0, 128], sizes = [8, 128], strides = [1, 1]} : vector<8x512xf32> to vector<8x128xf32>
    %cst_160 = arith.constant 0.000000e+00 : f32
    %453 = vector.broadcast %cst_160 : f32 to vector<8x128xf32>
    %454 = arith.subf %453, %452 : vector<8x128xf32>
    %455 = math.exp %454 : vector<8x128xf32>
    %cst_161 = arith.constant 1.000000e+00 : f32
    %456 = vector.broadcast %cst_161 : f32 to vector<8x128xf32>
    %457 = arith.addf %456, %455 : vector<8x128xf32>
    %458 = tpu.reciprocal %457 {approx = true} : vector<8x128xf32> -> vector<8x128xf32>
    %459 = vector.extract_strided_slice %444 {offsets = [0, 256], sizes = [8, 128], strides = [1, 1]} : vector<8x512xf32> to vector<8x128xf32>
    %460 = math.tanh %459 : vector<8x128xf32>
    %461 = vector.extract_strided_slice %444 {offsets = [0, 384], sizes = [8, 128], strides = [1, 1]} : vector<8x512xf32> to vector<8x128xf32>
    %cst_162 = arith.constant 0.000000e+00 : f32
    %462 = vector.broadcast %cst_162 : f32 to vector<8x128xf32>
    %463 = arith.subf %462, %461 : vector<8x128xf32>
    %464 = math.exp %463 : vector<8x128xf32>
    %cst_163 = arith.constant 1.000000e+00 : f32
    %465 = vector.broadcast %cst_163 : f32 to vector<8x128xf32>
    %466 = arith.addf %465, %464 : vector<8x128xf32>
    %467 = tpu.reciprocal %466 {approx = true} : vector<8x128xf32> -> vector<8x128xf32>
    %468 = arith.mulf %458, %436 : vector<8x128xf32>
    %469 = arith.mulf %451, %460 : vector<8x128xf32>
    %470 = arith.addf %468, %469 : vector<8x128xf32>
    %471 = math.tanh %470 : vector<8x128xf32>
    %472 = arith.mulf %467, %471 : vector<8x128xf32>
    %c4_i32_164 = arith.constant 4 : i32
    %473 = arith.index_cast %c4_i32_164 : i32 to index
    %c0_165 = arith.constant 0 : index
    %c0_166 = arith.constant 0 : index
    %474 = vector.load %arg12[%473, %c0_165, %c0_166] : memref<8x8x512xf32, #tpu.memory_space<vmem>>, vector<1x8x512xf32>
    %475 = vector.shape_cast %474 : vector<1x8x512xf32> to vector<8x512xf32>
    %476 = arith.truncf %472 : vector<8x128xf32> to vector<8x128xbf16>
    %cst_167 = arith.constant dense<0.000000e+00> : vector<8x512xf32>
    %477 = tpu.matmul %476, %325, %cst_167 {dimension_numbers = #tpu.dot_dimension_numbers<[1], [0], [0], [1], [0, 0, 1, 1], [], []>} : vector<8x128xbf16>, vector<128x512xbf16>, vector<8x512xf32> -> vector<8x512xf32>
    %478 = arith.addf %475, %477 : vector<8x512xf32>
    %479 = vector.extract_strided_slice %478 {offsets = [0, 0], sizes = [8, 128], strides = [1, 1]} : vector<8x512xf32> to vector<8x128xf32>
    %cst_168 = arith.constant 0.000000e+00 : f32
    %480 = vector.broadcast %cst_168 : f32 to vector<8x128xf32>
    %481 = arith.subf %480, %479 : vector<8x128xf32>
    %482 = math.exp %481 : vector<8x128xf32>
    %cst_169 = arith.constant 1.000000e+00 : f32
    %483 = vector.broadcast %cst_169 : f32 to vector<8x128xf32>
    %484 = arith.addf %483, %482 : vector<8x128xf32>
    %485 = tpu.reciprocal %484 {approx = true} : vector<8x128xf32> -> vector<8x128xf32>
    %486 = vector.extract_strided_slice %478 {offsets = [0, 128], sizes = [8, 128], strides = [1, 1]} : vector<8x512xf32> to vector<8x128xf32>
    %cst_170 = arith.constant 0.000000e+00 : f32
    %487 = vector.broadcast %cst_170 : f32 to vector<8x128xf32>
    %488 = arith.subf %487, %486 : vector<8x128xf32>
    %489 = math.exp %488 : vector<8x128xf32>
    %cst_171 = arith.constant 1.000000e+00 : f32
    %490 = vector.broadcast %cst_171 : f32 to vector<8x128xf32>
    %491 = arith.addf %490, %489 : vector<8x128xf32>
    %492 = tpu.reciprocal %491 {approx = true} : vector<8x128xf32> -> vector<8x128xf32>
    %493 = vector.extract_strided_slice %478 {offsets = [0, 256], sizes = [8, 128], strides = [1, 1]} : vector<8x512xf32> to vector<8x128xf32>
    %494 = math.tanh %493 : vector<8x128xf32>
    %495 = vector.extract_strided_slice %478 {offsets = [0, 384], sizes = [8, 128], strides = [1, 1]} : vector<8x512xf32> to vector<8x128xf32>
    %cst_172 = arith.constant 0.000000e+00 : f32
    %496 = vector.broadcast %cst_172 : f32 to vector<8x128xf32>
    %497 = arith.subf %496, %495 : vector<8x128xf32>
    %498 = math.exp %497 : vector<8x128xf32>
    %cst_173 = arith.constant 1.000000e+00 : f32
    %499 = vector.broadcast %cst_173 : f32 to vector<8x128xf32>
    %500 = arith.addf %499, %498 : vector<8x128xf32>
    %501 = tpu.reciprocal %500 {approx = true} : vector<8x128xf32> -> vector<8x128xf32>
    %502 = arith.mulf %492, %470 : vector<8x128xf32>
    %503 = arith.mulf %485, %494 : vector<8x128xf32>
    %504 = arith.addf %502, %503 : vector<8x128xf32>
    %505 = math.tanh %504 : vector<8x128xf32>
    %506 = arith.mulf %501, %505 : vector<8x128xf32>
    %c5_i32_174 = arith.constant 5 : i32
    %507 = arith.index_cast %c5_i32_174 : i32 to index
    %c0_175 = arith.constant 0 : index
    %c0_176 = arith.constant 0 : index
    %508 = vector.load %arg12[%507, %c0_175, %c0_176] : memref<8x8x512xf32, #tpu.memory_space<vmem>>, vector<1x8x512xf32>
    %509 = vector.shape_cast %508 : vector<1x8x512xf32> to vector<8x512xf32>
    %510 = arith.truncf %506 : vector<8x128xf32> to vector<8x128xbf16>
    %cst_177 = arith.constant dense<0.000000e+00> : vector<8x512xf32>
    %511 = tpu.matmul %510, %325, %cst_177 {dimension_numbers = #tpu.dot_dimension_numbers<[1], [0], [0], [1], [0, 0, 1, 1], [], []>} : vector<8x128xbf16>, vector<128x512xbf16>, vector<8x512xf32> -> vector<8x512xf32>
    %512 = arith.addf %509, %511 : vector<8x512xf32>
    %513 = vector.extract_strided_slice %512 {offsets = [0, 0], sizes = [8, 128], strides = [1, 1]} : vector<8x512xf32> to vector<8x128xf32>
    %cst_178 = arith.constant 0.000000e+00 : f32
    %514 = vector.broadcast %cst_178 : f32 to vector<8x128xf32>
    %515 = arith.subf %514, %513 : vector<8x128xf32>
    %516 = math.exp %515 : vector<8x128xf32>
    %cst_179 = arith.constant 1.000000e+00 : f32
    %517 = vector.broadcast %cst_179 : f32 to vector<8x128xf32>
    %518 = arith.addf %517, %516 : vector<8x128xf32>
    %519 = tpu.reciprocal %518 {approx = true} : vector<8x128xf32> -> vector<8x128xf32>
    %520 = vector.extract_strided_slice %512 {offsets = [0, 128], sizes = [8, 128], strides = [1, 1]} : vector<8x512xf32> to vector<8x128xf32>
    %cst_180 = arith.constant 0.000000e+00 : f32
    %521 = vector.broadcast %cst_180 : f32 to vector<8x128xf32>
    %522 = arith.subf %521, %520 : vector<8x128xf32>
    %523 = math.exp %522 : vector<8x128xf32>
    %cst_181 = arith.constant 1.000000e+00 : f32
    %524 = vector.broadcast %cst_181 : f32 to vector<8x128xf32>
    %525 = arith.addf %524, %523 : vector<8x128xf32>
    %526 = tpu.reciprocal %525 {approx = true} : vector<8x128xf32> -> vector<8x128xf32>
    %527 = vector.extract_strided_slice %512 {offsets = [0, 256], sizes = [8, 128], strides = [1, 1]} : vector<8x512xf32> to vector<8x128xf32>
    %528 = math.tanh %527 : vector<8x128xf32>
    %529 = vector.extract_strided_slice %512 {offsets = [0, 384], sizes = [8, 128], strides = [1, 1]} : vector<8x512xf32> to vector<8x128xf32>
    %cst_182 = arith.constant 0.000000e+00 : f32
    %530 = vector.broadcast %cst_182 : f32 to vector<8x128xf32>
    %531 = arith.subf %530, %529 : vector<8x128xf32>
    %532 = math.exp %531 : vector<8x128xf32>
    %cst_183 = arith.constant 1.000000e+00 : f32
    %533 = vector.broadcast %cst_183 : f32 to vector<8x128xf32>
    %534 = arith.addf %533, %532 : vector<8x128xf32>
    %535 = tpu.reciprocal %534 {approx = true} : vector<8x128xf32> -> vector<8x128xf32>
    %536 = arith.mulf %526, %504 : vector<8x128xf32>
    %537 = arith.mulf %519, %528 : vector<8x128xf32>
    %538 = arith.addf %536, %537 : vector<8x128xf32>
    %539 = math.tanh %538 : vector<8x128xf32>
    %540 = arith.mulf %535, %539 : vector<8x128xf32>
    %c6_i32_184 = arith.constant 6 : i32
    %541 = arith.index_cast %c6_i32_184 : i32 to index
    %c0_185 = arith.constant 0 : index
    %c0_186 = arith.constant 0 : index
    %542 = vector.load %arg12[%541, %c0_185, %c0_186] : memref<8x8x512xf32, #tpu.memory_space<vmem>>, vector<1x8x512xf32>
    %543 = vector.shape_cast %542 : vector<1x8x512xf32> to vector<8x512xf32>
    %544 = arith.truncf %540 : vector<8x128xf32> to vector<8x128xbf16>
    %cst_187 = arith.constant dense<0.000000e+00> : vector<8x512xf32>
    %545 = tpu.matmul %544, %325, %cst_187 {dimension_numbers = #tpu.dot_dimension_numbers<[1], [0], [0], [1], [0, 0, 1, 1], [], []>} : vector<8x128xbf16>, vector<128x512xbf16>, vector<8x512xf32> -> vector<8x512xf32>
    %546 = arith.addf %543, %545 : vector<8x512xf32>
    %547 = vector.extract_strided_slice %546 {offsets = [0, 0], sizes = [8, 128], strides = [1, 1]} : vector<8x512xf32> to vector<8x128xf32>
    %cst_188 = arith.constant 0.000000e+00 : f32
    %548 = vector.broadcast %cst_188 : f32 to vector<8x128xf32>
    %549 = arith.subf %548, %547 : vector<8x128xf32>
    %550 = math.exp %549 : vector<8x128xf32>
    %cst_189 = arith.constant 1.000000e+00 : f32
    %551 = vector.broadcast %cst_189 : f32 to vector<8x128xf32>
    %552 = arith.addf %551, %550 : vector<8x128xf32>
    %553 = tpu.reciprocal %552 {approx = true} : vector<8x128xf32> -> vector<8x128xf32>
    %554 = vector.extract_strided_slice %546 {offsets = [0, 128], sizes = [8, 128], strides = [1, 1]} : vector<8x512xf32> to vector<8x128xf32>
    %cst_190 = arith.constant 0.000000e+00 : f32
    %555 = vector.broadcast %cst_190 : f32 to vector<8x128xf32>
    %556 = arith.subf %555, %554 : vector<8x128xf32>
    %557 = math.exp %556 : vector<8x128xf32>
    %cst_191 = arith.constant 1.000000e+00 : f32
    %558 = vector.broadcast %cst_191 : f32 to vector<8x128xf32>
    %559 = arith.addf %558, %557 : vector<8x128xf32>
    %560 = tpu.reciprocal %559 {approx = true} : vector<8x128xf32> -> vector<8x128xf32>
    %561 = vector.extract_strided_slice %546 {offsets = [0, 256], sizes = [8, 128], strides = [1, 1]} : vector<8x512xf32> to vector<8x128xf32>
    %562 = math.tanh %561 : vector<8x128xf32>
    %563 = vector.extract_strided_slice %546 {offsets = [0, 384], sizes = [8, 128], strides = [1, 1]} : vector<8x512xf32> to vector<8x128xf32>
    %cst_192 = arith.constant 0.000000e+00 : f32
    %564 = vector.broadcast %cst_192 : f32 to vector<8x128xf32>
    %565 = arith.subf %564, %563 : vector<8x128xf32>
    %566 = math.exp %565 : vector<8x128xf32>
    %cst_193 = arith.constant 1.000000e+00 : f32
    %567 = vector.broadcast %cst_193 : f32 to vector<8x128xf32>
    %568 = arith.addf %567, %566 : vector<8x128xf32>
    %569 = tpu.reciprocal %568 {approx = true} : vector<8x128xf32> -> vector<8x128xf32>
    %570 = arith.mulf %560, %538 : vector<8x128xf32>
    %571 = arith.mulf %553, %562 : vector<8x128xf32>
    %572 = arith.addf %570, %571 : vector<8x128xf32>
    %573 = math.tanh %572 : vector<8x128xf32>
    %574 = arith.mulf %569, %573 : vector<8x128xf32>
    %c7_i32_194 = arith.constant 7 : i32
    %575 = arith.index_cast %c7_i32_194 : i32 to index
    %c0_195 = arith.constant 0 : index
    %c0_196 = arith.constant 0 : index
    %576 = vector.load %arg12[%575, %c0_195, %c0_196] : memref<8x8x512xf32, #tpu.memory_space<vmem>>, vector<1x8x512xf32>
    %577 = vector.shape_cast %576 : vector<1x8x512xf32> to vector<8x512xf32>
    %578 = arith.truncf %574 : vector<8x128xf32> to vector<8x128xbf16>
    %cst_197 = arith.constant dense<0.000000e+00> : vector<8x512xf32>
    %579 = tpu.matmul %578, %325, %cst_197 {dimension_numbers = #tpu.dot_dimension_numbers<[1], [0], [0], [1], [0, 0, 1, 1], [], []>} : vector<8x128xbf16>, vector<128x512xbf16>, vector<8x512xf32> -> vector<8x512xf32>
    %580 = arith.addf %577, %579 : vector<8x512xf32>
    %581 = vector.extract_strided_slice %580 {offsets = [0, 0], sizes = [8, 128], strides = [1, 1]} : vector<8x512xf32> to vector<8x128xf32>
    %cst_198 = arith.constant 0.000000e+00 : f32
    %582 = vector.broadcast %cst_198 : f32 to vector<8x128xf32>
    %583 = arith.subf %582, %581 : vector<8x128xf32>
    %584 = math.exp %583 : vector<8x128xf32>
    %cst_199 = arith.constant 1.000000e+00 : f32
    %585 = vector.broadcast %cst_199 : f32 to vector<8x128xf32>
    %586 = arith.addf %585, %584 : vector<8x128xf32>
    %587 = tpu.reciprocal %586 {approx = true} : vector<8x128xf32> -> vector<8x128xf32>
    %588 = vector.extract_strided_slice %580 {offsets = [0, 128], sizes = [8, 128], strides = [1, 1]} : vector<8x512xf32> to vector<8x128xf32>
    %cst_200 = arith.constant 0.000000e+00 : f32
    %589 = vector.broadcast %cst_200 : f32 to vector<8x128xf32>
    %590 = arith.subf %589, %588 : vector<8x128xf32>
    %591 = math.exp %590 : vector<8x128xf32>
    %cst_201 = arith.constant 1.000000e+00 : f32
    %592 = vector.broadcast %cst_201 : f32 to vector<8x128xf32>
    %593 = arith.addf %592, %591 : vector<8x128xf32>
    %594 = tpu.reciprocal %593 {approx = true} : vector<8x128xf32> -> vector<8x128xf32>
    %595 = vector.extract_strided_slice %580 {offsets = [0, 256], sizes = [8, 128], strides = [1, 1]} : vector<8x512xf32> to vector<8x128xf32>
    %596 = math.tanh %595 : vector<8x128xf32>
    %597 = vector.extract_strided_slice %580 {offsets = [0, 384], sizes = [8, 128], strides = [1, 1]} : vector<8x512xf32> to vector<8x128xf32>
    %cst_202 = arith.constant 0.000000e+00 : f32
    %598 = vector.broadcast %cst_202 : f32 to vector<8x128xf32>
    %599 = arith.subf %598, %597 : vector<8x128xf32>
    %600 = math.exp %599 : vector<8x128xf32>
    %cst_203 = arith.constant 1.000000e+00 : f32
    %601 = vector.broadcast %cst_203 : f32 to vector<8x128xf32>
    %602 = arith.addf %601, %600 : vector<8x128xf32>
    %603 = tpu.reciprocal %602 {approx = true} : vector<8x128xf32> -> vector<8x128xf32>
    %604 = arith.mulf %594, %572 : vector<8x128xf32>
    %605 = arith.mulf %587, %596 : vector<8x128xf32>
    %606 = arith.addf %604, %605 : vector<8x128xf32>
    %607 = math.tanh %606 : vector<8x128xf32>
    %608 = arith.mulf %603, %607 : vector<8x128xf32>
    %c8_i32_204 = arith.constant 8 : i32
    %c0_205 = arith.constant 0 : index
    %c0_206 = arith.constant 0 : index
    %609 = vector.load %arg8[%c0_205, %c0_206] : memref<1x128xf32, #tpu.memory_space<vmem>>, vector<1x128xf32>
    %610 = vector.broadcast %609 : vector<1x128xf32> to vector<8x128xf32>
    %611 = arith.mulf %608, %610 : vector<8x128xf32>
    %cst_207 = arith.constant dense<0.000000e+00> : vector<8xf32>
    %612 = vector.multi_reduction <add>, %611, %cst_207 [1] : vector<8x128xf32> to vector<8xf32>
    %613 = vector.shape_cast %612 : vector<8xf32> to vector<8x1xf32>
    %c0_208 = arith.constant 0 : index
    %c0_209 = arith.constant 0 : index
    %614 = vector.load %arg9[%c0_208, %c0_209] : memref<1x1xf32, #tpu.memory_space<vmem>>, vector<1x1xf32>
    %615 = vector.broadcast %614 : vector<1x1xf32> to vector<8x1xf32>
    %616 = arith.addf %613, %615 : vector<8x1xf32>
    %c0_210 = arith.constant 0 : index
    %c0_211 = arith.constant 0 : index
    %617 = vector.load %arg10[%c0_210, %c0_211] : memref<8x1xf32, #tpu.memory_space<vmem>>, vector<8x1xf32>
    tpu.vector_store %arg10[%c0_210, %c0_211], %616 {strides = array<i32>} : memref<8x1xf32, #tpu.memory_space<vmem>>, vector<8x1xf32>,
    return
  }
  func.func @transform_0(%arg0: i32) -> (i32, i32, i32) {
    %c0_i32 = arith.constant 0 : i32
    %c0_i32_0 = arith.constant 0 : i32
    %c0_i32_1 = arith.constant 0 : i32
    return %c0_i32, %arg0, %c0_i32_0 : i32, i32, i32
  }
  func.func @transform_1(%arg0: i32) -> (i32, i32) {
    %c0_i32 = arith.constant 0 : i32
    %c0_i32_0 = arith.constant 0 : i32
    %c0_i32_1 = arith.constant 0 : i32
    return %c0_i32, %c0_i32_0 : i32, i32
  }
  func.func @transform_2(%arg0: i32) -> (i32, i32) {
    %c0_i32 = arith.constant 0 : i32
    %c0_i32_0 = arith.constant 0 : i32
    %c0_i32_1 = arith.constant 0 : i32
    return %c0_i32, %c0_i32_0 : i32, i32
  }
  func.func @transform_3(%arg0: i32) -> (i32, i32) {
    %c0_i32 = arith.constant 0 : i32
    %c0_i32_0 = arith.constant 0 : i32
    %c0_i32_1 = arith.constant 0 : i32
    return %c0_i32, %c0_i32_0 : i32, i32
  }
  func.func @transform_4(%arg0: i32) -> (i32, i32) {
    %c0_i32 = arith.constant 0 : i32
    %c0_i32_0 = arith.constant 0 : i32
    %c0_i32_1 = arith.constant 0 : i32
    return %c0_i32, %c0_i32_0 : i32, i32
  }
  func.func @transform_5(%arg0: i32) -> (i32, i32) {
    %c0_i32 = arith.constant 0 : i32
    %c0_i32_0 = arith.constant 0 : i32
    %c0_i32_1 = arith.constant 0 : i32
    return %c0_i32, %c0_i32_0 : i32, i32
  }
  func.func @transform_6(%arg0: i32) -> (i32, i32) {
    %c0_i32 = arith.constant 0 : i32
    %c0_i32_0 = arith.constant 0 : i32
    %c0_i32_1 = arith.constant 0 : i32
    return %c0_i32, %c0_i32_0 : i32, i32
  }
  func.func @transform_7(%arg0: i32) -> (i32, i32) {
    %c0_i32 = arith.constant 0 : i32
    %c0_i32_0 = arith.constant 0 : i32
    %c0_i32_1 = arith.constant 0 : i32
    return %c0_i32, %c0_i32_0 : i32, i32
  }
  func.func @transform_8(%arg0: i32) -> (i32, i32) {
    %c0_i32 = arith.constant 0 : i32
    %c0_i32_0 = arith.constant 0 : i32
    %c0_i32_1 = arith.constant 0 : i32
    return %c0_i32, %c0_i32_0 : i32, i32
  }
  func.func @transform_9(%arg0: i32) -> (i32, i32) {
    %c0_i32 = arith.constant 0 : i32
    %c0_i32_0 = arith.constant 0 : i32
    return %arg0, %c0_i32 : i32, i32
  }
}

</mosaic_0001>

<llo_original>
// kernel: tpu_custom_call.1
$region0: #{tpu_custom_call.1}
  #allocation0 [shape = 'u32[]', space=smem, size = 0x4, offset = 0x4, fixed_abs, tag = 'smem constant byte address 0x4 - core index']
  #allocation1 [shape = 'u32[72,128]{1,0:T(1,128)}', space=vmem, size = 0x9000, scoped, tag = 'internal scratch']
  #allocation2 [shape = 'f32[8,8,128]{2,1,0:T(8,128)}', space=vmem, size = 0x8000, scoped, tag = 'scratch operand']
  #allocation3 [shape = 'f32[8,8,512]{2,1,0:T(8,128)}', space=vmem, size = 0x20000, scoped, tag = 'scratch operand']
  #allocation4 [shape = 'f32[1,1]{1,0:T(1,128)S(1)}', space=vmem, size = 0x200, scoped, tag = 'scoped memory for tpu_custom_call.1']
  %s0 = inlined_call_operand.hbm [shape: bf16[8,8,128], index: 0, kind: input, shape index: {}]
  %s1 = inlined_call_operand.hbm [shape: bf16[128,512], index: 1, kind: input, shape index: {}]
  %s2 = inlined_call_operand.hbm [shape: bf16[128,512], index: 2, kind: input, shape index: {}]
  %s3 = inlined_call_operand.vmem [shape: f32[1,512], index: 3, kind: input, shape index: {}]
  %s4 = inlined_call_operand.hbm [shape: bf16[128,512], index: 4, kind: input, shape index: {}]
  %s5 = inlined_call_operand.hbm [shape: bf16[128,512], index: 5, kind: input, shape index: {}]
  %s6 = inlined_call_operand.hbm [shape: f32[1,512], index: 6, kind: input, shape index: {}]
  %s7 = inlined_call_operand.vmem [shape: f32[1,128], index: 7, kind: input, shape index: {}]
  %s8 = inlined_call_operand.<no memory space> [shape: f32[1,1], index: 8, kind: input, shape index: {}]
  %s9 = inlined_call_operand.vmem [shape: f32[8,1], index: 9, kind: output, shape index: {}]
  %s10 = sld [smem:[#allocation0]]
  $region70: #{tpu_custom_call.1} parent=0
    _
  %s12 = ssub.s32 1, %s10
  %s13 = scalar_select 0, %s12, %s10
  %v14 = vstv %s8
  %15 = vst [vmem:[#allocation4] sm:$0x1] %v14
  $region1: #{tpu_custom_call.1} parent=0
    #allocation5 [shape = 'u8[16384]{0}', space=vmem, size = 0x4000, scoped, tag = 'input window, operand 0, single buffered']
    #allocation6 [shape = 's32[1]{0}', space=sflag, size = 0x4, scoped, tag = 'scoped memory for tpu_custom_call.1']
    #allocation7 [shape = 'u8[131072]{0}', space=vmem, size = 0x20000, scoped, tag = 'input window, operand 1, single buffered']
    #allocation8 [shape = 's32[1]{0}', space=sflag, size = 0x4, scoped, tag = 'scoped memory for tpu_custom_call.1']
    #allocation9 [shape = 'u8[131072]{0}', space=vmem, size = 0x20000, scoped, tag = 'input window, operand 2, single buffered']
    #allocation10 [shape = 'u8[131072]{0}', space=vmem, size = 0x20000, scoped, tag = 'input window, operand 4, single buffered']
    #allocation11 [shape = 's32[1]{0}', space=sflag, size = 0x4, scoped, tag = 'scoped memory for tpu_custom_call.1']
    #allocation12 [shape = 'u8[131072]{0}', space=vmem, size = 0x20000, scoped, tag = 'input window, operand 5, single buffered']
    #allocation13 [shape = 'u8[2048]{0}', space=vmem, size = 0x800, scoped, tag = 'input window, operand 6, single buffered']
    #allocation14 [shape = 's32[1]{0}', space=sflag, size = 0x4, scoped, tag = 'scoped memory for tpu_custom_call.1']
    %16 = vsyncpa [#allocation6], 0
    %17 = vsyncpa [#allocation8], 0
    %18 = vsyncpa [#allocation11], 0
    %19 = vsyncpa [#allocation14], 0
    // Predicated region
    $region2: #{tpu_custom_call.1} parent=1 // pred_check
      _
    $region3: #{tpu_custom_call.1} parent=1 // pred_check_branch
      %21 = sbr.rel (0) target = $region5
    $region4: #{tpu_custom_call.1} parent=1 // pred_region
      %23 = vsyncadd [#allocation6], 0
      %s24 = sshll.u32 %s0, 4
      %s25 = int_to_ptr.hbm [resolvable:$true] %s24
      %s26 = sshll.u32 [#allocation5], 4
      %s27 = int_to_ptr.vmem [resolvable:$true] %s26
      %32 = dma.hbm_to_vmem [thread:$0]  %s25, 512, %s27, [#allocation6], 64, 64, 4
    $region5: #{tpu_custom_call.1} parent=1 // pred_fallthru
      _
    // Predicated region
    $region6: #{tpu_custom_call.1} parent=1 // pred_check
      _
    $region7: #{tpu_custom_call.1} parent=1 // pred_check_branch
      %34 = sbr.rel (0) target = $region9
    $region8: #{tpu_custom_call.1} parent=1 // pred_region
      %36 = vsyncadd [#allocation8], 0
      %s37 = sshll.u32 %s1, 4
      %s38 = int_to_ptr.hbm [resolvable:$true] %s37
      %s39 = sshll.u32 [#allocation7], 4
      %s40 = int_to_ptr.vmem [resolvable:$true] %s39
      %45 = dma.hbm_to_vmem [thread:$0]  %s38, 4096, %s40, [#allocation8], 256, 256, 16
    $region9: #{tpu_custom_call.1} parent=1 // pred_fallthru
      _
    // Predicated region
    $region10: #{tpu_custom_call.1} parent=1 // pred_check
      _
    $region11: #{tpu_custom_call.1} parent=1 // pred_check_branch
      %47 = sbr.rel (0) target = $region13
    $region12: #{tpu_custom_call.1} parent=1 // pred_region
      %49 = vsyncadd [#allocation8], 0
      %s50 = sshll.u32 %s2, 4
      %s51 = int_to_ptr.hbm [resolvable:$true] %s50
      %s52 = sshll.u32 [#allocation9], 4
      %s53 = int_to_ptr.vmem [resolvable:$true] %s52
      %58 = dma.hbm_to_vmem [thread:$0]  %s51, 4096, %s53, [#allocation8], 256, 256, 16
    $region13: #{tpu_custom_call.1} parent=1 // pred_fallthru
      _
    // Predicated region
    $region14: #{tpu_custom_call.1} parent=1 // pred_check
      _
    $region15: #{tpu_custom_call.1} parent=1 // pred_check_branch
      %60 = sbr.rel (0) target = $region17
    $region16: #{tpu_custom_call.1} parent=1 // pred_region
      _
    $region17: #{tpu_custom_call.1} parent=1 // pred_fallthru
      _
    // Predicated region
    $region18: #{tpu_custom_call.1} parent=1 // pred_check
      _
    $region19: #{tpu_custom_call.1} parent=1 // pred_check_branch
      %62 = sbr.rel (0) target = $region21
    $region20: #{tpu_custom_call.1} parent=1 // pred_region
      %64 = vsyncadd [#allocation11], 0
      %s65 = sshll.u32 %s4, 4
      %s66 = int_to_ptr.hbm [resolvable:$true] %s65
      %s67 = sshll.u32 [#allocation10], 4
      %s68 = int_to_ptr.vmem [resolvable:$true] %s67
      %73 = dma.hbm_to_vmem [thread:$0]  %s66, 4096, %s68, [#allocation11], 256, 256, 16
    $region21: #{tpu_custom_call.1} parent=1 // pred_fallthru
      _
    // Predicated region
    $region22: #{tpu_custom_call.1} parent=1 // pred_check
      _
    $region23: #{tpu_custom_call.1} parent=1 // pred_check_branch
      %75 = sbr.rel (0) target = $region25
    $region24: #{tpu_custom_call.1} parent=1 // pred_region
      %77 = vsyncadd [#allocation11], 0
      %s78 = sshll.u32 %s5, 4
      %s79 = int_to_ptr.hbm [resolvable:$true] %s78
      %s80 = sshll.u32 [#allocation12], 4
      %s81 = int_to_ptr.vmem [resolvable:$true] %s80
      %86 = dma.hbm_to_vmem [thread:$0]  %s79, 4096, %s81, [#allocation11], 256, 256, 16
    $region25: #{tpu_custom_call.1} parent=1 // pred_fallthru
      _
    // Predicated region
    $region26: #{tpu_custom_call.1} parent=1 // pred_check
      _
    $region27: #{tpu_custom_call.1} parent=1 // pred_check_branch
      %88 = sbr.rel (0) target = $region29
    $region28: #{tpu_custom_call.1} parent=1 // pred_region
      %90 = vsyncadd [#allocation14], 0
      %s92 = sshll.u32 %s6, 4
      %s93 = int_to_ptr.hbm [resolvable:$true] %s92
      %s94 = sshll.u32 [#allocation13], 4
      %s95 = int_to_ptr.vmem [resolvable:$true] %s94
      %97 = dma.hbm_to_vmem [thread:$0]  %s93, 64, %s95, [#allocation14]
    $region29: #{tpu_custom_call.1} parent=1 // pred_fallthru
      _
    // Predicated region
    $region30: #{tpu_custom_call.1} parent=1 // pred_check
      _
    $region31: #{tpu_custom_call.1} parent=1 // pred_check_branch
      %99 = sbr.rel (0) target = $region33
    $region32: #{tpu_custom_call.1} parent=1 // pred_region
      _
    $region33: #{tpu_custom_call.1} parent=1 // pred_fallthru
      _
    // Predicated region
    $region34: #{tpu_custom_call.1} parent=1 // pred_check
      _
    $region35: #{tpu_custom_call.1} parent=1 // pred_check_branch
      %101 = sbr.rel (0) target = $region37
    $region36: #{tpu_custom_call.1} parent=1 // pred_region
      _
    $region37: #{tpu_custom_call.1} parent=1 // pred_fallthru
      _
    // Predicated region
    $region38: #{tpu_custom_call.1} parent=1 // pred_check
      _
    $region39: #{tpu_custom_call.1} parent=1 // pred_check_branch
      %103 = sbr.rel (0) target = $region41
    $region40: #{tpu_custom_call.1} parent=1 // pred_region
      %105 = dma.done [#allocation6], 512
    $region41: #{tpu_custom_call.1} parent=1 // pred_fallthru
      _
    // Predicated region
    $region42: #{tpu_custom_call.1} parent=1 // pred_check
      _
    $region43: #{tpu_custom_call.1} parent=1 // pred_check_branch
      %107 = sbr.rel (0) target = $region45
    $region44: #{tpu_custom_call.1} parent=1 // pred_region
      %109 = dma.done [#allocation8], 4096
    $region45: #{tpu_custom_call.1} parent=1 // pred_fallthru
      _
    // Predicated region
    $region46: #{tpu_custom_call.1} parent=1 // pred_check
      _
    $region47: #{tpu_custom_call.1} parent=1 // pred_check_branch
      %111 = sbr.rel (0) target = $region49
    $region48: #{tpu_custom_call.1} parent=1 // pred_region
      %113 = dma.done [#allocation8], 4096
    $region49: #{tpu_custom_call.1} parent=1 // pred_fallthru
      _
    // Predicated region
    $region50: #{tpu_custom_call.1} parent=1 // pred_check
      _
    $region51: #{tpu_custom_call.1} parent=1 // pred_check_branch
      %115 = sbr.rel (0) target = $region53
    $region52: #{tpu_custom_call.1} parent=1 // pred_region
      %117 = dma.done [#allocation11], 4096
    $region53: #{tpu_custom_call.1} parent=1 // pred_fallthru
      _
    // Predicated region
    $region54: #{tpu_custom_call.1} parent=1 // pred_check
      _
    $region55: #{tpu_custom_call.1} parent=1 // pred_check_branch
      %119 = sbr.rel (0) target = $region57
    $region56: #{tpu_custom_call.1} parent=1 // pred_region
      %121 = dma.done [#allocation11], 4096
    $region57: #{tpu_custom_call.1} parent=1 // pred_fallthru
      _
    // Predicated region
    $region58: #{tpu_custom_call.1} parent=1 // pred_check
      _
    $region59: #{tpu_custom_call.1} parent=1 // pred_check_branch
      %123 = sbr.rel (0) target = $region61
    $region60: #{tpu_custom_call.1} parent=1 // pred_region
      %125 = dma.done [#allocation14], 64
    $region61: #{tpu_custom_call.1} parent=1 // pred_fallthru
      _
    %v127 = vld [vmem:[#allocation7] sm:$0xff]
    %v128 = vld [vmem:[#allocation7 + $0x8] sm:$0xff]
    %v129 = vld [vmem:[#allocation7 + $0x10] sm:$0xff]
    %v130 = vld [vmem:[#allocation7 + $0x18] sm:$0xff]
    %v131 = vld [vmem:[#allocation7 + $0x20] sm:$0xff]
    %v132 = vld [vmem:[#allocation7 + $0x28] sm:$0xff]
    %v133 = vld [vmem:[#allocation7 + $0x30] sm:$0xff]
    %v134 = vld [vmem:[#allocation7 + $0x38] sm:$0xff]
    %v135 = vld [vmem:[#allocation7 + $0x40] sm:$0xff]
    %v136 = vld [vmem:[#allocation7 + $0x48] sm:$0xff]
    %v137 = vld [vmem:[#allocation7 + $0x50] sm:$0xff]
    %v138 = vld [vmem:[#allocation7 + $0x58] sm:$0xff]
    %v139 = vld [vmem:[#allocation7 + $0x60] sm:$0xff]
    %v140 = vld [vmem:[#allocation7 + $0x68] sm:$0xff]
    %v141 = vld [vmem:[#allocation7 + $0x70] sm:$0xff]
    %v142 = vld [vmem:[#allocation7 + $0x78] sm:$0xff]
    %v143 = vld [vmem:[#allocation7 + $0x80] sm:$0xff]
    %v144 = vld [vmem:[#allocation7 + $0x88] sm:$0xff]
    %v145 = vld [vmem:[#allocation7 + $0x90] sm:$0xff]
    %v146 = vld [vmem:[#allocation7 + $0x98] sm:$0xff]
    %v147 = vld [vmem:[#allocation7 + $0xa0] sm:$0xff]
    %v148 = vld [vmem:[#allocation7 + $0xa8] sm:$0xff]
    %v149 = vld [vmem:[#allocation7 + $0xb0] sm:$0xff]
    %v150 = vld [vmem:[#allocation7 + $0xb8] sm:$0xff]
    %v151 = vld [vmem:[#allocation7 + $0xc0] sm:$0xff]
    %v152 = vld [vmem:[#allocation7 + $0xc8] sm:$0xff]
    %v153 = vld [vmem:[#allocation7 + $0xd0] sm:$0xff]
    %v154 = vld [vmem:[#allocation7 + $0xd8] sm:$0xff]
    %v155 = vld [vmem:[#allocation7 + $0xe0] sm:$0xff]
    %v156 = vld [vmem:[#allocation7 + $0xe8] sm:$0xff]
    %v157 = vld [vmem:[#allocation7 + $0xf0] sm:$0xff]
    %v158 = vld [vmem:[#allocation7 + $0xf8] sm:$0xff]
    %v159 = vld [vmem:[#allocation9] sm:$0xff]
    %v160 = vld [vmem:[#allocation9 + $0x8] sm:$0xff]
    %v161 = vld [vmem:[#allocation9 + $0x10] sm:$0xff]
    %v162 = vld [vmem:[#allocation9 + $0x18] sm:$0xff]
    %v163 = vld [vmem:[#allocation9 + $0x20] sm:$0xff]
    %v164 = vld [vmem:[#allocation9 + $0x28] sm:$0xff]
    %v165 = vld [vmem:[#allocation9 + $0x30] sm:$0xff]
    %v166 = vld [vmem:[#allocation9 + $0x38] sm:$0xff]
    %v167 = vld [vmem:[#allocation9 + $0x40] sm:$0xff]
    %v168 = vld [vmem:[#allocation9 + $0x48] sm:$0xff]
    %v169 = vld [vmem:[#allocation9 + $0x50] sm:$0xff]
    %v170 = vld [vmem:[#allocation9 + $0x58] sm:$0xff]
    %v171 = vld [vmem:[#allocation9 + $0x60] sm:$0xff]
    %v172 = vld [vmem:[#allocation9 + $0x68] sm:$0xff]
    %v173 = vld [vmem:[#allocation9 + $0x70] sm:$0xff]
    %v174 = vld [vmem:[#allocation9 + $0x78] sm:$0xff]
    %v175 = vld [vmem:[#allocation9 + $0x80] sm:$0xff]
    %v176 = vld [vmem:[#allocation9 + $0x88] sm:$0xff]
    %v177 = vld [vmem:[#allocation9 + $0x90] sm:$0xff]
    %v178 = vld [vmem:[#allocation9 + $0x98] sm:$0xff]
    %v179 = vld [vmem:[#allocation9 + $0xa0] sm:$0xff]
    %v180 = vld [vmem:[#allocation9 + $0xa8] sm:$0xff]
    %v181 = vld [vmem:[#allocation9 + $0xb0] sm:$0xff]
    %v182 = vld [vmem:[#allocation9 + $0xb8] sm:$0xff]
    %v183 = vld [vmem:[#allocation9 + $0xc0] sm:$0xff]
    %v184 = vld [vmem:[#allocation9 + $0xc8] sm:$0xff]
    %v185 = vld [vmem:[#allocation9 + $0xd0] sm:$0xff]
    %v186 = vld [vmem:[#allocation9 + $0xd8] sm:$0xff]
    %v187 = vld [vmem:[#allocation9 + $0xe0] sm:$0xff]
    %v188 = vld [vmem:[#allocation9 + $0xe8] sm:$0xff]
    %v189 = vld [vmem:[#allocation9 + $0xf0] sm:$0xff]
    %v190 = vld [vmem:[#allocation9 + $0xf8] sm:$0xff]
    %v191 = vld [vmem:[%s3] sm:$0xf]
    %v192 = vld [vmem:[#allocation5] sm:$0xf]
    %v193 = vld [vmem:[#allocation5 + $0x4] sm:$0xf]
    %v194 = vld [vmem:[#allocation5 + $0x8] sm:$0xf]
    %v195 = vld [vmem:[#allocation5 + $0xc] sm:$0xf]
    %v196 = vld [vmem:[#allocation5 + $0x10] sm:$0xf]
    %v197 = vld [vmem:[#allocation5 + $0x14] sm:$0xf]
    %v198 = vld [vmem:[#allocation5 + $0x18] sm:$0xf]
    %v199 = vld [vmem:[#allocation5 + $0x1c] sm:$0xf]
    %v201 = vperm.slane %v191, 0
    %v202 = vperm.slane %v191, 1
    %v203 = vperm.slane %v191, 2
    %v204 = vperm.slane %v191, 3
    %v217 = vunpack.c.l.b16 %v192
    %v218 = vunpack.c.l.b16 %v193
    %v219 = vunpack.c.l.b16 %v194
    %v220 = vunpack.c.l.b16 %v195
    %v221 = vunpack.c.l.b16 %v196
    %v222 = vunpack.c.l.b16 %v197
    %v223 = vunpack.c.l.b16 %v198
    %v224 = vunpack.c.l.b16 %v199
    %v225 = vpack.c.b16 %v218, %v217
    %v226 = vpack.c.b16 %v220, %v219
    %v227 = vpack.c.b16 %v222, %v221
    %v228 = vpack.c.b16 %v224, %v223
    %v265 = vunpack.c.l.b16 %v127
    %v266 = vunpack.c.h.b16 %v127
    %v267 = vunpack.c.l.b16 %v128
    %v268 = vunpack.c.h.b16 %v128
    %v269 = vunpack.c.l.b16 %v129
    %v270 = vunpack.c.h.b16 %v129
    %v271 = vunpack.c.l.b16 %v130
    %v272 = vunpack.c.h.b16 %v130
    %v273 = vunpack.c.l.b16 %v131
    %v274 = vunpack.c.h.b16 %v131
    %v275 = vunpack.c.l.b16 %v132
    %v276 = vunpack.c.h.b16 %v132
    %v277 = vunpack.c.l.b16 %v133
    %v278 = vunpack.c.h.b16 %v133
    %v279 = vunpack.c.l.b16 %v134
    %v280 = vunpack.c.h.b16 %v134
    %v281 = vunpack.c.l.b16 %v135
    %v282 = vunpack.c.h.b16 %v135
    %v283 = vunpack.c.l.b16 %v136
    %v284 = vunpack.c.h.b16 %v136
    %v285 = vunpack.c.l.b16 %v137
    %v286 = vunpack.c.h.b16 %v137
    %v287 = vunpack.c.l.b16 %v138
    %v288 = vunpack.c.h.b16 %v138
    %v289 = vunpack.c.l.b16 %v139
    %v290 = vunpack.c.h.b16 %v139
    %v291 = vunpack.c.l.b16 %v140
    %v292 = vunpack.c.h.b16 %v140
    %v293 = vunpack.c.l.b16 %v141
    %v294 = vunpack.c.h.b16 %v141
    %v295 = vunpack.c.l.b16 %v142
    %v296 = vunpack.c.h.b16 %v142
    %v297 = vunpack.c.l.b16 %v143
    %v298 = vunpack.c.h.b16 %v143
    %v299 = vunpack.c.l.b16 %v144
    %v300 = vunpack.c.h.b16 %v144
    %v301 = vunpack.c.l.b16 %v145
    %v302 = vunpack.c.h.b16 %v145
    %v303 = vunpack.c.l.b16 %v146
    %v304 = vunpack.c.h.b16 %v146
    %v305 = vunpack.c.l.b16 %v147
    %v306 = vunpack.c.h.b16 %v147
    %v307 = vunpack.c.l.b16 %v148
    %v308 = vunpack.c.h.b16 %v148
    %v309 = vunpack.c.l.b16 %v149
    %v310 = vunpack.c.h.b16 %v149
    %v311 = vunpack.c.l.b16 %v150
    %v312 = vunpack.c.h.b16 %v150
    %v313 = vunpack.c.l.b16 %v151
    %v314 = vunpack.c.h.b16 %v151
    %v315 = vunpack.c.l.b16 %v152
    %v316 = vunpack.c.h.b16 %v152
    %v317 = vunpack.c.l.b16 %v153
    %v318 = vunpack.c.h.b16 %v153
    %v319 = vunpack.c.l.b16 %v154
    %v320 = vunpack.c.h.b16 %v154
    %v321 = vunpack.c.l.b16 %v155
    %v322 = vunpack.c.h.b16 %v155
    %v323 = vunpack.c.l.b16 %v156
    %v324 = vunpack.c.h.b16 %v156
    %v325 = vunpack.c.l.b16 %v157
    %v326 = vunpack.c.h.b16 %v157
    %v327 = vunpack.c.l.b16 %v158
    %v328 = vunpack.c.h.b16 %v158
    %v329 = vpack.c.b16 %v269, %v265
    %v330 = vpack.c.b16 %v270, %v266
    %v331 = vpack.c.b16 %v271, %v267
    %v332 = vpack.c.b16 %v272, %v268
    %v333 = vpack.c.b16 %v277, %v273
    %v334 = vpack.c.b16 %v278, %v274
    %v335 = vpack.c.b16 %v279, %v275
    %v336 = vpack.c.b16 %v280, %v276
    %v337 = vpack.c.b16 %v285, %v281
    %v338 = vpack.c.b16 %v286, %v282
    %v339 = vpack.c.b16 %v287, %v283
    %v340 = vpack.c.b16 %v288, %v284
    %v341 = vpack.c.b16 %v293, %v289
    %v342 = vpack.c.b16 %v294, %v290
    %v343 = vpack.c.b16 %v295, %v291
    %v344 = vpack.c.b16 %v296, %v292
    %v345 = vpack.c.b16 %v301, %v297
    %v346 = vpack.c.b16 %v302, %v298
    %v347 = vpack.c.b16 %v303, %v299
    %v348 = vpack.c.b16 %v304, %v300
    %v349 = vpack.c.b16 %v309, %v305
    %v350 = vpack.c.b16 %v310, %v306
    %v351 = vpack.c.b16 %v311, %v307
    %v352 = vpack.c.b16 %v312, %v308
    %v353 = vpack.c.b16 %v317, %v313
    %v354 = vpack.c.b16 %v318, %v314
    %v355 = vpack.c.b16 %v319, %v315
    %v356 = vpack.c.b16 %v320, %v316
    %v357 = vpack.c.b16 %v325, %v321
    %v358 = vpack.c.b16 %v326, %v322
    %v359 = vpack.c.b16 %v327, %v323
    %v360 = vpack.c.b16 %v328, %v324
    %393 = vmatpush.bf16.msra.mxu0 %v357
    %394 = vmatpush.bf16.msra.mxu0 %v353
    %395 = vmatpush.bf16.msra.mxu0 %v349
    %396 = vmatpush.bf16.msra.mxu0 %v345
    %397 = vmatpush.bf16.msra.mxu0 %v341
    %398 = vmatpush.bf16.msra.mxu0 %v337
    %399 = vmatpush.bf16.msra.mxu0 %v333
    %400 = vmatpush.bf16.msra.mxu0 %v329
    %401 = vmatmul.bf16.gmra.mxu0 %v225
    %v402 = vpop.f32.mrf.mxu0
    %v403 = vadd.f32 %v201, %v402
    %v404 = vpop.f32.mrf.mxu0
    %v405 = vadd.f32 %v201, %v404
    %406 = vmatmul.bf16.gmra.mxu0 %v226
    %v407 = vpop.f32.mrf.mxu0
    %v408 = vadd.f32 %v201, %v407
    %v409 = vpop.f32.mrf.mxu0
    %v410 = vadd.f32 %v201, %v409
    %411 = vmatmul.bf16.gmra.mxu0 %v227
    %v412 = vpop.f32.mrf.mxu0
    %v413 = vadd.f32 %v201, %v412
    %v414 = vpop.f32.mrf.mxu0
    %v415 = vadd.f32 %v201, %v414
    %416 = vmatmul.bf16.gmra.mxu0 %v228
    %v417 = vpop.f32.mrf.mxu0
    %v418 = vadd.f32 %v201, %v417
    %v419 = vpop.f32.mrf.mxu0
    %v420 = vadd.f32 %v201, %v419
    %421 = vdwg.mxu0
    %422 = vmatpush.bf16.msra.mxu0 %v358
    %423 = vmatpush.bf16.msra.mxu0 %v354
    %424 = vmatpush.bf16.msra.mxu0 %v350
    %425 = vmatpush.bf16.msra.mxu0 %v346
    %426 = vmatpush.bf16.msra.mxu0 %v342
    %427 = vmatpush.bf16.msra.mxu0 %v338
    %428 = vmatpush.bf16.msra.mxu0 %v334
    %429 = vmatpush.bf16.msra.mxu0 %v330
    %430 = vmatmul.bf16.gmra.mxu0 %v225
    %v431 = vpop.f32.mrf.mxu0
    %v432 = vadd.f32 %v202, %v431
    %v433 = vpop.f32.mrf.mxu0
    %v434 = vadd.f32 %v202, %v433
    %435 = vmatmul.bf16.gmra.mxu0 %v226
    %v436 = vpop.f32.mrf.mxu0
    %v437 = vadd.f32 %v202, %v436
    %v438 = vpop.f32.mrf.mxu0
    %v439 = vadd.f32 %v202, %v438
    %440 = vmatmul.bf16.gmra.mxu0 %v227
    %v441 = vpop.f32.mrf.mxu0
    %v442 = vadd.f32 %v202, %v441
    %v443 = vpop.f32.mrf.mxu0
    %v444 = vadd.f32 %v202, %v443
    %445 = vmatmul.bf16.gmra.mxu0 %v228
    %v446 = vpop.f32.mrf.mxu0
    %v447 = vadd.f32 %v202, %v446
    %v448 = vpop.f32.mrf.mxu0
    %v449 = vadd.f32 %v202, %v448
    %450 = vdwg.mxu0
    %451 = vmatpush.bf16.msra.mxu0 %v359
    %452 = vmatpush.bf16.msra.mxu0 %v355
    %453 = vmatpush.bf16.msra.mxu0 %v351
    %454 = vmatpush.bf16.msra.mxu0 %v347
    %455 = vmatpush.bf16.msra.mxu0 %v343
    %456 = vmatpush.bf16.msra.mxu0 %v339
    %457 = vmatpush.bf16.msra.mxu0 %v335
    %458 = vmatpush.bf16.msra.mxu0 %v331
    %459 = vmatmul.bf16.gmra.mxu0 %v225
    %v460 = vpop.f32.mrf.mxu0
    %v461 = vadd.f32 %v203, %v460
    %v462 = vpop.f32.mrf.mxu0
    %v463 = vadd.f32 %v203, %v462
    %464 = vmatmul.bf16.gmra.mxu0 %v226
    %v465 = vpop.f32.mrf.mxu0
    %v466 = vadd.f32 %v203, %v465
    %v467 = vpop.f32.mrf.mxu0
    %v468 = vadd.f32 %v203, %v467
    %469 = vmatmul.bf16.gmra.mxu0 %v227
    %v470 = vpop.f32.mrf.mxu0
    %v471 = vadd.f32 %v203, %v470
    %v472 = vpop.f32.mrf.mxu0
    %v473 = vadd.f32 %v203, %v472
    %474 = vmatmul.bf16.gmra.mxu0 %v228
    %v475 = vpop.f32.mrf.mxu0
    %v476 = vadd.f32 %v203, %v475
    %v477 = vpop.f32.mrf.mxu0
    %v478 = vadd.f32 %v203, %v477
    %479 = vdwg.mxu0
    %480 = vmatpush.bf16.msra.mxu0 %v360
    %481 = vmatpush.bf16.msra.mxu0 %v356
    %482 = vmatpush.bf16.msra.mxu0 %v352
    %483 = vmatpush.bf16.msra.mxu0 %v348
    %484 = vmatpush.bf16.msra.mxu0 %v344
    %485 = vmatpush.bf16.msra.mxu0 %v340
    %486 = vmatpush.bf16.msra.mxu0 %v336
    %487 = vmatpush.bf16.msra.mxu0 %v332
    %488 = vmatmul.bf16.gmra.mxu0 %v225
    %v489 = vpop.f32.mrf.mxu0
    %v490 = vadd.f32 %v204, %v489
    %v491 = vpop.f32.mrf.mxu0
    %v492 = vadd.f32 %v204, %v491
    %493 = vmatmul.bf16.gmra.mxu0 %v226
    %v494 = vpop.f32.mrf.mxu0
    %v495 = vadd.f32 %v204, %v494
    %v496 = vpop.f32.mrf.mxu0
    %v497 = vadd.f32 %v204, %v496
    %498 = vmatmul.bf16.gmra.mxu0 %v227
    %v499 = vpop.f32.mrf.mxu0
    %v500 = vadd.f32 %v204, %v499
    %v501 = vpop.f32.mrf.mxu0
    %v502 = vadd.f32 %v204, %v501
    %503 = vmatmul.bf16.gmra.mxu0 %v228
    %v504 = vpop.f32.mrf.mxu0
    %v505 = vadd.f32 %v204, %v504
    %v506 = vpop.f32.mrf.mxu0
    %v507 = vadd.f32 %v204, %v506
    %508 = vdwg.mxu0
    %509 = vst [vmem:[#allocation3] sm:$0xff] %v403
    %510 = vst [vmem:[#allocation3 + $0x8] sm:$0xff] %v432
    %511 = vst [vmem:[#allocation3 + $0x10] sm:$0xff] %v461
    %512 = vst [vmem:[#allocation3 + $0x18] sm:$0xff] %v490
    %513 = vst [vmem:[#allocation3 + $0x20] sm:$0xff] %v405
    %514 = vst [vmem:[#allocation3 + $0x28] sm:$0xff] %v434
    %515 = vst [vmem:[#allocation3 + $0x30] sm:$0xff] %v463
    %516 = vst [vmem:[#allocation3 + $0x38] sm:$0xff] %v492
    %517 = vst [vmem:[#allocation3 + $0x40] sm:$0xff] %v408
    %518 = vst [vmem:[#allocation3 + $0x48] sm:$0xff] %v437
    %519 = vst [vmem:[#allocation3 + $0x50] sm:$0xff] %v466
    %520 = vst [vmem:[#allocation3 + $0x58] sm:$0xff] %v495
    %521 = vst [vmem:[#allocation3 + $0x60] sm:$0xff] %v410
    %522 = vst [vmem:[#allocation3 + $0x68] sm:$0xff] %v439
    %523 = vst [vmem:[#allocation3 + $0x70] sm:$0xff] %v468
    %524 = vst [vmem:[#allocation3 + $0x78] sm:$0xff] %v497
    %525 = vst [vmem:[#allocation3 + $0x80] sm:$0xff] %v413
    %526 = vst [vmem:[#allocation3 + $0x88] sm:$0xff] %v442
    %527 = vst [vmem:[#allocation3 + $0x90] sm:$0xff] %v471
    %528 = vst [vmem:[#allocation3 + $0x98] sm:$0xff] %v500
    %529 = vst [vmem:[#allocation3 + $0xa0] sm:$0xff] %v415
    %530 = vst [vmem:[#allocation3 + $0xa8] sm:$0xff] %v444
    %531 = vst [vmem:[#allocation3 + $0xb0] sm:$0xff] %v473
    %532 = vst [vmem:[#allocation3 + $0xb8] sm:$0xff] %v502
    %533 = vst [vmem:[#allocation3 + $0xc0] sm:$0xff] %v418
    %534 = vst [vmem:[#allocation3 + $0xc8] sm:$0xff] %v447
    %535 = vst [vmem:[#allocation3 + $0xd0] sm:$0xff] %v476
    %536 = vst [vmem:[#allocation3 + $0xd8] sm:$0xff] %v505
    %537 = vst [vmem:[#allocation3 + $0xe0] sm:$0xff] %v420
    %538 = vst [vmem:[#allocation3 + $0xe8] sm:$0xff] %v449
    %539 = vst [vmem:[#allocation3 + $0xf0] sm:$0xff] %v478
    %540 = vst [vmem:[#allocation3 + $0xf8] sm:$0xff] %v507
    %v541 = vld [vmem:[#allocation3] sm:$0xff]
    %v542 = vld [vmem:[#allocation3 + $0x8] sm:$0xff]
    %v543 = vld [vmem:[#allocation3 + $0x10] sm:$0xff]
    %v544 = vld [vmem:[#allocation3 + $0x18] sm:$0xff]
    %v577 = vunpack.c.l.b16 %v159
    %v578 = vunpack.c.h.b16 %v159
    %v579 = vunpack.c.l.b16 %v160
    %v580 = vunpack.c.h.b16 %v160
    %v581 = vunpack.c.l.b16 %v161
    %v582 = vunpack.c.h.b16 %v161
    %v583 = vunpack.c.l.b16 %v162
    %v584 = vunpack.c.h.b16 %v162
    %v585 = vunpack.c.l.b16 %v163
    %v586 = vunpack.c.h.b16 %v163
    %v587 = vunpack.c.l.b16 %v164
    %v588 = vunpack.c.h.b16 %v164
    %v589 = vunpack.c.l.b16 %v165
    %v590 = vunpack.c.h.b16 %v165
    %v591 = vunpack.c.l.b16 %v166
    %v592 = vunpack.c.h.b16 %v166
    %v593 = vunpack.c.l.b16 %v167
    %v594 = vunpack.c.h.b16 %v167
    %v595 = vunpack.c.l.b16 %v168
    %v596 = vunpack.c.h.b16 %v168
    %v597 = vunpack.c.l.b16 %v169
    %v598 = vunpack.c.h.b16 %v169
    %v599 = vunpack.c.l.b16 %v170
    %v600 = vunpack.c.h.b16 %v170
    %v601 = vunpack.c.l.b16 %v171
    %v602 = vunpack.c.h.b16 %v171
    %v603 = vunpack.c.l.b16 %v172
    %v604 = vunpack.c.h.b16 %v172
    %v605 = vunpack.c.l.b16 %v173
    %v606 = vunpack.c.h.b16 %v173
    %v607 = vunpack.c.l.b16 %v174
    %v608 = vunpack.c.h.b16 %v174
    %v609 = vunpack.c.l.b16 %v175
    %v610 = vunpack.c.h.b16 %v175
    %v611 = vunpack.c.l.b16 %v176
    %v612 = vunpack.c.h.b16 %v176
    %v613 = vunpack.c.l.b16 %v177
    %v614 = vunpack.c.h.b16 %v177
    %v615 = vunpack.c.l.b16 %v178
    %v616 = vunpack.c.h.b16 %v178
    %v617 = vunpack.c.l.b16 %v179
    %v618 = vunpack.c.h.b16 %v179
    %v619 = vunpack.c.l.b16 %v180
    %v620 = vunpack.c.h.b16 %v180
    %v621 = vunpack.c.l.b16 %v181
    %v622 = vunpack.c.h.b16 %v181
    %v623 = vunpack.c.l.b16 %v182
    %v624 = vunpack.c.h.b16 %v182
    %v625 = vunpack.c.l.b16 %v183
    %v626 = vunpack.c.h.b16 %v183
    %v627 = vunpack.c.l.b16 %v184
    %v628 = vunpack.c.h.b16 %v184
    %v629 = vunpack.c.l.b16 %v185
    %v630 = vunpack.c.h.b16 %v185
    %v631 = vunpack.c.l.b16 %v186
    %v632 = vunpack.c.h.b16 %v186
    %v633 = vunpack.c.l.b16 %v187
    %v634 = vunpack.c.h.b16 %v187
    %v635 = vunpack.c.l.b16 %v188
    %v636 = vunpack.c.h.b16 %v188
    %v637 = vunpack.c.l.b16 %v189
    %v638 = vunpack.c.h.b16 %v189
    %v639 = vunpack.c.l.b16 %v190
    %v640 = vunpack.c.h.b16 %v190
    %v641 = vpack.c.b16 %v581, %v577
    %v642 = vpack.c.b16 %v582, %v578
    %v643 = vpack.c.b16 %v583, %v579
    %v644 = vpack.c.b16 %v584, %v580
    %v645 = vpack.c.b16 %v589, %v585
    %v646 = vpack.c.b16 %v590, %v586
    %v647 = vpack.c.b16 %v591, %v587
    %v648 = vpack.c.b16 %v592, %v588
    %v649 = vpack.c.b16 %v597, %v593
    %v650 = vpack.c.b16 %v598, %v594
    %v651 = vpack.c.b16 %v599, %v595
    %v652 = vpack.c.b16 %v600, %v596
    %v653 = vpack.c.b16 %v605, %v601
    %v654 = vpack.c.b16 %v606, %v602
    %v655 = vpack.c.b16 %v607, %v603
    %v656 = vpack.c.b16 %v608, %v604
    %v657 = vpack.c.b16 %v613, %v609
    %v658 = vpack.c.b16 %v614, %v610
    %v659 = vpack.c.b16 %v615, %v611
    %v660 = vpack.c.b16 %v616, %v612
    %v661 = vpack.c.b16 %v621, %v617
    %v662 = vpack.c.b16 %v622, %v618
    %v663 = vpack.c.b16 %v623, %v619
    %v664 = vpack.c.b16 %v624, %v620
    %v665 = vpack.c.b16 %v629, %v625
    %v666 = vpack.c.b16 %v630, %v626
    %v667 = vpack.c.b16 %v631, %v627
    %v668 = vpack.c.b16 %v632, %v628
    %v669 = vpack.c.b16 %v637, %v633
    %v670 = vpack.c.b16 %v638, %v634
    %v671 = vpack.c.b16 %v639, %v635
    %v672 = vpack.c.b16 %v640, %v636
    %705 = vmatpush.bf16.msra.mxu0 %v669
    %706 = vmatpush.bf16.msra.mxu0 %v665
    %707 = vmatpush.bf16.msra.mxu0 %v661
    %708 = vmatpush.bf16.msra.mxu0 %v657
    %709 = vmatpush.bf16.msra.mxu0 %v653
    %710 = vmatpush.bf16.msra.mxu0 %v649
    %711 = vmatpush.bf16.msra.mxu0 %v645
    %712 = vmatpush.bf16.msra.mxu0 %v641
    %713 = vmatmul.bf16.gmra.mxu0 0
    %v714 = vpop.f32.mrf.mxu0
    %v715 = vadd.f32 0.0, %v714
    %v716 = vpop.f32.mrf.mxu0
    %717 = vdwg.mxu0
    %718 = vmatpush.bf16.msra.mxu0 %v670
    %719 = vmatpush.bf16.msra.mxu0 %v666
    %720 = vmatpush.bf16.msra.mxu0 %v662
    %721 = vmatpush.bf16.msra.mxu0 %v658
    %722 = vmatpush.bf16.msra.mxu0 %v654
    %723 = vmatpush.bf16.msra.mxu0 %v650
    %724 = vmatpush.bf16.msra.mxu0 %v646
    %725 = vmatpush.bf16.msra.mxu0 %v642
    %726 = vmatmul.bf16.gmra.mxu0 0
    %v727 = vpop.f32.mrf.mxu0
    %v728 = vadd.f32 0.0, %v727
    %v729 = vpop.f32.mrf.mxu0
    %730 = vdwg.mxu0
    %731 = vmatpush.bf16.msra.mxu0 %v671
    %732 = vmatpush.bf16.msra.mxu0 %v667
    %733 = vmatpush.bf16.msra.mxu0 %v663
    %734 = vmatpush.bf16.msra.mxu0 %v659
    %735 = vmatpush.bf16.msra.mxu0 %v655
    %736 = vmatpush.bf16.msra.mxu0 %v651
    %737 = vmatpush.bf16.msra.mxu0 %v647
    %738 = vmatpush.bf16.msra.mxu0 %v643
    %739 = vmatmul.bf16.gmra.mxu0 0
    %v740 = vpop.f32.mrf.mxu0
    %v741 = vadd.f32 0.0, %v740
    %v742 = vpop.f32.mrf.mxu0
    %743 = vdwg.mxu0
    %744 = vmatpush.bf16.msra.mxu0 %v672
    %745 = vmatpush.bf16.msra.mxu0 %v668
    %746 = vmatpush.bf16.msra.mxu0 %v664
    %747 = vmatpush.bf16.msra.mxu0 %v660
    %748 = vmatpush.bf16.msra.mxu0 %v656
    %749 = vmatpush.bf16.msra.mxu0 %v652
    %750 = vmatpush.bf16.msra.mxu0 %v648
    %751 = vmatpush.bf16.msra.mxu0 %v644
    %752 = vmatmul.bf16.gmra.mxu0 0
    %v753 = vpop.f32.mrf.mxu0
    %v754 = vadd.f32 0.0, %v753
    %v755 = vpop.f32.mrf.mxu0
    %756 = vdwg.mxu0
    %v757 = vadd.f32 %v541, %v715
    %v758 = vadd.f32 %v542, %v728
    %v759 = vadd.f32 %v543, %v741
    %v760 = vadd.f32 %v544, %v754
    %v761 = vsub.f32 0.0, %v757
    %v762 = vmul.f32 %v761, 1.442695
    %v763 = vpow.pop %v762
    %v764 = vadd.f32 %v763, 1.0
    %v765 = vrcp.pop %v764
    %v766 = vsub.f32 0.0, %v758
    %v767 = vmul.f32 %v766, 1.442695
    %v768 = vpow.pop %v767
    %v769 = vadd.f32 %v768, 1.0
    %v770 = vrcp.pop %v769
    %v771 = vtanh.pop %v759
    %v772 = vsub.f32 0.0, %v760
    %v773 = vmul.f32 %v772, 1.442695
    %v774 = vpow.pop %v773
    %v775 = vadd.f32 %v774, 1.0
    %v776 = vrcp.pop %v775
    %v777 = vmul.f32 %v770, 0.0
    %v778 = vmul.f32 %v765, %v771
    %v779 = vadd.f32 %v777, %v778
    %v780 = vtanh.pop %v779
    %v781 = vmul.f32 %v776, %v780
    %782 = vst [vmem:[#allocation2] sm:$0xff] %v781
    %s783 = scalar_lea.vmem [#allocation3], 32
    %v784 = vld [vmem:[%s783] sm:$0xff]
    %v785 = vld [vmem:[%s783 + $0x8] sm:$0xff]
    %v786 = vld [vmem:[%s783 + $0x10] sm:$0xff]
    %v787 = vld [vmem:[%s783 + $0x18] sm:$0xff]
    %v788 = vpack.c.bf16 %v781, %v781
    %789 = vmatpush.bf16.msra.mxu0 %v669
    %790 = vmatpush.bf16.msra.mxu0 %v665
    %791 = vmatpush.bf16.msra.mxu0 %v661
    %792 = vmatpush.bf16.msra.mxu0 %v657
    %793 = vmatpush.bf16.msra.mxu0 %v653
    %794 = vmatpush.bf16.msra.mxu0 %v649
    %795 = vmatpush.bf16.msra.mxu0 %v645
    %796 = vmatpush.bf16.msra.mxu0 %v641
    %797 = vmatmul.bf16.gmra.mxu0 %v788
    %v798 = vpop.f32.mrf.mxu0
    %v799 = vadd.f32 0.0, %v798
    %v800 = vpop.f32.mrf.mxu0
    %801 = vdwg.mxu0
    %802 = vmatpush.bf16.msra.mxu0 %v670
    %803 = vmatpush.bf16.msra.mxu0 %v666
    %804 = vmatpush.bf16.msra.mxu0 %v662
    %805 = vmatpush.bf16.msra.mxu0 %v658
    %806 = vmatpush.bf16.msra.mxu0 %v654
    %807 = vmatpush.bf16.msra.mxu0 %v650
    %808 = vmatpush.bf16.msra.mxu0 %v646
    %809 = vmatpush.bf16.msra.mxu0 %v642
    %810 = vmatmul.bf16.gmra.mxu0 %v788
    %v811 = vpop.f32.mrf.mxu0
    %v812 = vadd.f32 0.0, %v811
    %v813 = vpop.f32.mrf.mxu0
    %814 = vdwg.mxu0
    %815 = vmatpush.bf16.msra.mxu0 %v671
    %816 = vmatpush.bf16.msra.mxu0 %v667
    %817 = vmatpush.bf16.msra.mxu0 %v663
    %818 = vmatpush.bf16.msra.mxu0 %v659
    %819 = vmatpush.bf16.msra.mxu0 %v655
    %820 = vmatpush.bf16.msra.mxu0 %v651
    %821 = vmatpush.bf16.msra.mxu0 %v647
    %822 = vmatpush.bf16.msra.mxu0 %v643
    %823 = vmatmul.bf16.gmra.mxu0 %v788
    %v824 = vpop.f32.mrf.mxu0
    %v825 = vadd.f32 0.0, %v824
    %v826 = vpop.f32.mrf.mxu0
    %827 = vdwg.mxu0
    %828 = vmatpush.bf16.msra.mxu0 %v672
    %829 = vmatpush.bf16.msra.mxu0 %v668
    %830 = vmatpush.bf16.msra.mxu0 %v664
    %831 = vmatpush.bf16.msra.mxu0 %v660
    %832 = vmatpush.bf16.msra.mxu0 %v656
    %833 = vmatpush.bf16.msra.mxu0 %v652
    %834 = vmatpush.bf16.msra.mxu0 %v648
    %835 = vmatpush.bf16.msra.mxu0 %v644
    %836 = vmatmul.bf16.gmra.mxu0 %v788
    %v837 = vpop.f32.mrf.mxu0
    %v838 = vadd.f32 0.0, %v837
    %v839 = vpop.f32.mrf.mxu0
    %840 = vdwg.mxu0
    %v841 = vadd.f32 %v784, %v799
    %v842 = vadd.f32 %v785, %v812
    %v843 = vadd.f32 %v786, %v825
    %v844 = vadd.f32 %v787, %v838
    %v845 = vsub.f32 0.0, %v841
    %v846 = vmul.f32 %v845, 1.442695
    %v847 = vpow.pop %v846
    %v848 = vadd.f32 %v847, 1.0
    %v849 = vrcp.pop %v848
    %v850 = vsub.f32 0.0, %v842
    %v851 = vmul.f32 %v850, 1.442695
    %v852 = vpow.pop %v851
    %v853 = vadd.f32 %v852, 1.0
    %v854 = vrcp.pop %v853
    %v855 = vtanh.pop %v843
    %v856 = vsub.f32 0.0, %v844
    %v857 = vmul.f32 %v856, 1.442695
    %v858 = vpow.pop %v857
    %v859 = vadd.f32 %v858, 1.0
    %v860 = vrcp.pop %v859
    %v861 = vmul.f32 %v854, %v779
    %v862 = vmul.f32 %v849, %v855
    %v863 = vadd.f32 %v861, %v862
    %v864 = vtanh.pop %v863
    %v865 = vmul.f32 %v860, %v864
    %s866 = scalar_lea.vmem [#allocation2], 8
    %867 = vst [vmem:[%s866] sm:$0xff] %v865
    %s868 = scalar_lea.vmem [#allocation3], 64
    %v869 = vld [vmem:[%s868] sm:$0xff]
    %v870 = vld [vmem:[%s868 + $0x8] sm:$0xff]
    %v871 = vld [vmem:[%s868 + $0x10] sm:$0xff]
    %v872 = vld [vmem:[%s868 + $0x18] sm:$0xff]
    %v873 = vpack.c.bf16 %v865, %v865
    %874 = vmatpush.bf16.msra.mxu0 %v669
    %875 = vmatpush.bf16.msra.mxu0 %v665
    %876 = vmatpush.bf16.msra.mxu0 %v661
    %877 = vmatpush.bf16.msra.mxu0 %v657
    %878 = vmatpush.bf16.msra.mxu0 %v653
    %879 = vmatpush.bf16.msra.mxu0 %v649
    %880 = vmatpush.bf16.msra.mxu0 %v645
    %881 = vmatpush.bf16.msra.mxu0 %v641
    %882 = vmatmul.bf16.gmra.mxu0 %v873
    %v883 = vpop.f32.mrf.mxu0
    %v884 = vadd.f32 0.0, %v883
    %v885 = vpop.f32.mrf.mxu0
    %886 = vdwg.mxu0
    %887 = vmatpush.bf16.msra.mxu0 %v670
    %888 = vmatpush.bf16.msra.mxu0 %v666
    %889 = vmatpush.bf16.msra.mxu0 %v662
    %890 = vmatpush.bf16.msra.mxu0 %v658
    %891 = vmatpush.bf16.msra.mxu0 %v654
    %892 = vmatpush.bf16.msra.mxu0 %v650
    %893 = vmatpush.bf16.msra.mxu0 %v646
    %894 = vmatpush.bf16.msra.mxu0 %v642
    %895 = vmatmul.bf16.gmra.mxu0 %v873
    %v896 = vpop.f32.mrf.mxu0
    %v897 = vadd.f32 0.0, %v896
    %v898 = vpop.f32.mrf.mxu0
    %899 = vdwg.mxu0
    %900 = vmatpush.bf16.msra.mxu0 %v671
    %901 = vmatpush.bf16.msra.mxu0 %v667
    %902 = vmatpush.bf16.msra.mxu0 %v663
    %903 = vmatpush.bf16.msra.mxu0 %v659
    %904 = vmatpush.bf16.msra.mxu0 %v655
    %905 = vmatpush.bf16.msra.mxu0 %v651
    %906 = vmatpush.bf16.msra.mxu0 %v647
    %907 = vmatpush.bf16.msra.mxu0 %v643
    %908 = vmatmul.bf16.gmra.mxu0 %v873
    %v909 = vpop.f32.mrf.mxu0
    %v910 = vadd.f32 0.0, %v909
    %v911 = vpop.f32.mrf.mxu0
    %912 = vdwg.mxu0
    %913 = vmatpush.bf16.msra.mxu0 %v672
    %914 = vmatpush.bf16.msra.mxu0 %v668
    %915 = vmatpush.bf16.msra.mxu0 %v664
    %916 = vmatpush.bf16.msra.mxu0 %v660
    %917 = vmatpush.bf16.msra.mxu0 %v656
    %918 = vmatpush.bf16.msra.mxu0 %v652
    %919 = vmatpush.bf16.msra.mxu0 %v648
    %920 = vmatpush.bf16.msra.mxu0 %v644
    %921 = vmatmul.bf16.gmra.mxu0 %v873
    %v922 = vpop.f32.mrf.mxu0
    %v923 = vadd.f32 0.0, %v922
    %v924 = vpop.f32.mrf.mxu0
    %925 = vdwg.mxu0
    %v926 = vadd.f32 %v869, %v884
    %v927 = vadd.f32 %v870, %v897
    %v928 = vadd.f32 %v871, %v910
    %v929 = vadd.f32 %v872, %v923
    %v930 = vsub.f32 0.0, %v926
    %v931 = vmul.f32 %v930, 1.442695
    %v932 = vpow.pop %v931
    %v933 = vadd.f32 %v932, 1.0
    %v934 = vrcp.pop %v933
    %v935 = vsub.f32 0.0, %v927
    %v936 = vmul.f32 %v935, 1.442695
    %v937 = vpow.pop %v936
    %v938 = vadd.f32 %v937, 1.0
    %v939 = vrcp.pop %v938
    %v940 = vtanh.pop %v928
    %v941 = vsub.f32 0.0, %v929
    %v942 = vmul.f32 %v941, 1.442695
    %v943 = vpow.pop %v942
    %v944 = vadd.f32 %v943, 1.0
    %v945 = vrcp.pop %v944
    %v946 = vmul.f32 %v939, %v863
    %v947 = vmul.f32 %v934, %v940
    %v948 = vadd.f32 %v946, %v947
    %v949 = vtanh.pop %v948
    %v950 = vmul.f32 %v945, %v949
    %s951 = scalar_lea.vmem [#allocation2], 16
    %952 = vst [vmem:[%s951] sm:$0xff] %v950
    %s953 = scalar_lea.vmem [#allocation3], 96
    %v954 = vld [vmem:[%s953] sm:$0xff]
    %v955 = vld [vmem:[%s953 + $0x8] sm:$0xff]
    %v956 = vld [vmem:[%s953 + $0x10] sm:$0xff]
    %v957 = vld [vmem:[%s953 + $0x18] sm:$0xff]
    %v958 = vpack.c.bf16 %v950, %v950
    %959 = vmatpush.bf16.msra.mxu0 %v669
    %960 = vmatpush.bf16.msra.mxu0 %v665
    %961 = vmatpush.bf16.msra.mxu0 %v661
    %962 = vmatpush.bf16.msra.mxu0 %v657
    %963 = vmatpush.bf16.msra.mxu0 %v653
    %964 = vmatpush.bf16.msra.mxu0 %v649
    %965 = vmatpush.bf16.msra.mxu0 %v645
    %966 = vmatpush.bf16.msra.mxu0 %v641
    %967 = vmatmul.bf16.gmra.mxu0 %v958
    %v968 = vpop.f32.mrf.mxu0
    %v969 = vadd.f32 0.0, %v968
    %v970 = vpop.f32.mrf.mxu0
    %971 = vdwg.mxu0
    %972 = vmatpush.bf16.msra.mxu0 %v670
    %973 = vmatpush.bf16.msra.mxu0 %v666
    %974 = vmatpush.bf16.msra.mxu0 %v662
    %975 = vmatpush.bf16.msra.mxu0 %v658
    %976 = vmatpush.bf16.msra.mxu0 %v654
    %977 = vmatpush.bf16.msra.mxu0 %v650
    %978 = vmatpush.bf16.msra.mxu0 %v646
    %979 = vmatpush.bf16.msra.mxu0 %v642
    %980 = vmatmul.bf16.gmra.mxu0 %v958
    %v981 = vpop.f32.mrf.mxu0
    %v982 = vadd.f32 0.0, %v981
    %v983 = vpop.f32.mrf.mxu0
    %984 = vdwg.mxu0
    %985 = vmatpush.bf16.msra.mxu0 %v671
    %986 = vmatpush.bf16.msra.mxu0 %v667
    %987 = vmatpush.bf16.msra.mxu0 %v663
    %988 = vmatpush.bf16.msra.mxu0 %v659
    %989 = vmatpush.bf16.msra.mxu0 %v655
    %990 = vmatpush.bf16.msra.mxu0 %v651
    %991 = vmatpush.bf16.msra.mxu0 %v647
    %992 = vmatpush.bf16.msra.mxu0 %v643
    %993 = vmatmul.bf16.gmra.mxu0 %v958
    %v994 = vpop.f32.mrf.mxu0
    %v995 = vadd.f32 0.0, %v994
    %v996 = vpop.f32.mrf.mxu0
    %997 = vdwg.mxu0
    %998 = vmatpush.bf16.msra.mxu0 %v672
    %999 = vmatpush.bf16.msra.mxu0 %v668
    %1000 = vmatpush.bf16.msra.mxu0 %v664
    %1001 = vmatpush.bf16.msra.mxu0 %v660
    %1002 = vmatpush.bf16.msra.mxu0 %v656
    %1003 = vmatpush.bf16.msra.mxu0 %v652
    %1004 = vmatpush.bf16.msra.mxu0 %v648
    %1005 = vmatpush.bf16.msra.mxu0 %v644
    %1006 = vmatmul.bf16.gmra.mxu0 %v958
    %v1007 = vpop.f32.mrf.mxu0
    %v1008 = vadd.f32 0.0, %v1007
    %v1009 = vpop.f32.mrf.mxu0
    %1010 = vdwg.mxu0
    %v1011 = vadd.f32 %v954, %v969
    %v1012 = vadd.f32 %v955, %v982
    %v1013 = vadd.f32 %v956, %v995
    %v1014 = vadd.f32 %v957, %v1008
    %v1015 = vsub.f32 0.0, %v1011
    %v1016 = vmul.f32 %v1015, 1.442695
    %v1017 = vpow.pop %v1016
    %v1018 = vadd.f32 %v1017, 1.0
    %v1019 = vrcp.pop %v1018
    %v1020 = vsub.f32 0.0, %v1012
    %v1021 = vmul.f32 %v1020, 1.442695
    %v1022 = vpow.pop %v1021
    %v1023 = vadd.f32 %v1022, 1.0
    %v1024 = vrcp.pop %v1023
    %v1025 = vtanh.pop %v1013
    %v1026 = vsub.f32 0.0, %v1014
    %v1027 = vmul.f32 %v1026, 1.442695
    %v1028 = vpow.pop %v1027
    %v1029 = vadd.f32 %v1028, 1.0
    %v1030 = vrcp.pop %v1029
    %v1031 = vmul.f32 %v1024, %v948
    %v1032 = vmul.f32 %v1019, %v1025
    %v1033 = vadd.f32 %v1031, %v1032
    %v1034 = vtanh.pop %v1033
    %v1035 = vmul.f32 %v1030, %v1034
    %s1036 = scalar_lea.vmem [#allocation2], 24
    %1037 = vst [vmem:[%s1036] sm:$0xff] %v1035
    %s1038 = scalar_lea.vmem [#allocation3], 128
    %v1039 = vld [vmem:[%s1038] sm:$0xff]
    %v1040 = vld [vmem:[%s1038 + $0x8] sm:$0xff]
    %v1041 = vld [vmem:[%s1038 + $0x10] sm:$0xff]
    %v1042 = vld [vmem:[%s1038 + $0x18] sm:$0xff]
    %v1043 = vpack.c.bf16 %v1035, %v1035
    %1044 = vmatpush.bf16.msra.mxu0 %v669
    %1045 = vmatpush.bf16.msra.mxu0 %v665
    %1046 = vmatpush.bf16.msra.mxu0 %v661
    %1047 = vmatpush.bf16.msra.mxu0 %v657
    %1048 = vmatpush.bf16.msra.mxu0 %v653
    %1049 = vmatpush.bf16.msra.mxu0 %v649
    %1050 = vmatpush.bf16.msra.mxu0 %v645
    %1051 = vmatpush.bf16.msra.mxu0 %v641
    %1052 = vmatmul.bf16.gmra.mxu0 %v1043
    %v1053 = vpop.f32.mrf.mxu0
    %v1054 = vadd.f32 0.0, %v1053
    %v1055 = vpop.f32.mrf.mxu0
    %1056 = vdwg.mxu0
    %1057 = vmatpush.bf16.msra.mxu0 %v670
    %1058 = vmatpush.bf16.msra.mxu0 %v666
    %1059 = vmatpush.bf16.msra.mxu0 %v662
    %1060 = vmatpush.bf16.msra.mxu0 %v658
    %1061 = vmatpush.bf16.msra.mxu0 %v654
    %1062 = vmatpush.bf16.msra.mxu0 %v650
    %1063 = vmatpush.bf16.msra.mxu0 %v646
    %1064 = vmatpush.bf16.msra.mxu0 %v642
    %1065 = vmatmul.bf16.gmra.mxu0 %v1043
    %v1066 = vpop.f32.mrf.mxu0
    %v1067 = vadd.f32 0.0, %v1066
    %v1068 = vpop.f32.mrf.mxu0
    %1069 = vdwg.mxu0
    %1070 = vmatpush.bf16.msra.mxu0 %v671
    %1071 = vmatpush.bf16.msra.mxu0 %v667
    %1072 = vmatpush.bf16.msra.mxu0 %v663
    %1073 = vmatpush.bf16.msra.mxu0 %v659
    %1074 = vmatpush.bf16.msra.mxu0 %v655
    %1075 = vmatpush.bf16.msra.mxu0 %v651
    %1076 = vmatpush.bf16.msra.mxu0 %v647
    %1077 = vmatpush.bf16.msra.mxu0 %v643
    %1078 = vmatmul.bf16.gmra.mxu0 %v1043
    %v1079 = vpop.f32.mrf.mxu0
    %v1080 = vadd.f32 0.0, %v1079
    %v1081 = vpop.f32.mrf.mxu0
    %1082 = vdwg.mxu0
    %1083 = vmatpush.bf16.msra.mxu0 %v672
    %1084 = vmatpush.bf16.msra.mxu0 %v668
    %1085 = vmatpush.bf16.msra.mxu0 %v664
    %1086 = vmatpush.bf16.msra.mxu0 %v660
    %1087 = vmatpush.bf16.msra.mxu0 %v656
    %1088 = vmatpush.bf16.msra.mxu0 %v652
    %1089 = vmatpush.bf16.msra.mxu0 %v648
    %1090 = vmatpush.bf16.msra.mxu0 %v644
    %1091 = vmatmul.bf16.gmra.mxu0 %v1043
    %v1092 = vpop.f32.mrf.mxu0
    %v1093 = vadd.f32 0.0, %v1092
    %v1094 = vpop.f32.mrf.mxu0
    %1095 = vdwg.mxu0
    %v1096 = vadd.f32 %v1039, %v1054
    %v1097 = vadd.f32 %v1040, %v1067
    %v1098 = vadd.f32 %v1041, %v1080
    %v1099 = vadd.f32 %v1042, %v1093
    %v1100 = vsub.f32 0.0, %v1096
    %v1101 = vmul.f32 %v1100, 1.442695
    %v1102 = vpow.pop %v1101
    %v1103 = vadd.f32 %v1102, 1.0
    %v1104 = vrcp.pop %v1103
    %v1105 = vsub.f32 0.0, %v1097
    %v1106 = vmul.f32 %v1105, 1.442695
    %v1107 = vpow.pop %v1106
    %v1108 = vadd.f32 %v1107, 1.0
    %v1109 = vrcp.pop %v1108
    %v1110 = vtanh.pop %v1098
    %v1111 = vsub.f32 0.0, %v1099
    %v1112 = vmul.f32 %v1111, 1.442695
    %v1113 = vpow.pop %v1112
    %v1114 = vadd.f32 %v1113, 1.0
    %v1115 = vrcp.pop %v1114
    %v1116 = vmul.f32 %v1109, %v1033
    %v1117 = vmul.f32 %v1104, %v1110
    %v1118 = vadd.f32 %v1116, %v1117
    %v1119 = vtanh.pop %v1118
    %v1120 = vmul.f32 %v1115, %v1119
    %s1121 = scalar_lea.vmem [#allocation2], 32
    %1122 = vst [vmem:[%s1121] sm:$0xff] %v1120
    %s1123 = scalar_lea.vmem [#allocation3], 160
    %v1124 = vld [vmem:[%s1123] sm:$0xff]
    %v1125 = vld [vmem:[%s1123 + $0x8] sm:$0xff]
    %v1126 = vld [vmem:[%s1123 + $0x10] sm:$0xff]
    %v1127 = vld [vmem:[%s1123 + $0x18] sm:$0xff]
    %v1128 = vpack.c.bf16 %v1120, %v1120
    %1129 = vmatpush.bf16.msra.mxu0 %v669
    %1130 = vmatpush.bf16.msra.mxu0 %v665
    %1131 = vmatpush.bf16.msra.mxu0 %v661
    %1132 = vmatpush.bf16.msra.mxu0 %v657
    %1133 = vmatpush.bf16.msra.mxu0 %v653
    %1134 = vmatpush.bf16.msra.mxu0 %v649
    %1135 = vmatpush.bf16.msra.mxu0 %v645
    %1136 = vmatpush.bf16.msra.mxu0 %v641
    %1137 = vmatmul.bf16.gmra.mxu0 %v1128
    %v1138 = vpop.f32.mrf.mxu0
    %v1139 = vadd.f32 0.0, %v1138
    %v1140 = vpop.f32.mrf.mxu0
    %1141 = vdwg.mxu0
    %1142 = vmatpush.bf16.msra.mxu0 %v670
    %1143 = vmatpush.bf16.msra.mxu0 %v666
    %1144 = vmatpush.bf16.msra.mxu0 %v662
    %1145 = vmatpush.bf16.msra.mxu0 %v658
    %1146 = vmatpush.bf16.msra.mxu0 %v654
    %1147 = vmatpush.bf16.msra.mxu0 %v650
    %1148 = vmatpush.bf16.msra.mxu0 %v646
    %1149 = vmatpush.bf16.msra.mxu0 %v642
    %1150 = vmatmul.bf16.gmra.mxu0 %v1128
    %v1151 = vpop.f32.mrf.mxu0
    %v1152 = vadd.f32 0.0, %v1151
    %v1153 = vpop.f32.mrf.mxu0
    %1154 = vdwg.mxu0
    %1155 = vmatpush.bf16.msra.mxu0 %v671
    %1156 = vmatpush.bf16.msra.mxu0 %v667
    %1157 = vmatpush.bf16.msra.mxu0 %v663
    %1158 = vmatpush.bf16.msra.mxu0 %v659
    %1159 = vmatpush.bf16.msra.mxu0 %v655
    %1160 = vmatpush.bf16.msra.mxu0 %v651
    %1161 = vmatpush.bf16.msra.mxu0 %v647
    %1162 = vmatpush.bf16.msra.mxu0 %v643
    %1163 = vmatmul.bf16.gmra.mxu0 %v1128
    %v1164 = vpop.f32.mrf.mxu0
    %v1165 = vadd.f32 0.0, %v1164
    %v1166 = vpop.f32.mrf.mxu0
    %1167 = vdwg.mxu0
    %1168 = vmatpush.bf16.msra.mxu0 %v672
    %1169 = vmatpush.bf16.msra.mxu0 %v668
    %1170 = vmatpush.bf16.msra.mxu0 %v664
    %1171 = vmatpush.bf16.msra.mxu0 %v660
    %1172 = vmatpush.bf16.msra.mxu0 %v656
    %1173 = vmatpush.bf16.msra.mxu0 %v652
    %1174 = vmatpush.bf16.msra.mxu0 %v648
    %1175 = vmatpush.bf16.msra.mxu0 %v644
    %1176 = vmatmul.bf16.gmra.mxu0 %v1128
    %v1177 = vpop.f32.mrf.mxu0
    %v1178 = vadd.f32 0.0, %v1177
    %v1179 = vpop.f32.mrf.mxu0
    %1180 = vdwg.mxu0
    %v1181 = vadd.f32 %v1124, %v1139
    %v1182 = vadd.f32 %v1125, %v1152
    %v1183 = vadd.f32 %v1126, %v1165
    %v1184 = vadd.f32 %v1127, %v1178
    %v1185 = vsub.f32 0.0, %v1181
    %v1186 = vmul.f32 %v1185, 1.442695
    %v1187 = vpow.pop %v1186
    %v1188 = vadd.f32 %v1187, 1.0
    %v1189 = vrcp.pop %v1188
    %v1190 = vsub.f32 0.0, %v1182
    %v1191 = vmul.f32 %v1190, 1.442695
    %v1192 = vpow.pop %v1191
    %v1193 = vadd.f32 %v1192, 1.0
    %v1194 = vrcp.pop %v1193
    %v1195 = vtanh.pop %v1183
    %v1196 = vsub.f32 0.0, %v1184
    %v1197 = vmul.f32 %v1196, 1.442695
    %v1198 = vpow.pop %v1197
    %v1199 = vadd.f32 %v1198, 1.0
    %v1200 = vrcp.pop %v1199
    %v1201 = vmul.f32 %v1194, %v1118
    %v1202 = vmul.f32 %v1189, %v1195
    %v1203 = vadd.f32 %v1201, %v1202
    %v1204 = vtanh.pop %v1203
    %v1205 = vmul.f32 %v1200, %v1204
    %s1206 = scalar_lea.vmem [#allocation2], 40
    %1207 = vst [vmem:[%s1206] sm:$0xff] %v1205
    %s1208 = scalar_lea.vmem [#allocation3], 192
    %v1209 = vld [vmem:[%s1208] sm:$0xff]
    %v1210 = vld [vmem:[%s1208 + $0x8] sm:$0xff]
    %v1211 = vld [vmem:[%s1208 + $0x10] sm:$0xff]
    %v1212 = vld [vmem:[%s1208 + $0x18] sm:$0xff]
    %v1213 = vpack.c.bf16 %v1205, %v1205
    %1214 = vmatpush.bf16.msra.mxu0 %v669
    %1215 = vmatpush.bf16.msra.mxu0 %v665
    %1216 = vmatpush.bf16.msra.mxu0 %v661
    %1217 = vmatpush.bf16.msra.mxu0 %v657
    %1218 = vmatpush.bf16.msra.mxu0 %v653
    %1219 = vmatpush.bf16.msra.mxu0 %v649
    %1220 = vmatpush.bf16.msra.mxu0 %v645
    %1221 = vmatpush.bf16.msra.mxu0 %v641
    %1222 = vmatmul.bf16.gmra.mxu0 %v1213
    %v1223 = vpop.f32.mrf.mxu0
    %v1224 = vadd.f32 0.0, %v1223
    %v1225 = vpop.f32.mrf.mxu0
    %1226 = vdwg.mxu0
    %1227 = vmatpush.bf16.msra.mxu0 %v670
    %1228 = vmatpush.bf16.msra.mxu0 %v666
    %1229 = vmatpush.bf16.msra.mxu0 %v662
    %1230 = vmatpush.bf16.msra.mxu0 %v658
    %1231 = vmatpush.bf16.msra.mxu0 %v654
    %1232 = vmatpush.bf16.msra.mxu0 %v650
    %1233 = vmatpush.bf16.msra.mxu0 %v646
    %1234 = vmatpush.bf16.msra.mxu0 %v642
    %1235 = vmatmul.bf16.gmra.mxu0 %v1213
    %v1236 = vpop.f32.mrf.mxu0
    %v1237 = vadd.f32 0.0, %v1236
    %v1238 = vpop.f32.mrf.mxu0
    %1239 = vdwg.mxu0
    %1240 = vmatpush.bf16.msra.mxu0 %v671
    %1241 = vmatpush.bf16.msra.mxu0 %v667
    %1242 = vmatpush.bf16.msra.mxu0 %v663
    %1243 = vmatpush.bf16.msra.mxu0 %v659
    %1244 = vmatpush.bf16.msra.mxu0 %v655
    %1245 = vmatpush.bf16.msra.mxu0 %v651
    %1246 = vmatpush.bf16.msra.mxu0 %v647
    %1247 = vmatpush.bf16.msra.mxu0 %v643
    %1248 = vmatmul.bf16.gmra.mxu0 %v1213
    %v1249 = vpop.f32.mrf.mxu0
    %v1250 = vadd.f32 0.0, %v1249
    %v1251 = vpop.f32.mrf.mxu0
    %1252 = vdwg.mxu0
    %1253 = vmatpush.bf16.msra.mxu0 %v672
    %1254 = vmatpush.bf16.msra.mxu0 %v668
    %1255 = vmatpush.bf16.msra.mxu0 %v664
    %1256 = vmatpush.bf16.msra.mxu0 %v660
    %1257 = vmatpush.bf16.msra.mxu0 %v656
    %1258 = vmatpush.bf16.msra.mxu0 %v652
    %1259 = vmatpush.bf16.msra.mxu0 %v648
    %1260 = vmatpush.bf16.msra.mxu0 %v644
    %1261 = vmatmul.bf16.gmra.mxu0 %v1213
    %v1262 = vpop.f32.mrf.mxu0
    %v1263 = vadd.f32 0.0, %v1262
    %v1264 = vpop.f32.mrf.mxu0
    %1265 = vdwg.mxu0
    %v1266 = vadd.f32 %v1209, %v1224
    %v1267 = vadd.f32 %v1210, %v1237
    %v1268 = vadd.f32 %v1211, %v1250
    %v1269 = vadd.f32 %v1212, %v1263
    %v1270 = vsub.f32 0.0, %v1266
    %v1271 = vmul.f32 %v1270, 1.442695
    %v1272 = vpow.pop %v1271
    %v1273 = vadd.f32 %v1272, 1.0
    %v1274 = vrcp.pop %v1273
    %v1275 = vsub.f32 0.0, %v1267
    %v1276 = vmul.f32 %v1275, 1.442695
    %v1277 = vpow.pop %v1276
    %v1278 = vadd.f32 %v1277, 1.0
    %v1279 = vrcp.pop %v1278
    %v1280 = vtanh.pop %v1268
    %v1281 = vsub.f32 0.0, %v1269
    %v1282 = vmul.f32 %v1281, 1.442695
    %v1283 = vpow.pop %v1282
    %v1284 = vadd.f32 %v1283, 1.0
    %v1285 = vrcp.pop %v1284
    %v1286 = vmul.f32 %v1279, %v1203
    %v1287 = vmul.f32 %v1274, %v1280
    %v1288 = vadd.f32 %v1286, %v1287
    %v1289 = vtanh.pop %v1288
    %v1290 = vmul.f32 %v1285, %v1289
    %s1291 = scalar_lea.vmem [#allocation2], 48
    %1292 = vst [vmem:[%s1291] sm:$0xff] %v1290
    %s1293 = scalar_lea.vmem [#allocation3], 224
    %v1294 = vld [vmem:[%s1293] sm:$0xff]
    %v1295 = vld [vmem:[%s1293 + $0x8] sm:$0xff]
    %v1296 = vld [vmem:[%s1293 + $0x10] sm:$0xff]
    %v1297 = vld [vmem:[%s1293 + $0x18] sm:$0xff]
    %v1298 = vpack.c.bf16 %v1290, %v1290
    %1299 = vmatpush.bf16.msra.mxu0 %v669
    %1300 = vmatpush.bf16.msra.mxu0 %v665
    %1301 = vmatpush.bf16.msra.mxu0 %v661
    %1302 = vmatpush.bf16.msra.mxu0 %v657
    %1303 = vmatpush.bf16.msra.mxu0 %v653
    %1304 = vmatpush.bf16.msra.mxu0 %v649
    %1305 = vmatpush.bf16.msra.mxu0 %v645
    %1306 = vmatpush.bf16.msra.mxu0 %v641
    %1307 = vmatmul.bf16.gmra.mxu0 %v1298
    %v1308 = vpop.f32.mrf.mxu0
    %v1309 = vadd.f32 0.0, %v1308
    %v1310 = vpop.f32.mrf.mxu0
    %1311 = vdwg.mxu0
    %1312 = vmatpush.bf16.msra.mxu0 %v670
    %1313 = vmatpush.bf16.msra.mxu0 %v666
    %1314 = vmatpush.bf16.msra.mxu0 %v662
    %1315 = vmatpush.bf16.msra.mxu0 %v658
    %1316 = vmatpush.bf16.msra.mxu0 %v654
    %1317 = vmatpush.bf16.msra.mxu0 %v650
    %1318 = vmatpush.bf16.msra.mxu0 %v646
    %1319 = vmatpush.bf16.msra.mxu0 %v642
    %1320 = vmatmul.bf16.gmra.mxu0 %v1298
    %v1321 = vpop.f32.mrf.mxu0
    %v1322 = vadd.f32 0.0, %v1321
    %v1323 = vpop.f32.mrf.mxu0
    %1324 = vdwg.mxu0
    %1325 = vmatpush.bf16.msra.mxu0 %v671
    %1326 = vmatpush.bf16.msra.mxu0 %v667
    %1327 = vmatpush.bf16.msra.mxu0 %v663
    %1328 = vmatpush.bf16.msra.mxu0 %v659
    %1329 = vmatpush.bf16.msra.mxu0 %v655
    %1330 = vmatpush.bf16.msra.mxu0 %v651
    %1331 = vmatpush.bf16.msra.mxu0 %v647
    %1332 = vmatpush.bf16.msra.mxu0 %v643
    %1333 = vmatmul.bf16.gmra.mxu0 %v1298
    %v1334 = vpop.f32.mrf.mxu0
    %v1335 = vadd.f32 0.0, %v1334
    %v1336 = vpop.f32.mrf.mxu0
    %1337 = vdwg.mxu0
    %1338 = vmatpush.bf16.msra.mxu0 %v672
    %1339 = vmatpush.bf16.msra.mxu0 %v668
    %1340 = vmatpush.bf16.msra.mxu0 %v664
    %1341 = vmatpush.bf16.msra.mxu0 %v660
    %1342 = vmatpush.bf16.msra.mxu0 %v656
    %1343 = vmatpush.bf16.msra.mxu0 %v652
    %1344 = vmatpush.bf16.msra.mxu0 %v648
    %1345 = vmatpush.bf16.msra.mxu0 %v644
    %1346 = vmatmul.bf16.gmra.mxu0 %v1298
    %v1347 = vpop.f32.mrf.mxu0
    %v1348 = vadd.f32 0.0, %v1347
    %v1349 = vpop.f32.mrf.mxu0
    %1350 = vdwg.mxu0
    %v1351 = vadd.f32 %v1294, %v1309
    %v1352 = vadd.f32 %v1295, %v1322
    %v1353 = vadd.f32 %v1296, %v1335
    %v1354 = vadd.f32 %v1297, %v1348
    %v1355 = vsub.f32 0.0, %v1351
    %v1356 = vmul.f32 %v1355, 1.442695
    %v1357 = vpow.pop %v1356
    %v1358 = vadd.f32 %v1357, 1.0
    %v1359 = vrcp.pop %v1358
    %v1360 = vsub.f32 0.0, %v1352
    %v1361 = vmul.f32 %v1360, 1.442695
    %v1362 = vpow.pop %v1361
    %v1363 = vadd.f32 %v1362, 1.0
    %v1364 = vrcp.pop %v1363
    %v1365 = vtanh.pop %v1353
    %v1366 = vsub.f32 0.0, %v1354
    %v1367 = vmul.f32 %v1366, 1.442695
    %v1368 = vpow.pop %v1367
    %v1369 = vadd.f32 %v1368, 1.0
    %v1370 = vrcp.pop %v1369
    %v1371 = vmul.f32 %v1364, %v1288
    %v1372 = vmul.f32 %v1359, %v1365
    %v1373 = vadd.f32 %v1371, %v1372
    %v1374 = vtanh.pop %v1373
    %v1375 = vmul.f32 %v1370, %v1374
    %s1376 = scalar_lea.vmem [#allocation2], 56
    %1377 = vst [vmem:[%s1376] sm:$0xff] %v1375
    %v1378 = vld [vmem:[#allocation10] sm:$0xff]
    %v1379 = vld [vmem:[#allocation10 + $0x8] sm:$0xff]
    %v1380 = vld [vmem:[#allocation10 + $0x10] sm:$0xff]
    %v1381 = vld [vmem:[#allocation10 + $0x18] sm:$0xff]
    %v1382 = vld [vmem:[#allocation10 + $0x20] sm:$0xff]
    %v1383 = vld [vmem:[#allocation10 + $0x28] sm:$0xff]
    %v1384 = vld [vmem:[#allocation10 + $0x30] sm:$0xff]
    %v1385 = vld [vmem:[#allocation10 + $0x38] sm:$0xff]
    %v1386 = vld [vmem:[#allocation10 + $0x40] sm:$0xff]
    %v1387 = vld [vmem:[#allocation10 + $0x48] sm:$0xff]
    %v1388 = vld [vmem:[#allocation10 + $0x50] sm:$0xff]
    %v1389 = vld [vmem:[#allocation10 + $0x58] sm:$0xff]
    %v1390 = vld [vmem:[#allocation10 + $0x60] sm:$0xff]
    %v1391 = vld [vmem:[#allocation10 + $0x68] sm:$0xff]
    %v1392 = vld [vmem:[#allocation10 + $0x70] sm:$0xff]
    %v1393 = vld [vmem:[#allocation10 + $0x78] sm:$0xff]
    %v1394 = vld [vmem:[#allocation10 + $0x80] sm:$0xff]
    %v1395 = vld [vmem:[#allocation10 + $0x88] sm:$0xff]
    %v1396 = vld [vmem:[#allocation10 + $0x90] sm:$0xff]
    %v1397 = vld [vmem:[#allocation10 + $0x98] sm:$0xff]
    %v1398 = vld [vmem:[#allocation10 + $0xa0] sm:$0xff]
    %v1399 = vld [vmem:[#allocation10 + $0xa8] sm:$0xff]
    %v1400 = vld [vmem:[#allocation10 + $0xb0] sm:$0xff]
    %v1401 = vld [vmem:[#allocation10 + $0xb8] sm:$0xff]
    %v1402 = vld [vmem:[#allocation10 + $0xc0] sm:$0xff]
    %v1403 = vld [vmem:[#allocation10 + $0xc8] sm:$0xff]
    %v1404 = vld [vmem:[#allocation10 + $0xd0] sm:$0xff]
    %v1405 = vld [vmem:[#allocation10 + $0xd8] sm:$0xff]
    %v1406 = vld [vmem:[#allocation10 + $0xe0] sm:$0xff]
    %v1407 = vld [vmem:[#allocation10 + $0xe8] sm:$0xff]
    %v1408 = vld [vmem:[#allocation10 + $0xf0] sm:$0xff]
    %v1409 = vld [vmem:[#allocation10 + $0xf8] sm:$0xff]
    %v1410 = vld [vmem:[#allocation12] sm:$0xff]
    %v1411 = vld [vmem:[#allocation12 + $0x8] sm:$0xff]
    %v1412 = vld [vmem:[#allocation12 + $0x10] sm:$0xff]
    %v1413 = vld [vmem:[#allocation12 + $0x18] sm:$0xff]
    %v1414 = vld [vmem:[#allocation12 + $0x20] sm:$0xff]
    %v1415 = vld [vmem:[#allocation12 + $0x28] sm:$0xff]
    %v1416 = vld [vmem:[#allocation12 + $0x30] sm:$0xff]
    %v1417 = vld [vmem:[#allocation12 + $0x38] sm:$0xff]
    %v1418 = vld [vmem:[#allocation12 + $0x40] sm:$0xff]
    %v1419 = vld [vmem:[#allocation12 + $0x48] sm:$0xff]
    %v1420 = vld [vmem:[#allocation12 + $0x50] sm:$0xff]
    %v1421 = vld [vmem:[#allocation12 + $0x58] sm:$0xff]
    %v1422 = vld [vmem:[#allocation12 + $0x60] sm:$0xff]
    %v1423 = vld [vmem:[#allocation12 + $0x68] sm:$0xff]
    %v1424 = vld [vmem:[#allocation12 + $0x70] sm:$0xff]
    %v1425 = vld [vmem:[#allocation12 + $0x78] sm:$0xff]
    %v1426 = vld [vmem:[#allocation12 + $0x80] sm:$0xff]
    %v1427 = vld [vmem:[#allocation12 + $0x88] sm:$0xff]
    %v1428 = vld [vmem:[#allocation12 + $0x90] sm:$0xff]
    %v1429 = vld [vmem:[#allocation12 + $0x98] sm:$0xff]
    %v1430 = vld [vmem:[#allocation12 + $0xa0] sm:$0xff]
    %v1431 = vld [vmem:[#allocation12 + $0xa8] sm:$0xff]
    %v1432 = vld [vmem:[#allocation12 + $0xb0] sm:$0xff]
    %v1433 = vld [vmem:[#allocation12 + $0xb8] sm:$0xff]
    %v1434 = vld [vmem:[#allocation12 + $0xc0] sm:$0xff]
    %v1435 = vld [vmem:[#allocation12 + $0xc8] sm:$0xff]
    %v1436 = vld [vmem:[#allocation12 + $0xd0] sm:$0xff]
    %v1437 = vld [vmem:[#allocation12 + $0xd8] sm:$0xff]
    %v1438 = vld [vmem:[#allocation12 + $0xe0] sm:$0xff]
    %v1439 = vld [vmem:[#allocation12 + $0xe8] sm:$0xff]
    %v1440 = vld [vmem:[#allocation12 + $0xf0] sm:$0xff]
    %v1441 = vld [vmem:[#allocation12 + $0xf8] sm:$0xff]
    %v1442 = vld [vmem:[#allocation13] sm:$0xf]
    %v1443 = vld [vmem:[#allocation2] sm:$0xff]
    %v1444 = vld [vmem:[#allocation2 + $0x8] sm:$0xff]
    %v1445 = vld [vmem:[#allocation2 + $0x10] sm:$0xff]
    %v1446 = vld [vmem:[#allocation2 + $0x18] sm:$0xff]
    %v1447 = vld [vmem:[#allocation2 + $0x20] sm:$0xff]
    %v1448 = vld [vmem:[#allocation2 + $0x28] sm:$0xff]
    %v1449 = vld [vmem:[#allocation2 + $0x30] sm:$0xff]
    %v1450 = vld [vmem:[#allocation2 + $0x38] sm:$0xff]
    %v1451 = vpack.c.bf16 %v1444, %v1443
    %v1452 = vpack.c.bf16 %v1446, %v1445
    %v1453 = vpack.c.bf16 %v1448, %v1447
    %v1454 = vpack.c.bf16 %v1450, %v1449
    %v1456 = vperm.slane %v1442, 0
    %v1457 = vperm.slane %v1442, 1
    %v1458 = vperm.slane %v1442, 2
    %v1459 = vperm.slane %v1442, 3
    %v1496 = vunpack.c.l.b16 %v1378
    %v1497 = vunpack.c.h.b16 %v1378
    %v1498 = vunpack.c.l.b16 %v1379
    %v1499 = vunpack.c.h.b16 %v1379
    %v1500 = vunpack.c.l.b16 %v1380
    %v1501 = vunpack.c.h.b16 %v1380
    %v1502 = vunpack.c.l.b16 %v1381
    %v1503 = vunpack.c.h.b16 %v1381
    %v1504 = vunpack.c.l.b16 %v1382
    %v1505 = vunpack.c.h.b16 %v1382
    %v1506 = vunpack.c.l.b16 %v1383
    %v1507 = vunpack.c.h.b16 %v1383
    %v1508 = vunpack.c.l.b16 %v1384
    %v1509 = vunpack.c.h.b16 %v1384
    %v1510 = vunpack.c.l.b16 %v1385
    %v1511 = vunpack.c.h.b16 %v1385
    %v1512 = vunpack.c.l.b16 %v1386
    %v1513 = vunpack.c.h.b16 %v1386
    %v1514 = vunpack.c.l.b16 %v1387
    %v1515 = vunpack.c.h.b16 %v1387
    %v1516 = vunpack.c.l.b16 %v1388
    %v1517 = vunpack.c.h.b16 %v1388
    %v1518 = vunpack.c.l.b16 %v1389
    %v1519 = vunpack.c.h.b16 %v1389
    %v1520 = vunpack.c.l.b16 %v1390
    %v1521 = vunpack.c.h.b16 %v1390
    %v1522 = vunpack.c.l.b16 %v1391
    %v1523 = vunpack.c.h.b16 %v1391
    %v1524 = vunpack.c.l.b16 %v1392
    %v1525 = vunpack.c.h.b16 %v1392
    %v1526 = vunpack.c.l.b16 %v1393
    %v1527 = vunpack.c.h.b16 %v1393
    %v1528 = vunpack.c.l.b16 %v1394
    %v1529 = vunpack.c.h.b16 %v1394
    %v1530 = vunpack.c.l.b16 %v1395
    %v1531 = vunpack.c.h.b16 %v1395
    %v1532 = vunpack.c.l.b16 %v1396
    %v1533 = vunpack.c.h.b16 %v1396
    %v1534 = vunpack.c.l.b16 %v1397
    %v1535 = vunpack.c.h.b16 %v1397
    %v1536 = vunpack.c.l.b16 %v1398
    %v1537 = vunpack.c.h.b16 %v1398
    %v1538 = vunpack.c.l.b16 %v1399
    %v1539 = vunpack.c.h.b16 %v1399
    %v1540 = vunpack.c.l.b16 %v1400
    %v1541 = vunpack.c.h.b16 %v1400
    %v1542 = vunpack.c.l.b16 %v1401
    %v1543 = vunpack.c.h.b16 %v1401
    %v1544 = vunpack.c.l.b16 %v1402
    %v1545 = vunpack.c.h.b16 %v1402
    %v1546 = vunpack.c.l.b16 %v1403
    %v1547 = vunpack.c.h.b16 %v1403
    %v1548 = vunpack.c.l.b16 %v1404
    %v1549 = vunpack.c.h.b16 %v1404
    %v1550 = vunpack.c.l.b16 %v1405
    %v1551 = vunpack.c.h.b16 %v1405
    %v1552 = vunpack.c.l.b16 %v1406
    %v1553 = vunpack.c.h.b16 %v1406
    %v1554 = vunpack.c.l.b16 %v1407
    %v1555 = vunpack.c.h.b16 %v1407
    %v1556 = vunpack.c.l.b16 %v1408
    %v1557 = vunpack.c.h.b16 %v1408
    %v1558 = vunpack.c.l.b16 %v1409
    %v1559 = vunpack.c.h.b16 %v1409
    %v1560 = vpack.c.b16 %v1500, %v1496
    %v1561 = vpack.c.b16 %v1501, %v1497
    %v1562 = vpack.c.b16 %v1502, %v1498
    %v1563 = vpack.c.b16 %v1503, %v1499
    %v1564 = vpack.c.b16 %v1508, %v1504
    %v1565 = vpack.c.b16 %v1509, %v1505
    %v1566 = vpack.c.b16 %v1510, %v1506
    %v1567 = vpack.c.b16 %v1511, %v1507
    %v1568 = vpack.c.b16 %v1516, %v1512
    %v1569 = vpack.c.b16 %v1517, %v1513
    %v1570 = vpack.c.b16 %v1518, %v1514
    %v1571 = vpack.c.b16 %v1519, %v1515
    %v1572 = vpack.c.b16 %v1524, %v1520
    %v1573 = vpack.c.b16 %v1525, %v1521
    %v1574 = vpack.c.b16 %v1526, %v1522
    %v1575 = vpack.c.b16 %v1527, %v1523
    %v1576 = vpack.c.b16 %v1532, %v1528
    %v1577 = vpack.c.b16 %v1533, %v1529
    %v1578 = vpack.c.b16 %v1534, %v1530
    %v1579 = vpack.c.b16 %v1535, %v1531
    %v1580 = vpack.c.b16 %v1540, %v1536
    %v1581 = vpack.c.b16 %v1541, %v1537
    %v1582 = vpack.c.b16 %v1542, %v1538
    %v1583 = vpack.c.b16 %v1543, %v1539
    %v1584 = vpack.c.b16 %v1548, %v1544
    %v1585 = vpack.c.b16 %v1549, %v1545
    %v1586 = vpack.c.b16 %v1550, %v1546
    %v1587 = vpack.c.b16 %v1551, %v1547
    %v1588 = vpack.c.b16 %v1556, %v1552
    %v1589 = vpack.c.b16 %v1557, %v1553
    %v1590 = vpack.c.b16 %v1558, %v1554
    %v1591 = vpack.c.b16 %v1559, %v1555
    %1624 = vmatpush.bf16.msra.mxu0 %v1588
    %1625 = vmatpush.bf16.msra.mxu0 %v1584
    %1626 = vmatpush.bf16.msra.mxu0 %v1580
    %1627 = vmatpush.bf16.msra.mxu0 %v1576
    %1628 = vmatpush.bf16.msra.mxu0 %v1572
    %1629 = vmatpush.bf16.msra.mxu0 %v1568
    %1630 = vmatpush.bf16.msra.mxu0 %v1564
    %1631 = vmatpush.bf16.msra.mxu0 %v1560
    %1632 = vmatmul.bf16.gmra.mxu0 %v1451
    %v1633 = vpop.f32.mrf.mxu0
    %v1634 = vadd.f32 %v1456, %v1633
    %v1635 = vpop.f32.mrf.mxu0
    %v1636 = vadd.f32 %v1456, %v1635
    %1637 = vmatmul.bf16.gmra.mxu0 %v1452
    %v1638 = vpop.f32.mrf.mxu0
    %v1639 = vadd.f32 %v1456, %v1638
    %v1640 = vpop.f32.mrf.mxu0
    %v1641 = vadd.f32 %v1456, %v1640
    %1642 = vmatmul.bf16.gmra.mxu0 %v1453
    %v1643 = vpop.f32.mrf.mxu0
    %v1644 = vadd.f32 %v1456, %v1643
    %v1645 = vpop.f32.mrf.mxu0
    %v1646 = vadd.f32 %v1456, %v1645
    %1647 = vmatmul.bf16.gmra.mxu0 %v1454
    %v1648 = vpop.f32.mrf.mxu0
    %v1649 = vadd.f32 %v1456, %v1648
    %v1650 = vpop.f32.mrf.mxu0
    %v1651 = vadd.f32 %v1456, %v1650
    %1652 = vdwg.mxu0
    %1653 = vmatpush.bf16.msra.mxu0 %v1589
    %1654 = vmatpush.bf16.msra.mxu0 %v1585
    %1655 = vmatpush.bf16.msra.mxu0 %v1581
    %1656 = vmatpush.bf16.msra.mxu0 %v1577
    %1657 = vmatpush.bf16.msra.mxu0 %v1573
    %1658 = vmatpush.bf16.msra.mxu0 %v1569
    %1659 = vmatpush.bf16.msra.mxu0 %v1565
    %1660 = vmatpush.bf16.msra.mxu0 %v1561
    %1661 = vmatmul.bf16.gmra.mxu0 %v1451
    %v1662 = vpop.f32.mrf.mxu0
    %v1663 = vadd.f32 %v1457, %v1662
    %v1664 = vpop.f32.mrf.mxu0
    %v1665 = vadd.f32 %v1457, %v1664
    %1666 = vmatmul.bf16.gmra.mxu0 %v1452
    %v1667 = vpop.f32.mrf.mxu0
    %v1668 = vadd.f32 %v1457, %v1667
    %v1669 = vpop.f32.mrf.mxu0
    %v1670 = vadd.f32 %v1457, %v1669
    %1671 = vmatmul.bf16.gmra.mxu0 %v1453
    %v1672 = vpop.f32.mrf.mxu0
    %v1673 = vadd.f32 %v1457, %v1672
    %v1674 = vpop.f32.mrf.mxu0
    %v1675 = vadd.f32 %v1457, %v1674
    %1676 = vmatmul.bf16.gmra.mxu0 %v1454
    %v1677 = vpop.f32.mrf.mxu0
    %v1678 = vadd.f32 %v1457, %v1677
    %v1679 = vpop.f32.mrf.mxu0
    %v1680 = vadd.f32 %v1457, %v1679
    %1681 = vdwg.mxu0
    %1682 = vmatpush.bf16.msra.mxu0 %v1590
    %1683 = vmatpush.bf16.msra.mxu0 %v1586
    %1684 = vmatpush.bf16.msra.mxu0 %v1582
    %1685 = vmatpush.bf16.msra.mxu0 %v1578
    %1686 = vmatpush.bf16.msra.mxu0 %v1574
    %1687 = vmatpush.bf16.msra.mxu0 %v1570
    %1688 = vmatpush.bf16.msra.mxu0 %v1566
    %1689 = vmatpush.bf16.msra.mxu0 %v1562
    %1690 = vmatmul.bf16.gmra.mxu0 %v1451
    %v1691 = vpop.f32.mrf.mxu0
    %v1692 = vadd.f32 %v1458, %v1691
    %v1693 = vpop.f32.mrf.mxu0
    %v1694 = vadd.f32 %v1458, %v1693
    %1695 = vmatmul.bf16.gmra.mxu0 %v1452
    %v1696 = vpop.f32.mrf.mxu0
    %v1697 = vadd.f32 %v1458, %v1696
    %v1698 = vpop.f32.mrf.mxu0
    %v1699 = vadd.f32 %v1458, %v1698
    %1700 = vmatmul.bf16.gmra.mxu0 %v1453
    %v1701 = vpop.f32.mrf.mxu0
    %v1702 = vadd.f32 %v1458, %v1701
    %v1703 = vpop.f32.mrf.mxu0
    %v1704 = vadd.f32 %v1458, %v1703
    %1705 = vmatmul.bf16.gmra.mxu0 %v1454
    %v1706 = vpop.f32.mrf.mxu0
    %v1707 = vadd.f32 %v1458, %v1706
    %v1708 = vpop.f32.mrf.mxu0
    %v1709 = vadd.f32 %v1458, %v1708
    %1710 = vdwg.mxu0
    %1711 = vmatpush.bf16.msra.mxu0 %v1591
    %1712 = vmatpush.bf16.msra.mxu0 %v1587
    %1713 = vmatpush.bf16.msra.mxu0 %v1583
    %1714 = vmatpush.bf16.msra.mxu0 %v1579
    %1715 = vmatpush.bf16.msra.mxu0 %v1575
    %1716 = vmatpush.bf16.msra.mxu0 %v1571
    %1717 = vmatpush.bf16.msra.mxu0 %v1567
    %1718 = vmatpush.bf16.msra.mxu0 %v1563
    %1719 = vmatmul.bf16.gmra.mxu0 %v1451
    %v1720 = vpop.f32.mrf.mxu0
    %v1721 = vadd.f32 %v1459, %v1720
    %v1722 = vpop.f32.mrf.mxu0
    %v1723 = vadd.f32 %v1459, %v1722
    %1724 = vmatmul.bf16.gmra.mxu0 %v1452
    %v1725 = vpop.f32.mrf.mxu0
    %v1726 = vadd.f32 %v1459, %v1725
    %v1727 = vpop.f32.mrf.mxu0
    %v1728 = vadd.f32 %v1459, %v1727
    %1729 = vmatmul.bf16.gmra.mxu0 %v1453
    %v1730 = vpop.f32.mrf.mxu0
    %v1731 = vadd.f32 %v1459, %v1730
    %v1732 = vpop.f32.mrf.mxu0
    %v1733 = vadd.f32 %v1459, %v1732
    %1734 = vmatmul.bf16.gmra.mxu0 %v1454
    %v1735 = vpop.f32.mrf.mxu0
    %v1736 = vadd.f32 %v1459, %v1735
    %v1737 = vpop.f32.mrf.mxu0
    %v1738 = vadd.f32 %v1459, %v1737
    %1739 = vdwg.mxu0
    %1740 = vst [vmem:[#allocation3] sm:$0xff] %v1634
    %1741 = vst [vmem:[#allocation3 + $0x8] sm:$0xff] %v1663
    %1742 = vst [vmem:[#allocation3 + $0x10] sm:$0xff] %v1692
    %1743 = vst [vmem:[#allocation3 + $0x18] sm:$0xff] %v1721
    %1744 = vst [vmem:[#allocation3 + $0x20] sm:$0xff] %v1636
    %1745 = vst [vmem:[#allocation3 + $0x28] sm:$0xff] %v1665
    %1746 = vst [vmem:[#allocation3 + $0x30] sm:$0xff] %v1694
    %1747 = vst [vmem:[#allocation3 + $0x38] sm:$0xff] %v1723
    %1748 = vst [vmem:[#allocation3 + $0x40] sm:$0xff] %v1639
    %1749 = vst [vmem:[#allocation3 + $0x48] sm:$0xff] %v1668
    %1750 = vst [vmem:[#allocation3 + $0x50] sm:$0xff] %v1697
    %1751 = vst [vmem:[#allocation3 + $0x58] sm:$0xff] %v1726
    %1752 = vst [vmem:[#allocation3 + $0x60] sm:$0xff] %v1641
    %1753 = vst [vmem:[#allocation3 + $0x68] sm:$0xff] %v1670
    %1754 = vst [vmem:[#allocation3 + $0x70] sm:$0xff] %v1699
    %1755 = vst [vmem:[#allocation3 + $0x78] sm:$0xff] %v1728
    %1756 = vst [vmem:[#allocation3 + $0x80] sm:$0xff] %v1644
    %1757 = vst [vmem:[#allocation3 + $0x88] sm:$0xff] %v1673
    %1758 = vst [vmem:[#allocation3 + $0x90] sm:$0xff] %v1702
    %1759 = vst [vmem:[#allocation3 + $0x98] sm:$0xff] %v1731
    %1760 = vst [vmem:[#allocation3 + $0xa0] sm:$0xff] %v1646
    %1761 = vst [vmem:[#allocation3 + $0xa8] sm:$0xff] %v1675
    %1762 = vst [vmem:[#allocation3 + $0xb0] sm:$0xff] %v1704
    %1763 = vst [vmem:[#allocation3 + $0xb8] sm:$0xff] %v1733
    %1764 = vst [vmem:[#allocation3 + $0xc0] sm:$0xff] %v1649
    %1765 = vst [vmem:[#allocation3 + $0xc8] sm:$0xff] %v1678
    %1766 = vst [vmem:[#allocation3 + $0xd0] sm:$0xff] %v1707
    %1767 = vst [vmem:[#allocation3 + $0xd8] sm:$0xff] %v1736
    %1768 = vst [vmem:[#allocation3 + $0xe0] sm:$0xff] %v1651
    %1769 = vst [vmem:[#allocation3 + $0xe8] sm:$0xff] %v1680
    %1770 = vst [vmem:[#allocation3 + $0xf0] sm:$0xff] %v1709
    %1771 = vst [vmem:[#allocation3 + $0xf8] sm:$0xff] %v1738
    %v1772 = vld [vmem:[#allocation3] sm:$0xff]
    %v1773 = vld [vmem:[#allocation3 + $0x8] sm:$0xff]
    %v1774 = vld [vmem:[#allocation3 + $0x10] sm:$0xff]
    %v1775 = vld [vmem:[#allocation3 + $0x18] sm:$0xff]
    %v1808 = vunpack.c.l.b16 %v1410
    %v1809 = vunpack.c.h.b16 %v1410
    %v1810 = vunpack.c.l.b16 %v1411
    %v1811 = vunpack.c.h.b16 %v1411
    %v1812 = vunpack.c.l.b16 %v1412
    %v1813 = vunpack.c.h.b16 %v1412
    %v1814 = vunpack.c.l.b16 %v1413
    %v1815 = vunpack.c.h.b16 %v1413
    %v1816 = vunpack.c.l.b16 %v1414
    %v1817 = vunpack.c.h.b16 %v1414
    %v1818 = vunpack.c.l.b16 %v1415
    %v1819 = vunpack.c.h.b16 %v1415
    %v1820 = vunpack.c.l.b16 %v1416
    %v1821 = vunpack.c.h.b16 %v1416
    %v1822 = vunpack.c.l.b16 %v1417
    %v1823 = vunpack.c.h.b16 %v1417
    %v1824 = vunpack.c.l.b16 %v1418
    %v1825 = vunpack.c.h.b16 %v1418
    %v1826 = vunpack.c.l.b16 %v1419
    %v1827 = vunpack.c.h.b16 %v1419
    %v1828 = vunpack.c.l.b16 %v1420
    %v1829 = vunpack.c.h.b16 %v1420
    %v1830 = vunpack.c.l.b16 %v1421
    %v1831 = vunpack.c.h.b16 %v1421
    %v1832 = vunpack.c.l.b16 %v1422
    %v1833 = vunpack.c.h.b16 %v1422
    %v1834 = vunpack.c.l.b16 %v1423
    %v1835 = vunpack.c.h.b16 %v1423
    %v1836 = vunpack.c.l.b16 %v1424
    %v1837 = vunpack.c.h.b16 %v1424
    %v1838 = vunpack.c.l.b16 %v1425
    %v1839 = vunpack.c.h.b16 %v1425
    %v1840 = vunpack.c.l.b16 %v1426
    %v1841 = vunpack.c.h.b16 %v1426
    %v1842 = vunpack.c.l.b16 %v1427
    %v1843 = vunpack.c.h.b16 %v1427
    %v1844 = vunpack.c.l.b16 %v1428
    %v1845 = vunpack.c.h.b16 %v1428
    %v1846 = vunpack.c.l.b16 %v1429
    %v1847 = vunpack.c.h.b16 %v1429
    %v1848 = vunpack.c.l.b16 %v1430
    %v1849 = vunpack.c.h.b16 %v1430
    %v1850 = vunpack.c.l.b16 %v1431
    %v1851 = vunpack.c.h.b16 %v1431
    %v1852 = vunpack.c.l.b16 %v1432
    %v1853 = vunpack.c.h.b16 %v1432
    %v1854 = vunpack.c.l.b16 %v1433
    %v1855 = vunpack.c.h.b16 %v1433
    %v1856 = vunpack.c.l.b16 %v1434
    %v1857 = vunpack.c.h.b16 %v1434
    %v1858 = vunpack.c.l.b16 %v1435
    %v1859 = vunpack.c.h.b16 %v1435
    %v1860 = vunpack.c.l.b16 %v1436
    %v1861 = vunpack.c.h.b16 %v1436
    %v1862 = vunpack.c.l.b16 %v1437
    %v1863 = vunpack.c.h.b16 %v1437
    %v1864 = vunpack.c.l.b16 %v1438
    %v1865 = vunpack.c.h.b16 %v1438
    %v1866 = vunpack.c.l.b16 %v1439
    %v1867 = vunpack.c.h.b16 %v1439
    %v1868 = vunpack.c.l.b16 %v1440
    %v1869 = vunpack.c.h.b16 %v1440
    %v1870 = vunpack.c.l.b16 %v1441
    %v1871 = vunpack.c.h.b16 %v1441
    %v1872 = vpack.c.b16 %v1812, %v1808
    %v1873 = vpack.c.b16 %v1813, %v1809
    %v1874 = vpack.c.b16 %v1814, %v1810
    %v1875 = vpack.c.b16 %v1815, %v1811
    %v1876 = vpack.c.b16 %v1820, %v1816
    %v1877 = vpack.c.b16 %v1821, %v1817
    %v1878 = vpack.c.b16 %v1822, %v1818
    %v1879 = vpack.c.b16 %v1823, %v1819
    %v1880 = vpack.c.b16 %v1828, %v1824
    %v1881 = vpack.c.b16 %v1829, %v1825
    %v1882 = vpack.c.b16 %v1830, %v1826
    %v1883 = vpack.c.b16 %v1831, %v1827
    %v1884 = vpack.c.b16 %v1836, %v1832
    %v1885 = vpack.c.b16 %v1837, %v1833
    %v1886 = vpack.c.b16 %v1838, %v1834
    %v1887 = vpack.c.b16 %v1839, %v1835
    %v1888 = vpack.c.b16 %v1844, %v1840
    %v1889 = vpack.c.b16 %v1845, %v1841
    %v1890 = vpack.c.b16 %v1846, %v1842
    %v1891 = vpack.c.b16 %v1847, %v1843
    %v1892 = vpack.c.b16 %v1852, %v1848
    %v1893 = vpack.c.b16 %v1853, %v1849
    %v1894 = vpack.c.b16 %v1854, %v1850
    %v1895 = vpack.c.b16 %v1855, %v1851
    %v1896 = vpack.c.b16 %v1860, %v1856
    %v1897 = vpack.c.b16 %v1861, %v1857
    %v1898 = vpack.c.b16 %v1862, %v1858
    %v1899 = vpack.c.b16 %v1863, %v1859
    %v1900 = vpack.c.b16 %v1868, %v1864
    %v1901 = vpack.c.b16 %v1869, %v1865
    %v1902 = vpack.c.b16 %v1870, %v1866
    %v1903 = vpack.c.b16 %v1871, %v1867
    %1936 = vmatpush.bf16.msra.mxu0 %v1900
    %1937 = vmatpush.bf16.msra.mxu0 %v1896
    %1938 = vmatpush.bf16.msra.mxu0 %v1892
    %1939 = vmatpush.bf16.msra.mxu0 %v1888
    %1940 = vmatpush.bf16.msra.mxu0 %v1884
    %1941 = vmatpush.bf16.msra.mxu0 %v1880
    %1942 = vmatpush.bf16.msra.mxu0 %v1876
    %1943 = vmatpush.bf16.msra.mxu0 %v1872
    %1944 = vmatmul.bf16.gmra.mxu0 0
    %v1945 = vpop.f32.mrf.mxu0
    %v1946 = vadd.f32 0.0, %v1945
    %v1947 = vpop.f32.mrf.mxu0
    %1948 = vdwg.mxu0
    %1949 = vmatpush.bf16.msra.mxu0 %v1901
    %1950 = vmatpush.bf16.msra.mxu0 %v1897
    %1951 = vmatpush.bf16.msra.mxu0 %v1893
    %1952 = vmatpush.bf16.msra.mxu0 %v1889
    %1953 = vmatpush.bf16.msra.mxu0 %v1885
    %1954 = vmatpush.bf16.msra.mxu0 %v1881
    %1955 = vmatpush.bf16.msra.mxu0 %v1877
    %1956 = vmatpush.bf16.msra.mxu0 %v1873
    %1957 = vmatmul.bf16.gmra.mxu0 0
    %v1958 = vpop.f32.mrf.mxu0
    %v1959 = vadd.f32 0.0, %v1958
    %v1960 = vpop.f32.mrf.mxu0
    %1961 = vdwg.mxu0
    %1962 = vmatpush.bf16.msra.mxu0 %v1902
    %1963 = vmatpush.bf16.msra.mxu0 %v1898
    %1964 = vmatpush.bf16.msra.mxu0 %v1894
    %1965 = vmatpush.bf16.msra.mxu0 %v1890
    %1966 = vmatpush.bf16.msra.mxu0 %v1886
    %1967 = vmatpush.bf16.msra.mxu0 %v1882
    %1968 = vmatpush.bf16.msra.mxu0 %v1878
    %1969 = vmatpush.bf16.msra.mxu0 %v1874
    %1970 = vmatmul.bf16.gmra.mxu0 0
    %v1971 = vpop.f32.mrf.mxu0
    %v1972 = vadd.f32 0.0, %v1971
    %v1973 = vpop.f32.mrf.mxu0
    %1974 = vdwg.mxu0
    %1975 = vmatpush.bf16.msra.mxu0 %v1903
    %1976 = vmatpush.bf16.msra.mxu0 %v1899
    %1977 = vmatpush.bf16.msra.mxu0 %v1895
    %1978 = vmatpush.bf16.msra.mxu0 %v1891
    %1979 = vmatpush.bf16.msra.mxu0 %v1887
    %1980 = vmatpush.bf16.msra.mxu0 %v1883
    %1981 = vmatpush.bf16.msra.mxu0 %v1879
    %1982 = vmatpush.bf16.msra.mxu0 %v1875
    %1983 = vmatmul.bf16.gmra.mxu0 0
    %v1984 = vpop.f32.mrf.mxu0
    %v1985 = vadd.f32 0.0, %v1984
    %v1986 = vpop.f32.mrf.mxu0
    %1987 = vdwg.mxu0
    %v1988 = vadd.f32 %v1772, %v1946
    %v1989 = vadd.f32 %v1773, %v1959
    %v1990 = vadd.f32 %v1774, %v1972
    %v1991 = vadd.f32 %v1775, %v1985
    %v1992 = vsub.f32 0.0, %v1988
    %v1993 = vmul.f32 %v1992, 1.442695
    %v1994 = vpow.pop %v1993
    %v1995 = vadd.f32 %v1994, 1.0
    %v1996 = vrcp.pop %v1995
    %v1997 = vsub.f32 0.0, %v1989
    %v1998 = vmul.f32 %v1997, 1.442695
    %v1999 = vpow.pop %v1998
    %v2000 = vadd.f32 %v1999, 1.0
    %v2001 = vrcp.pop %v2000
    %v2002 = vtanh.pop %v1990
    %v2003 = vsub.f32 0.0, %v1991
    %v2004 = vmul.f32 %v2003, 1.442695
    %v2005 = vpow.pop %v2004
    %v2006 = vadd.f32 %v2005, 1.0
    %v2007 = vrcp.pop %v2006
    %v2008 = vmul.f32 %v2001, 0.0
    %v2009 = vmul.f32 %v1996, %v2002
    %v2010 = vadd.f32 %v2008, %v2009
    %v2011 = vtanh.pop %v2010
    %v2012 = vmul.f32 %v2007, %v2011
    %v2013 = vld [vmem:[%s783] sm:$0xff]
    %v2014 = vld [vmem:[%s783 + $0x8] sm:$0xff]
    %v2015 = vld [vmem:[%s783 + $0x10] sm:$0xff]
    %v2016 = vld [vmem:[%s783 + $0x18] sm:$0xff]
    %v2017 = vpack.c.bf16 %v2012, %v2012
    %2018 = vmatpush.bf16.msra.mxu0 %v1900
    %2019 = vmatpush.bf16.msra.mxu0 %v1896
    %2020 = vmatpush.bf16.msra.mxu0 %v1892
    %2021 = vmatpush.bf16.msra.mxu0 %v1888
    %2022 = vmatpush.bf16.msra.mxu0 %v1884
    %2023 = vmatpush.bf16.msra.mxu0 %v1880
    %2024 = vmatpush.bf16.msra.mxu0 %v1876
    %2025 = vmatpush.bf16.msra.mxu0 %v1872
    %2026 = vmatmul.bf16.gmra.mxu0 %v2017
    %v2027 = vpop.f32.mrf.mxu0
    %v2028 = vadd.f32 0.0, %v2027
    %v2029 = vpop.f32.mrf.mxu0
    %2030 = vdwg.mxu0
    %2031 = vmatpush.bf16.msra.mxu0 %v1901
    %2032 = vmatpush.bf16.msra.mxu0 %v1897
    %2033 = vmatpush.bf16.msra.mxu0 %v1893
    %2034 = vmatpush.bf16.msra.mxu0 %v1889
    %2035 = vmatpush.bf16.msra.mxu0 %v1885
    %2036 = vmatpush.bf16.msra.mxu0 %v1881
    %2037 = vmatpush.bf16.msra.mxu0 %v1877
    %2038 = vmatpush.bf16.msra.mxu0 %v1873
    %2039 = vmatmul.bf16.gmra.mxu0 %v2017
    %v2040 = vpop.f32.mrf.mxu0
    %v2041 = vadd.f32 0.0, %v2040
    %v2042 = vpop.f32.mrf.mxu0
    %2043 = vdwg.mxu0
    %2044 = vmatpush.bf16.msra.mxu0 %v1902
    %2045 = vmatpush.bf16.msra.mxu0 %v1898
    %2046 = vmatpush.bf16.msra.mxu0 %v1894
    %2047 = vmatpush.bf16.msra.mxu0 %v1890
    %2048 = vmatpush.bf16.msra.mxu0 %v1886
    %2049 = vmatpush.bf16.msra.mxu0 %v1882
    %2050 = vmatpush.bf16.msra.mxu0 %v1878
    %2051 = vmatpush.bf16.msra.mxu0 %v1874
    %2052 = vmatmul.bf16.gmra.mxu0 %v2017
    %v2053 = vpop.f32.mrf.mxu0
    %v2054 = vadd.f32 0.0, %v2053
    %v2055 = vpop.f32.mrf.mxu0
    %2056 = vdwg.mxu0
    %2057 = vmatpush.bf16.msra.mxu0 %v1903
    %2058 = vmatpush.bf16.msra.mxu0 %v1899
    %2059 = vmatpush.bf16.msra.mxu0 %v1895
    %2060 = vmatpush.bf16.msra.mxu0 %v1891
    %2061 = vmatpush.bf16.msra.mxu0 %v1887
    %2062 = vmatpush.bf16.msra.mxu0 %v1883
    %2063 = vmatpush.bf16.msra.mxu0 %v1879
    %2064 = vmatpush.bf16.msra.mxu0 %v1875
    %2065 = vmatmul.bf16.gmra.mxu0 %v2017
    %v2066 = vpop.f32.mrf.mxu0
    %v2067 = vadd.f32 0.0, %v2066
    %v2068 = vpop.f32.mrf.mxu0
    %2069 = vdwg.mxu0
    %v2070 = vadd.f32 %v2013, %v2028
    %v2071 = vadd.f32 %v2014, %v2041
    %v2072 = vadd.f32 %v2015, %v2054
    %v2073 = vadd.f32 %v2016, %v2067
    %v2074 = vsub.f32 0.0, %v2070
    %v2075 = vmul.f32 %v2074, 1.442695
    %v2076 = vpow.pop %v2075
    %v2077 = vadd.f32 %v2076, 1.0
    %v2078 = vrcp.pop %v2077
    %v2079 = vsub.f32 0.0, %v2071
    %v2080 = vmul.f32 %v2079, 1.442695
    %v2081 = vpow.pop %v2080
    %v2082 = vadd.f32 %v2081, 1.0
    %v2083 = vrcp.pop %v2082
    %v2084 = vtanh.pop %v2072
    %v2085 = vsub.f32 0.0, %v2073
    %v2086 = vmul.f32 %v2085, 1.442695
    %v2087 = vpow.pop %v2086
    %v2088 = vadd.f32 %v2087, 1.0
    %v2089 = vrcp.pop %v2088
    %v2090 = vmul.f32 %v2083, %v2010
    %v2091 = vmul.f32 %v2078, %v2084
    %v2092 = vadd.f32 %v2090, %v2091
    %v2093 = vtanh.pop %v2092
    %v2094 = vmul.f32 %v2089, %v2093
    %v2095 = vld [vmem:[%s868] sm:$0xff]
    %v2096 = vld [vmem:[%s868 + $0x8] sm:$0xff]
    %v2097 = vld [vmem:[%s868 + $0x10] sm:$0xff]
    %v2098 = vld [vmem:[%s868 + $0x18] sm:$0xff]
    %v2099 = vpack.c.bf16 %v2094, %v2094
    %2100 = vmatpush.bf16.msra.mxu0 %v1900
    %2101 = vmatpush.bf16.msra.mxu0 %v1896
    %2102 = vmatpush.bf16.msra.mxu0 %v1892
    %2103 = vmatpush.bf16.msra.mxu0 %v1888
    %2104 = vmatpush.bf16.msra.mxu0 %v1884
    %2105 = vmatpush.bf16.msra.mxu0 %v1880
    %2106 = vmatpush.bf16.msra.mxu0 %v1876
    %2107 = vmatpush.bf16.msra.mxu0 %v1872
    %2108 = vmatmul.bf16.gmra.mxu0 %v2099
    %v2109 = vpop.f32.mrf.mxu0
    %v2110 = vadd.f32 0.0, %v2109
    %v2111 = vpop.f32.mrf.mxu0
    %2112 = vdwg.mxu0
    %2113 = vmatpush.bf16.msra.mxu0 %v1901
    %2114 = vmatpush.bf16.msra.mxu0 %v1897
    %2115 = vmatpush.bf16.msra.mxu0 %v1893
    %2116 = vmatpush.bf16.msra.mxu0 %v1889
    %2117 = vmatpush.bf16.msra.mxu0 %v1885
    %2118 = vmatpush.bf16.msra.mxu0 %v1881
    %2119 = vmatpush.bf16.msra.mxu0 %v1877
    %2120 = vmatpush.bf16.msra.mxu0 %v1873
    %2121 = vmatmul.bf16.gmra.mxu0 %v2099
    %v2122 = vpop.f32.mrf.mxu0
    %v2123 = vadd.f32 0.0, %v2122
    %v2124 = vpop.f32.mrf.mxu0
    %2125 = vdwg.mxu0
    %2126 = vmatpush.bf16.msra.mxu0 %v1902
    %2127 = vmatpush.bf16.msra.mxu0 %v1898
    %2128 = vmatpush.bf16.msra.mxu0 %v1894
    %2129 = vmatpush.bf16.msra.mxu0 %v1890
    %2130 = vmatpush.bf16.msra.mxu0 %v1886
    %2131 = vmatpush.bf16.msra.mxu0 %v1882
    %2132 = vmatpush.bf16.msra.mxu0 %v1878
    %2133 = vmatpush.bf16.msra.mxu0 %v1874
    %2134 = vmatmul.bf16.gmra.mxu0 %v2099
    %v2135 = vpop.f32.mrf.mxu0
    %v2136 = vadd.f32 0.0, %v2135
    %v2137 = vpop.f32.mrf.mxu0
    %2138 = vdwg.mxu0
    %2139 = vmatpush.bf16.msra.mxu0 %v1903
    %2140 = vmatpush.bf16.msra.mxu0 %v1899
    %2141 = vmatpush.bf16.msra.mxu0 %v1895
    %2142 = vmatpush.bf16.msra.mxu0 %v1891
    %2143 = vmatpush.bf16.msra.mxu0 %v1887
    %2144 = vmatpush.bf16.msra.mxu0 %v1883
    %2145 = vmatpush.bf16.msra.mxu0 %v1879
    %2146 = vmatpush.bf16.msra.mxu0 %v1875
    %2147 = vmatmul.bf16.gmra.mxu0 %v2099
    %v2148 = vpop.f32.mrf.mxu0
    %v2149 = vadd.f32 0.0, %v2148
    %v2150 = vpop.f32.mrf.mxu0
    %2151 = vdwg.mxu0
    %v2152 = vadd.f32 %v2095, %v2110
    %v2153 = vadd.f32 %v2096, %v2123
    %v2154 = vadd.f32 %v2097, %v2136
    %v2155 = vadd.f32 %v2098, %v2149
    %v2156 = vsub.f32 0.0, %v2152
    %v2157 = vmul.f32 %v2156, 1.442695
    %v2158 = vpow.pop %v2157
    %v2159 = vadd.f32 %v2158, 1.0
    %v2160 = vrcp.pop %v2159
    %v2161 = vsub.f32 0.0, %v2153
    %v2162 = vmul.f32 %v2161, 1.442695
    %v2163 = vpow.pop %v2162
    %v2164 = vadd.f32 %v2163, 1.0
    %v2165 = vrcp.pop %v2164
    %v2166 = vtanh.pop %v2154
    %v2167 = vsub.f32 0.0, %v2155
    %v2168 = vmul.f32 %v2167, 1.442695
    %v2169 = vpow.pop %v2168
    %v2170 = vadd.f32 %v2169, 1.0
    %v2171 = vrcp.pop %v2170
    %v2172 = vmul.f32 %v2165, %v2092
    %v2173 = vmul.f32 %v2160, %v2166
    %v2174 = vadd.f32 %v2172, %v2173
    %v2175 = vtanh.pop %v2174
    %v2176 = vmul.f32 %v2171, %v2175
    %v2177 = vld [vmem:[%s953] sm:$0xff]
    %v2178 = vld [vmem:[%s953 + $0x8] sm:$0xff]
    %v2179 = vld [vmem:[%s953 + $0x10] sm:$0xff]
    %v2180 = vld [vmem:[%s953 + $0x18] sm:$0xff]
    %v2181 = vpack.c.bf16 %v2176, %v2176
    %2182 = vmatpush.bf16.msra.mxu0 %v1900
    %2183 = vmatpush.bf16.msra.mxu0 %v1896
    %2184 = vmatpush.bf16.msra.mxu0 %v1892
    %2185 = vmatpush.bf16.msra.mxu0 %v1888
    %2186 = vmatpush.bf16.msra.mxu0 %v1884
    %2187 = vmatpush.bf16.msra.mxu0 %v1880
    %2188 = vmatpush.bf16.msra.mxu0 %v1876
    %2189 = vmatpush.bf16.msra.mxu0 %v1872
    %2190 = vmatmul.bf16.gmra.mxu0 %v2181
    %v2191 = vpop.f32.mrf.mxu0
    %v2192 = vadd.f32 0.0, %v2191
    %v2193 = vpop.f32.mrf.mxu0
    %2194 = vdwg.mxu0
    %2195 = vmatpush.bf16.msra.mxu0 %v1901
    %2196 = vmatpush.bf16.msra.mxu0 %v1897
    %2197 = vmatpush.bf16.msra.mxu0 %v1893
    %2198 = vmatpush.bf16.msra.mxu0 %v1889
    %2199 = vmatpush.bf16.msra.mxu0 %v1885
    %2200 = vmatpush.bf16.msra.mxu0 %v1881
    %2201 = vmatpush.bf16.msra.mxu0 %v1877
    %2202 = vmatpush.bf16.msra.mxu0 %v1873
    %2203 = vmatmul.bf16.gmra.mxu0 %v2181
    %v2204 = vpop.f32.mrf.mxu0
    %v2205 = vadd.f32 0.0, %v2204
    %v2206 = vpop.f32.mrf.mxu0
    %2207 = vdwg.mxu0
    %2208 = vmatpush.bf16.msra.mxu0 %v1902
    %2209 = vmatpush.bf16.msra.mxu0 %v1898
    %2210 = vmatpush.bf16.msra.mxu0 %v1894
    %2211 = vmatpush.bf16.msra.mxu0 %v1890
    %2212 = vmatpush.bf16.msra.mxu0 %v1886
    %2213 = vmatpush.bf16.msra.mxu0 %v1882
    %2214 = vmatpush.bf16.msra.mxu0 %v1878
    %2215 = vmatpush.bf16.msra.mxu0 %v1874
    %2216 = vmatmul.bf16.gmra.mxu0 %v2181
    %v2217 = vpop.f32.mrf.mxu0
    %v2218 = vadd.f32 0.0, %v2217
    %v2219 = vpop.f32.mrf.mxu0
    %2220 = vdwg.mxu0
    %2221 = vmatpush.bf16.msra.mxu0 %v1903
    %2222 = vmatpush.bf16.msra.mxu0 %v1899
    %2223 = vmatpush.bf16.msra.mxu0 %v1895
    %2224 = vmatpush.bf16.msra.mxu0 %v1891
    %2225 = vmatpush.bf16.msra.mxu0 %v1887
    %2226 = vmatpush.bf16.msra.mxu0 %v1883
    %2227 = vmatpush.bf16.msra.mxu0 %v1879
    %2228 = vmatpush.bf16.msra.mxu0 %v1875
    %2229 = vmatmul.bf16.gmra.mxu0 %v2181
    %v2230 = vpop.f32.mrf.mxu0
    %v2231 = vadd.f32 0.0, %v2230
    %v2232 = vpop.f32.mrf.mxu0
    %2233 = vdwg.mxu0
    %v2234 = vadd.f32 %v2177, %v2192
    %v2235 = vadd.f32 %v2178, %v2205
    %v2236 = vadd.f32 %v2179, %v2218
    %v2237 = vadd.f32 %v2180, %v2231
    %v2238 = vsub.f32 0.0, %v2234
    %v2239 = vmul.f32 %v2238, 1.442695
    %v2240 = vpow.pop %v2239
    %v2241 = vadd.f32 %v2240, 1.0
    %v2242 = vrcp.pop %v2241
    %v2243 = vsub.f32 0.0, %v2235
    %v2244 = vmul.f32 %v2243, 1.442695
    %v2245 = vpow.pop %v2244
    %v2246 = vadd.f32 %v2245, 1.0
    %v2247 = vrcp.pop %v2246
    %v2248 = vtanh.pop %v2236
    %v2249 = vsub.f32 0.0, %v2237
    %v2250 = vmul.f32 %v2249, 1.442695
    %v2251 = vpow.pop %v2250
    %v2252 = vadd.f32 %v2251, 1.0
    %v2253 = vrcp.pop %v2252
    %v2254 = vmul.f32 %v2247, %v2174
    %v2255 = vmul.f32 %v2242, %v2248
    %v2256 = vadd.f32 %v2254, %v2255
    %v2257 = vtanh.pop %v2256
    %v2258 = vmul.f32 %v2253, %v2257
    %v2259 = vld [vmem:[%s1038] sm:$0xff]
    %v2260 = vld [vmem:[%s1038 + $0x8] sm:$0xff]
    %v2261 = vld [vmem:[%s1038 + $0x10] sm:$0xff]
    %v2262 = vld [vmem:[%s1038 + $0x18] sm:$0xff]
    %v2263 = vpack.c.bf16 %v2258, %v2258
    %2264 = vmatpush.bf16.msra.mxu0 %v1900
    %2265 = vmatpush.bf16.msra.mxu0 %v1896
    %2266 = vmatpush.bf16.msra.mxu0 %v1892
    %2267 = vmatpush.bf16.msra.mxu0 %v1888
    %2268 = vmatpush.bf16.msra.mxu0 %v1884
    %2269 = vmatpush.bf16.msra.mxu0 %v1880
    %2270 = vmatpush.bf16.msra.mxu0 %v1876
    %2271 = vmatpush.bf16.msra.mxu0 %v1872
    %2272 = vmatmul.bf16.gmra.mxu0 %v2263
    %v2273 = vpop.f32.mrf.mxu0
    %v2274 = vadd.f32 0.0, %v2273
    %v2275 = vpop.f32.mrf.mxu0
    %2276 = vdwg.mxu0
    %2277 = vmatpush.bf16.msra.mxu0 %v1901
    %2278 = vmatpush.bf16.msra.mxu0 %v1897
    %2279 = vmatpush.bf16.msra.mxu0 %v1893
    %2280 = vmatpush.bf16.msra.mxu0 %v1889
    %2281 = vmatpush.bf16.msra.mxu0 %v1885
    %2282 = vmatpush.bf16.msra.mxu0 %v1881
    %2283 = vmatpush.bf16.msra.mxu0 %v1877
    %2284 = vmatpush.bf16.msra.mxu0 %v1873
    %2285 = vmatmul.bf16.gmra.mxu0 %v2263
    %v2286 = vpop.f32.mrf.mxu0
    %v2287 = vadd.f32 0.0, %v2286
    %v2288 = vpop.f32.mrf.mxu0
    %2289 = vdwg.mxu0
    %2290 = vmatpush.bf16.msra.mxu0 %v1902
    %2291 = vmatpush.bf16.msra.mxu0 %v1898
    %2292 = vmatpush.bf16.msra.mxu0 %v1894
    %2293 = vmatpush.bf16.msra.mxu0 %v1890
    %2294 = vmatpush.bf16.msra.mxu0 %v1886
    %2295 = vmatpush.bf16.msra.mxu0 %v1882
    %2296 = vmatpush.bf16.msra.mxu0 %v1878
    %2297 = vmatpush.bf16.msra.mxu0 %v1874
    %2298 = vmatmul.bf16.gmra.mxu0 %v2263
    %v2299 = vpop.f32.mrf.mxu0
    %v2300 = vadd.f32 0.0, %v2299
    %v2301 = vpop.f32.mrf.mxu0
    %2302 = vdwg.mxu0
    %2303 = vmatpush.bf16.msra.mxu0 %v1903
    %2304 = vmatpush.bf16.msra.mxu0 %v1899
    %2305 = vmatpush.bf16.msra.mxu0 %v1895
    %2306 = vmatpush.bf16.msra.mxu0 %v1891
    %2307 = vmatpush.bf16.msra.mxu0 %v1887
    %2308 = vmatpush.bf16.msra.mxu0 %v1883
    %2309 = vmatpush.bf16.msra.mxu0 %v1879
    %2310 = vmatpush.bf16.msra.mxu0 %v1875
    %2311 = vmatmul.bf16.gmra.mxu0 %v2263
    %v2312 = vpop.f32.mrf.mxu0
    %v2313 = vadd.f32 0.0, %v2312
    %v2314 = vpop.f32.mrf.mxu0
    %2315 = vdwg.mxu0
    %v2316 = vadd.f32 %v2259, %v2274
    %v2317 = vadd.f32 %v2260, %v2287
    %v2318 = vadd.f32 %v2261, %v2300
    %v2319 = vadd.f32 %v2262, %v2313
    %v2320 = vsub.f32 0.0, %v2316
    %v2321 = vmul.f32 %v2320, 1.442695
    %v2322 = vpow.pop %v2321
    %v2323 = vadd.f32 %v2322, 1.0
    %v2324 = vrcp.pop %v2323
    %v2325 = vsub.f32 0.0, %v2317
    %v2326 = vmul.f32 %v2325, 1.442695
    %v2327 = vpow.pop %v2326
    %v2328 = vadd.f32 %v2327, 1.0
    %v2329 = vrcp.pop %v2328
    %v2330 = vtanh.pop %v2318
    %v2331 = vsub.f32 0.0, %v2319
    %v2332 = vmul.f32 %v2331, 1.442695
    %v2333 = vpow.pop %v2332
    %v2334 = vadd.f32 %v2333, 1.0
    %v2335 = vrcp.pop %v2334
    %v2336 = vmul.f32 %v2329, %v2256
    %v2337 = vmul.f32 %v2324, %v2330
    %v2338 = vadd.f32 %v2336, %v2337
    %v2339 = vtanh.pop %v2338
    %v2340 = vmul.f32 %v2335, %v2339
    %v2341 = vld [vmem:[%s1123] sm:$0xff]
    %v2342 = vld [vmem:[%s1123 + $0x8] sm:$0xff]
    %v2343 = vld [vmem:[%s1123 + $0x10] sm:$0xff]
    %v2344 = vld [vmem:[%s1123 + $0x18] sm:$0xff]
    %v2345 = vpack.c.bf16 %v2340, %v2340
    %2346 = vmatpush.bf16.msra.mxu0 %v1900
    %2347 = vmatpush.bf16.msra.mxu0 %v1896
    %2348 = vmatpush.bf16.msra.mxu0 %v1892
    %2349 = vmatpush.bf16.msra.mxu0 %v1888
    %2350 = vmatpush.bf16.msra.mxu0 %v1884
    %2351 = vmatpush.bf16.msra.mxu0 %v1880
    %2352 = vmatpush.bf16.msra.mxu0 %v1876
    %2353 = vmatpush.bf16.msra.mxu0 %v1872
    %2354 = vmatmul.bf16.gmra.mxu0 %v2345
    %v2355 = vpop.f32.mrf.mxu0
    %v2356 = vadd.f32 0.0, %v2355
    %v2357 = vpop.f32.mrf.mxu0
    %2358 = vdwg.mxu0
    %2359 = vmatpush.bf16.msra.mxu0 %v1901
    %2360 = vmatpush.bf16.msra.mxu0 %v1897
    %2361 = vmatpush.bf16.msra.mxu0 %v1893
    %2362 = vmatpush.bf16.msra.mxu0 %v1889
    %2363 = vmatpush.bf16.msra.mxu0 %v1885
    %2364 = vmatpush.bf16.msra.mxu0 %v1881
    %2365 = vmatpush.bf16.msra.mxu0 %v1877
    %2366 = vmatpush.bf16.msra.mxu0 %v1873
    %2367 = vmatmul.bf16.gmra.mxu0 %v2345
    %v2368 = vpop.f32.mrf.mxu0
    %v2369 = vadd.f32 0.0, %v2368
    %v2370 = vpop.f32.mrf.mxu0
    %2371 = vdwg.mxu0
    %2372 = vmatpush.bf16.msra.mxu0 %v1902
    %2373 = vmatpush.bf16.msra.mxu0 %v1898
    %2374 = vmatpush.bf16.msra.mxu0 %v1894
    %2375 = vmatpush.bf16.msra.mxu0 %v1890
    %2376 = vmatpush.bf16.msra.mxu0 %v1886
    %2377 = vmatpush.bf16.msra.mxu0 %v1882
    %2378 = vmatpush.bf16.msra.mxu0 %v1878
    %2379 = vmatpush.bf16.msra.mxu0 %v1874
    %2380 = vmatmul.bf16.gmra.mxu0 %v2345
    %v2381 = vpop.f32.mrf.mxu0
    %v2382 = vadd.f32 0.0, %v2381
    %v2383 = vpop.f32.mrf.mxu0
    %2384 = vdwg.mxu0
    %2385 = vmatpush.bf16.msra.mxu0 %v1903
    %2386 = vmatpush.bf16.msra.mxu0 %v1899
    %2387 = vmatpush.bf16.msra.mxu0 %v1895
    %2388 = vmatpush.bf16.msra.mxu0 %v1891
    %2389 = vmatpush.bf16.msra.mxu0 %v1887
    %2390 = vmatpush.bf16.msra.mxu0 %v1883
    %2391 = vmatpush.bf16.msra.mxu0 %v1879
    %2392 = vmatpush.bf16.msra.mxu0 %v1875
    %2393 = vmatmul.bf16.gmra.mxu0 %v2345
    %v2394 = vpop.f32.mrf.mxu0
    %v2395 = vadd.f32 0.0, %v2394
    %v2396 = vpop.f32.mrf.mxu0
    %2397 = vdwg.mxu0
    %v2398 = vadd.f32 %v2341, %v2356
    %v2399 = vadd.f32 %v2342, %v2369
    %v2400 = vadd.f32 %v2343, %v2382
    %v2401 = vadd.f32 %v2344, %v2395
    %v2402 = vsub.f32 0.0, %v2398
    %v2403 = vmul.f32 %v2402, 1.442695
    %v2404 = vpow.pop %v2403
    %v2405 = vadd.f32 %v2404, 1.0
    %v2406 = vrcp.pop %v2405
    %v2407 = vsub.f32 0.0, %v2399
    %v2408 = vmul.f32 %v2407, 1.442695
    %v2409 = vpow.pop %v2408
    %v2410 = vadd.f32 %v2409, 1.0
    %v2411 = vrcp.pop %v2410
    %v2412 = vtanh.pop %v2400
    %v2413 = vsub.f32 0.0, %v2401
    %v2414 = vmul.f32 %v2413, 1.442695
    %v2415 = vpow.pop %v2414
    %v2416 = vadd.f32 %v2415, 1.0
    %v2417 = vrcp.pop %v2416
    %v2418 = vmul.f32 %v2411, %v2338
    %v2419 = vmul.f32 %v2406, %v2412
    %v2420 = vadd.f32 %v2418, %v2419
    %v2421 = vtanh.pop %v2420
    %v2422 = vmul.f32 %v2417, %v2421
    %v2423 = vld [vmem:[%s1208] sm:$0xff]
    %v2424 = vld [vmem:[%s1208 + $0x8] sm:$0xff]
    %v2425 = vld [vmem:[%s1208 + $0x10] sm:$0xff]
    %v2426 = vld [vmem:[%s1208 + $0x18] sm:$0xff]
    %v2427 = vpack.c.bf16 %v2422, %v2422
    %2428 = vmatpush.bf16.msra.mxu0 %v1900
    %2429 = vmatpush.bf16.msra.mxu0 %v1896
    %2430 = vmatpush.bf16.msra.mxu0 %v1892
    %2431 = vmatpush.bf16.msra.mxu0 %v1888
    %2432 = vmatpush.bf16.msra.mxu0 %v1884
    %2433 = vmatpush.bf16.msra.mxu0 %v1880
    %2434 = vmatpush.bf16.msra.mxu0 %v1876
    %2435 = vmatpush.bf16.msra.mxu0 %v1872
    %2436 = vmatmul.bf16.gmra.mxu0 %v2427
    %v2437 = vpop.f32.mrf.mxu0
    %v2438 = vadd.f32 0.0, %v2437
    %v2439 = vpop.f32.mrf.mxu0
    %2440 = vdwg.mxu0
    %2441 = vmatpush.bf16.msra.mxu0 %v1901
    %2442 = vmatpush.bf16.msra.mxu0 %v1897
    %2443 = vmatpush.bf16.msra.mxu0 %v1893
    %2444 = vmatpush.bf16.msra.mxu0 %v1889
    %2445 = vmatpush.bf16.msra.mxu0 %v1885
    %2446 = vmatpush.bf16.msra.mxu0 %v1881
    %2447 = vmatpush.bf16.msra.mxu0 %v1877
    %2448 = vmatpush.bf16.msra.mxu0 %v1873
    %2449 = vmatmul.bf16.gmra.mxu0 %v2427
    %v2450 = vpop.f32.mrf.mxu0
    %v2451 = vadd.f32 0.0, %v2450
    %v2452 = vpop.f32.mrf.mxu0
    %2453 = vdwg.mxu0
    %2454 = vmatpush.bf16.msra.mxu0 %v1902
    %2455 = vmatpush.bf16.msra.mxu0 %v1898
    %2456 = vmatpush.bf16.msra.mxu0 %v1894
    %2457 = vmatpush.bf16.msra.mxu0 %v1890
    %2458 = vmatpush.bf16.msra.mxu0 %v1886
    %2459 = vmatpush.bf16.msra.mxu0 %v1882
    %2460 = vmatpush.bf16.msra.mxu0 %v1878
    %2461 = vmatpush.bf16.msra.mxu0 %v1874
    %2462 = vmatmul.bf16.gmra.mxu0 %v2427
    %v2463 = vpop.f32.mrf.mxu0
    %v2464 = vadd.f32 0.0, %v2463
    %v2465 = vpop.f32.mrf.mxu0
    %2466 = vdwg.mxu0
    %2467 = vmatpush.bf16.msra.mxu0 %v1903
    %2468 = vmatpush.bf16.msra.mxu0 %v1899
    %2469 = vmatpush.bf16.msra.mxu0 %v1895
    %2470 = vmatpush.bf16.msra.mxu0 %v1891
    %2471 = vmatpush.bf16.msra.mxu0 %v1887
    %2472 = vmatpush.bf16.msra.mxu0 %v1883
    %2473 = vmatpush.bf16.msra.mxu0 %v1879
    %2474 = vmatpush.bf16.msra.mxu0 %v1875
    %2475 = vmatmul.bf16.gmra.mxu0 %v2427
    %v2476 = vpop.f32.mrf.mxu0
    %v2477 = vadd.f32 0.0, %v2476
    %v2478 = vpop.f32.mrf.mxu0
    %2479 = vdwg.mxu0
    %v2480 = vadd.f32 %v2423, %v2438
    %v2481 = vadd.f32 %v2424, %v2451
    %v2482 = vadd.f32 %v2425, %v2464
    %v2483 = vadd.f32 %v2426, %v2477
    %v2484 = vsub.f32 0.0, %v2480
    %v2485 = vmul.f32 %v2484, 1.442695
    %v2486 = vpow.pop %v2485
    %v2487 = vadd.f32 %v2486, 1.0
    %v2488 = vrcp.pop %v2487
    %v2489 = vsub.f32 0.0, %v2481
    %v2490 = vmul.f32 %v2489, 1.442695
    %v2491 = vpow.pop %v2490
    %v2492 = vadd.f32 %v2491, 1.0
    %v2493 = vrcp.pop %v2492
    %v2494 = vtanh.pop %v2482
    %v2495 = vsub.f32 0.0, %v2483
    %v2496 = vmul.f32 %v2495, 1.442695
    %v2497 = vpow.pop %v2496
    %v2498 = vadd.f32 %v2497, 1.0
    %v2499 = vrcp.pop %v2498
    %v2500 = vmul.f32 %v2493, %v2420
    %v2501 = vmul.f32 %v2488, %v2494
    %v2502 = vadd.f32 %v2500, %v2501
    %v2503 = vtanh.pop %v2502
    %v2504 = vmul.f32 %v2499, %v2503
    %v2505 = vld [vmem:[%s1293] sm:$0xff]
    %v2506 = vld [vmem:[%s1293 + $0x8] sm:$0xff]
    %v2507 = vld [vmem:[%s1293 + $0x10] sm:$0xff]
    %v2508 = vld [vmem:[%s1293 + $0x18] sm:$0xff]
    %v2509 = vpack.c.bf16 %v2504, %v2504
    %2510 = vmatpush.bf16.msra.mxu0 %v1900
    %2511 = vmatpush.bf16.msra.mxu0 %v1896
    %2512 = vmatpush.bf16.msra.mxu0 %v1892
    %2513 = vmatpush.bf16.msra.mxu0 %v1888
    %2514 = vmatpush.bf16.msra.mxu0 %v1884
    %2515 = vmatpush.bf16.msra.mxu0 %v1880
    %2516 = vmatpush.bf16.msra.mxu0 %v1876
    %2517 = vmatpush.bf16.msra.mxu0 %v1872
    %2518 = vmatmul.bf16.gmra.mxu0 %v2509
    %v2519 = vpop.f32.mrf.mxu0
    %v2520 = vadd.f32 0.0, %v2519
    %v2521 = vpop.f32.mrf.mxu0
    %2522 = vdwg.mxu0
    %2523 = vmatpush.bf16.msra.mxu0 %v1901
    %2524 = vmatpush.bf16.msra.mxu0 %v1897
    %2525 = vmatpush.bf16.msra.mxu0 %v1893
    %2526 = vmatpush.bf16.msra.mxu0 %v1889
    %2527 = vmatpush.bf16.msra.mxu0 %v1885
    %2528 = vmatpush.bf16.msra.mxu0 %v1881
    %2529 = vmatpush.bf16.msra.mxu0 %v1877
    %2530 = vmatpush.bf16.msra.mxu0 %v1873
    %2531 = vmatmul.bf16.gmra.mxu0 %v2509
    %v2532 = vpop.f32.mrf.mxu0
    %v2533 = vadd.f32 0.0, %v2532
    %v2534 = vpop.f32.mrf.mxu0
    %2535 = vdwg.mxu0
    %2536 = vmatpush.bf16.msra.mxu0 %v1902
    %2537 = vmatpush.bf16.msra.mxu0 %v1898
    %2538 = vmatpush.bf16.msra.mxu0 %v1894
    %2539 = vmatpush.bf16.msra.mxu0 %v1890
    %2540 = vmatpush.bf16.msra.mxu0 %v1886
    %2541 = vmatpush.bf16.msra.mxu0 %v1882
    %2542 = vmatpush.bf16.msra.mxu0 %v1878
    %2543 = vmatpush.bf16.msra.mxu0 %v1874
    %2544 = vmatmul.bf16.gmra.mxu0 %v2509
    %v2545 = vpop.f32.mrf.mxu0
    %v2546 = vadd.f32 0.0, %v2545
    %v2547 = vpop.f32.mrf.mxu0
    %2548 = vdwg.mxu0
    %2549 = vmatpush.bf16.msra.mxu0 %v1903
    %2550 = vmatpush.bf16.msra.mxu0 %v1899
    %2551 = vmatpush.bf16.msra.mxu0 %v1895
    %2552 = vmatpush.bf16.msra.mxu0 %v1891
    %2553 = vmatpush.bf16.msra.mxu0 %v1887
    %2554 = vmatpush.bf16.msra.mxu0 %v1883
    %2555 = vmatpush.bf16.msra.mxu0 %v1879
    %2556 = vmatpush.bf16.msra.mxu0 %v1875
    %2557 = vmatmul.bf16.gmra.mxu0 %v2509
    %v2558 = vpop.f32.mrf.mxu0
    %v2559 = vadd.f32 0.0, %v2558
    %v2560 = vpop.f32.mrf.mxu0
    %2561 = vdwg.mxu0
    %v2562 = vadd.f32 %v2505, %v2520
    %v2563 = vadd.f32 %v2506, %v2533
    %v2564 = vadd.f32 %v2507, %v2546
    %v2565 = vadd.f32 %v2508, %v2559
    %v2566 = vsub.f32 0.0, %v2562
    %v2567 = vmul.f32 %v2566, 1.442695
    %v2568 = vpow.pop %v2567
    %v2569 = vadd.f32 %v2568, 1.0
    %v2570 = vrcp.pop %v2569
    %v2571 = vsub.f32 0.0, %v2563
    %v2572 = vmul.f32 %v2571, 1.442695
    %v2573 = vpow.pop %v2572
    %v2574 = vadd.f32 %v2573, 1.0
    %v2575 = vrcp.pop %v2574
    %v2576 = vtanh.pop %v2564
    %v2577 = vsub.f32 0.0, %v2565
    %v2578 = vmul.f32 %v2577, 1.442695
    %v2579 = vpow.pop %v2578
    %v2580 = vadd.f32 %v2579, 1.0
    %v2581 = vrcp.pop %v2580
    %v2582 = vmul.f32 %v2575, %v2502
    %v2583 = vmul.f32 %v2570, %v2576
    %v2584 = vadd.f32 %v2582, %v2583
    %v2585 = vtanh.pop %v2584
    %v2586 = vmul.f32 %v2581, %v2585
    %v2587 = vld [vmem:[%s7] sm:$0x1]
    %v2589 = vperm.slane %v2587, 0
    %v2591 = vmul.f32 %v2586, %v2589
    %2592 = vadd.xlane.f32.xlu0 %v2591
    %v2593 = vpop.xlane.xlu0 %2592
    %v2594 = vld [vmem:[#allocation4] sm:$0x1]
    %v2596 = vperm.slane %v2594, 0
    %v2598 = vadd.f32 %v2593, %v2596
    %vm2599 = vcmask 7168
    %2600 = vst.msk [vmem:[%s9] sm:$0xff] %vm2599, %v2598
    // Predicated region
    $region62: #{tpu_custom_call.1} parent=1 // pred_check
      _
    $region63: #{tpu_custom_call.1} parent=1 // pred_check_branch
      %2602 = sbr.rel (0) target = $region65
    $region64: #{tpu_custom_call.1} parent=1 // pred_region
      _
    $region65: #{tpu_custom_call.1} parent=1 // pred_fallthru
      _
    // Predicated region
    $region66: #{tpu_custom_call.1} parent=1 // pred_check
      _
    $region67: #{tpu_custom_call.1} parent=1 // pred_check_branch
      %2604 = sbr.rel (0) target = $region69
    $region68: #{tpu_custom_call.1} parent=1 // pred_region
      _
    $region69: #{tpu_custom_call.1} parent=1 // pred_fallthru
      _
    %2605 = vsyncpa [#allocation6], 1
    %2606 = vsyncpa [#allocation8], 1
    %2607 = vsyncpa [#allocation11], 1
    %2608 = vsyncpa [#allocation14], 1

</llo_original>
